<compile_context>
chip_gen: v7x
topology: tpu7x:2x2x1
jax: 0.10.0
libtpu: 0.0.40
codegen_flags: <defaults>
</compile_context>

<pallas_src>
import functools

import jax
import jax.numpy as jnp
from jax.experimental import pallas as pl
from jax.experimental.pallas import tpu as pltpu


# ----------------------------------------------------------------------------
# Helpers
# ----------------------------------------------------------------------------
def _vmem_spec():
    return pl.BlockSpec(memory_space=pltpu.MemorySpace.VMEM)


def _round_up(x, m):
    return ((x + m - 1) // m) * m


def _pick_tile(dim, target, align):
    """Return (tile, padded_dim): tile % align == 0 (or == padded_dim),
    tile divides padded_dim, padded_dim >= dim.  Never falls back to pulling
    a huge full dimension into VMEM."""
    if dim <= target:
        t = _round_up(dim, align)
        return t, t
    t = (target // align) * align
    tt = t
    while tt >= align:
        if dim % tt == 0:
            return tt, dim
        tt -= align
    return t, _round_up(dim, t)


def _choose_rows(b, cap=16):
    """Rows per grid step: full batch when small, else an 8-aligned divisor."""
    if b <= cap:
        return b
    t = (cap // 8) * 8
    while t >= 8:
        if b % t == 0:
            return t
        t -= 8
    return b


def _sym_ce_loss(lg):
    """Symmetric contrastive cross-entropy with diagonal targets -> [1, 1]."""
    eye = (jax.lax.broadcasted_iota(jnp.int32, lg.shape, 0)
           == jax.lax.broadcasted_iota(jnp.int32, lg.shape, 1))
    m_r = jnp.max(lg, axis=1, keepdims=True)
    lse_r = m_r + jnp.log(jnp.sum(jnp.exp(lg - m_r), axis=1, keepdims=True))
    diag_r = jnp.sum(jnp.where(eye, lg - lse_r, 0.0), axis=1, keepdims=True)
    loss_r = -jnp.mean(diag_r, axis=0, keepdims=True)
    m_c = jnp.max(lg, axis=0, keepdims=True)
    lse_c = m_c + jnp.log(jnp.sum(jnp.exp(lg - m_c), axis=0, keepdims=True))
    diag_c = jnp.sum(jnp.where(eye, lg - lse_c, 0.0), axis=0, keepdims=True)
    loss_c = -jnp.mean(diag_c, axis=1, keepdims=True)
    return 0.5 * (loss_r + loss_c)


# ----------------------------------------------------------------------------
# Tiled matmul (pseudo CLIP encoders)
#   - weight (RHS) stored bf16 at rest; activation tile cast bf16 in-kernel
#   - N = full width tile (lane-dense output), K innermost reduction axis
# ----------------------------------------------------------------------------
def _matmul_kernel(a_ref, b_ref, o_ref, acc_ref):
    @pl.when(pl.program_id(1) == 0)
    def _():
        acc_ref[...] = jnp.zeros_like(acc_ref)

    acc_ref[...] += jnp.dot(a_ref[...].astype(jnp.bfloat16), b_ref[...],
                            preferred_element_type=jnp.float32)

    @pl.when(pl.program_id(1) == pl.num_programs(1) - 1)
    def _():
        o_ref[...] = acc_ref[...]


def pallas_matmul(a, b, *, tm=512, tk=2048):
    """a:[M,K] f32 @ b:[K,N] bf16 -> f32 [M,N]; bf16 MXU, f32 accumulation."""
    m, k = a.shape
    kb, n = b.shape
    assert kb == k
    if b.dtype != jnp.bfloat16:
        b = b.astype(jnp.bfloat16)
    btm, m_pad = _pick_tile(m, tm, 8)
    btk, k_pad = _pick_tile(k, tk, 128)
    if (m_pad, k_pad) != (m, k):
        a = jnp.pad(a, ((0, m_pad - m), (0, k_pad - k)))
    if k_pad != k:
        b = jnp.pad(b, ((0, k_pad - k), (0, 0)))
    grid = (m_pad // btm, k_pad // btk)
    out = pl.pallas_call(
        _matmul_kernel,
        out_shape=jax.ShapeDtypeStruct((m_pad, n), jnp.float32),
        grid_spec=pltpu.PrefetchScalarGridSpec(
            num_scalar_prefetch=0,
            grid=grid,
            in_specs=[pl.BlockSpec((btm, btk), lambda i, kk: (i, kk)),
                      pl.BlockSpec((btk, n), lambda i, kk: (kk, 0))],
            out_specs=pl.BlockSpec((btm, n), lambda i, kk: (i, 0)),
            scratch_shapes=[pltpu.VMEM((btm, n), jnp.float32)]),
        compiler_params=pltpu.CompilerParams(
            dimension_semantics=("parallel", "arbitrary"),
            vmem_limit_bytes=48 * 1024 * 1024),
    )(a, b)
    return out[:m] if m_pad != m else out


# ----------------------------------------------------------------------------
# Video transformer: cross-attention pooling, TB batch rows per grid step
# ----------------------------------------------------------------------------
def _video_pool_kernel(s_ref, f_ref, m_ref, wvo_ref, o_ref):
    s = s_ref[...]                                          # [TB, D] f32
    f = f_ref[...]                                          # [TB, F, D] f32
    d = s.shape[-1]
    fb = f.astype(jnp.bfloat16)
    qm = jnp.dot(s.astype(jnp.bfloat16), m_ref[...],
                 preferred_element_type=jnp.float32)        # [TB, D]
    logits = jnp.einsum('bqd,bfd->bqf', qm[:, None, :].astype(jnp.bfloat16),
                        fb, preferred_element_type=jnp.float32)   # [TB,1,F]
    logits = logits * (d ** -0.5)
    logits = logits - jnp.max(logits, axis=-1, keepdims=True)
    e = jnp.exp(logits)
    w = e * pl.reciprocal(jnp.sum(e, axis=-1, keepdims=True), approx=True)
    pooled = jnp.einsum('bqf,bfd->bqd', w.astype(jnp.bfloat16), fb,
                        preferred_element_type=jnp.float32)       # [TB,1,D]
    o_ref[...] = jnp.dot(pooled[:, 0, :].astype(jnp.bfloat16), wvo_ref[...],
                         preferred_element_type=jnp.float32) + s


def pallas_video_transformer(s_feat, f_feat, m, wvo):
    b, d = s_feat.shape
    nf = f_feat.shape[1]
    tb = _choose_rows(b)
    return pl.pallas_call(
        _video_pool_kernel,
        out_shape=jax.ShapeDtypeStruct((b, d), jnp.float32),
        grid_spec=pltpu.PrefetchScalarGridSpec(
            num_scalar_prefetch=0, grid=(b // tb,),
            in_specs=[pl.BlockSpec((tb, d), lambda i: (i, 0)),
                      pl.BlockSpec((tb, nf, d), lambda i: (i, 0, 0)),
                      pl.BlockSpec((d, d), lambda i: (0, 0)),
                      pl.BlockSpec((d, d), lambda i: (0, 0))],
            out_specs=pl.BlockSpec((tb, d), lambda i: (i, 0))),
        compiler_params=pltpu.CompilerParams(
            dimension_semantics=("parallel",)),
    )(s_feat, f_feat, m, wvo)


# ----------------------------------------------------------------------------
# Fused: L2-normalize s/v + similarity matrix + intra contrastive loss
# ----------------------------------------------------------------------------
def _sim_intra_kernel(s_ref, v_ref, sim_ref, loss_ref):
    s = s_ref[...]
    v = v_ref[...]
    s_n = s * jax.lax.rsqrt(jnp.sum(s * s, axis=-1, keepdims=True) + 1e-12)
    v_n = v * jax.lax.rsqrt(jnp.sum(v * v, axis=-1, keepdims=True) + 1e-12)
    sim = jax.lax.dot_general(s_n, v_n, (((1,), (1,)), ((), ())),
                              preferred_element_type=jnp.float32)
    sim_ref[...] = sim
    loss_ref[...] = _sym_ce_loss(sim)


def pallas_sim_intra(s_feat, v_feat):
    b, _ = s_feat.shape
    return pl.pallas_call(
        _sim_intra_kernel,
        out_shape=(jax.ShapeDtypeStruct((b, b), jnp.float32),
                   jax.ShapeDtypeStruct((1, 1), jnp.float32)),
        in_specs=[_vmem_spec(), _vmem_spec()],
        out_specs=(_vmem_spec(), _vmem_spec()),
    )(s_feat, v_feat)


# ----------------------------------------------------------------------------
# Fused per-modality probabilistic branch (TB batch rows per grid step):
# l2norm(global) + l2norm(local) + attention LFA (lane-axis scores) +
# residual mu head + exp-sigma head.
# ----------------------------------------------------------------------------
def _prob_branch_kernel(g_ref, l_ref, w1_ref, b1_ref, w2_ref,
                        wmu_ref, wsig_ref, bsig_ref, mu_ref, sig_ref):
    g = g_ref[...]                                          # [TB, D] raw
    g_n = g * jax.lax.rsqrt(jnp.sum(g * g, axis=-1, keepdims=True) + 1e-12)
    loc = l_ref[...]                                        # [TB, L, D]
    ln = loc * jax.lax.rsqrt(jnp.sum(loc * loc, axis=-1, keepdims=True) + 1e-12)
    tb, seq, d = ln.shape

    x2d = (ln + g_n[:, None, :]).reshape(tb * seq, d)
    h2d = jnp.tanh(jnp.dot(x2d.astype(jnp.bfloat16), w1_ref[...],
                           preferred_element_type=jnp.float32)
                   + b1_ref[...])                           # [TB*L, H]
    h3 = h2d.reshape(tb, seq, -1)                           # [TB, L, H]
    sc = jnp.sum(h3 * w2_ref[...], axis=-1)                 # [TB, L] (lanes)
    m = jnp.max(sc, axis=-1, keepdims=True)
    e = jnp.exp(sc - m)
    attn = e * pl.reciprocal(jnp.sum(e, axis=-1, keepdims=True), approx=True)
    agg = jnp.einsum('bql,bld->bqd', attn[:, None, :].astype(jnp.bfloat16),
                     ln.astype(jnp.bfloat16),
                     preferred_element_type=jnp.float32)[:, 0, :]   # [TB, D]

    agg_b = agg.astype(jnp.bfloat16)
    mu_raw = g_n + jnp.dot(agg_b, wmu_ref[...],
                           preferred_element_type=jnp.float32)
    mu_ref[...] = mu_raw * jax.lax.rsqrt(
        jnp.sum(mu_raw * mu_raw, axis=-1, keepdims=True) + 1e-12)
    log_sig = jnp.dot(agg_b, wsig_ref[...],
                      preferred_element_type=jnp.float32) + bsig_ref[...]
    sig_ref[...] = jnp.exp(jnp.clip(0.5 * log_sig, -5.0, 5.0))


def pallas_prob_branch(g_feat, l_feat, w1, b1, w2, wmu, wsig, bsig):
    b, seq, d = l_feat.shape
    hdim = w1.shape[1]
    tb = _choose_rows(b)
    return pl.pallas_call(
        _prob_branch_kernel,
        out_shape=(jax.ShapeDtypeStruct((b, d), jnp.float32),
                   jax.ShapeDtypeStruct((b, d), jnp.float32)),
        grid_spec=pltpu.PrefetchScalarGridSpec(
            num_scalar_prefetch=0, grid=(b // tb,),
            in_specs=[pl.BlockSpec((tb, d), lambda i: (i, 0)),
                      pl.BlockSpec((tb, seq, d), lambda i: (i, 0, 0)),
                      pl.BlockSpec((d, hdim), lambda i: (0, 0)),
                      pl.BlockSpec((1, hdim), lambda i: (0, 0)),
                      pl.BlockSpec((1, hdim), lambda i: (0, 0)),
                      pl.BlockSpec((d, d), lambda i: (0, 0)),
                      pl.BlockSpec((d, d), lambda i: (0, 0)),
                      pl.BlockSpec((1, d), lambda i: (0, 0))],
            out_specs=(pl.BlockSpec((tb, d), lambda i: (i, 0)),
                       pl.BlockSpec((tb, d), lambda i: (i, 0)))),
        compiler_params=pltpu.CompilerParams(
            dimension_semantics=("parallel",)),
    )(g_feat, l_feat, w1, b1, w2, wmu, wsig, bsig)


# ----------------------------------------------------------------------------
# Fused: gaussian sampling + pairwise distance + sample mean + inter loss + KL
# ----------------------------------------------------------------------------
def _dist_inter_kl_kernel(mut_ref, sigt_ref, epst_ref, muv_ref, sigv_ref,
                          epsv_ref, dis_ref, inter_ref, kl_ref,
                          *, bsz, kt, kv):
    mu_t = mut_ref[...]; sig_t = sigt_ref[...]              # [B, D]
    mu_v = muv_ref[...]; sig_v = sigv_ref[...]
    d = mu_t.shape[-1]
    nt = bsz * kt
    nv = bsz * kv
    # sample gaussian embeddings entirely in VMEM (broadcast, no repeat matmul)
    emb_t = (mu_t[:, None, :] + sig_t[:, None, :] * epst_ref[...]).reshape(nt, d)
    emb_v = (mu_v[:, None, :] + sig_v[:, None, :] * epsv_ref[...]).reshape(nv, d)
    # pairwise L2 distances between all samples (bf16 MXU, f32 accumulation)
    tv = jax.lax.dot_general(emb_t.astype(jnp.bfloat16),
                             emb_v.astype(jnp.bfloat16),
                             (((1,), (1,)), ((), ())),
                             preferred_element_type=jnp.float32)
    tt = jnp.sum(emb_t * emb_t, axis=1, keepdims=True)
    vv = jnp.sum(emb_v * emb_v, axis=1, keepdims=True)
    dist = jnp.sqrt(jnp.maximum(tt + jnp.transpose(vv) - 2.0 * tv, 1e-12))
    # mean over (kt, kv) sample pairs via one-hot matrices (MXU reduction)
    n_i = jax.lax.broadcasted_iota(jnp.int32, (nt, bsz), 0)
    b_i = jax.lax.broadcasted_iota(jnp.int32, (nt, bsz), 1)
    rep_t = jnp.where((n_i >= b_i * kt) & (n_i < b_i * kt + kt), 1.0, 0.0)
    n_j = jax.lax.broadcasted_iota(jnp.int32, (nv, bsz), 0)
    b_j = jax.lax.broadcasted_iota(jnp.int32, (nv, bsz), 1)
    rep_v = jnp.where((n_j >= b_j * kv) & (n_j < b_j * kv + kv), 1.0, 0.0)
    dis = jnp.dot(
        jax.lax.dot_general(rep_t, dist, (((0,), (0,)), ((), ())),
                            preferred_element_type=jnp.float32),
        rep_v, preferred_element_type=jnp.float32) * (1.0 / (kt * kv))
    dis_ref[...] = dis
    inter_ref[...] = _sym_ce_loss(-dis)
    # diagonal-Gaussian KL( N(mu_v, sig_v) || N(mu_t, sig_t) ) on mu/sigma
    sv2 = sig_v * sig_v + 1e-8
    st2 = sig_t * sig_t + 1e-8
    diff = mu_v - mu_t
    kl = 0.5 * (jnp.log(st2 / sv2) + (sv2 + diff * diff) / st2 - 1.0)
    kl_ref[...] = jnp.mean(jnp.sum(kl, axis=-1, keepdims=True),
                           axis=0, keepdims=True)


def pallas_dist_inter_kl(mu_t, sig_t, eps_t, mu_v, sig_v, eps_v, kt, kv):
    b = mu_t.shape[0]
    kern = functools.partial(_dist_inter_kl_kernel, bsz=b, kt=kt, kv=kv)
    return pl.pallas_call(
        kern,
        out_shape=(jax.ShapeDtypeStruct((b, b), jnp.float32),
                   jax.ShapeDtypeStruct((1, 1), jnp.float32),
                   jax.ShapeDtypeStruct((1, 1), jnp.float32)),
        in_specs=[_vmem_spec()] * 6,
        out_specs=(_vmem_spec(), _vmem_spec(), _vmem_spec()),
    )(mu_t, sig_t, eps_t, mu_v, sig_v, eps_v)


# ----------------------------------------------------------------------------
# Parameters: weights stored bf16 at rest, biases / score vectors f32;
# video-transformer weight folds hoisted out of the hot path.
# ----------------------------------------------------------------------------
def init_params(key, cfg):
    d = cfg["embed_dim"]
    dt = cfg["token_dim"]
    r = cfg["input_res"]
    h = d // 2
    ks = list(jax.random.split(key, 16))

    def w(k, shape, dtype=jnp.bfloat16):
        return (jax.random.normal(k, shape, jnp.float32)
                / jnp.sqrt(jnp.float32(shape[0]))).astype(dtype)

    wq = w(ks[3], (d, d), jnp.float32)
    wk = w(ks[4], (d, d), jnp.float32)
    wv = w(ks[5], (d, d), jnp.float32)
    wo = w(ks[6], (d, d), jnp.float32)

    return {
        # pseudo-CLIP encoders (bf16 at rest)
        "w_txt": w(ks[0], (dt, d)),
        "w_txt_s": w(ks[1], (dt, d)),
        "w_img": w(ks[2], (3 * r * r, d)),
        # video transformer, pre-folded once: m = Wq @ Wk^T, wvo = Wv @ Wo
        "vt_m": (wq @ wk.T).astype(jnp.bfloat16),
        "vt_wvo": (wv @ wo).astype(jnp.bfloat16),
        # lfa_text + per_text
        "lfa_t_w1": w(ks[7], (d, h)),
        "lfa_t_b1": jnp.zeros((1, h), jnp.float32),
        "lfa_t_w2": w(ks[8], (1, h), jnp.float32),
        "per_t_wmu": w(ks[9], (d, d)),
        "per_t_wsig": w(ks[10], (d, d)),
        "per_t_bsig": jnp.zeros((1, d), jnp.float32),
        # lfa_video + per_video
        "lfa_v_w1": w(ks[11], (d, h)),
        "lfa_v_b1": jnp.zeros((1, h), jnp.float32),
        "lfa_v_w2": w(ks[12], (1, h), jnp.float32),
        "per_v_wmu": w(ks[13], (d, d)),
        "per_v_wsig": w(ks[14], (d, d)),
        "per_v_bsig": jnp.zeros((1, d), jnp.float32),
    }


# ----------------------------------------------------------------------------
# Forward pass (is_train=True branch of CLIPStochastic.forward)
# ----------------------------------------------------------------------------
def clip_stochastic_forward(params, data, cfg, key):
    batch_size = data["video"].shape[0]
    num_frames = cfg["num_frames"]
    res = cfg["input_res"]
    d = cfg["embed_dim"]
    kt = cfg["n_text_samples"]
    kv = cfg["n_video_samples"]

    tok = data["text"]                                    # [B, L, Dt]
    b, seq, dt = tok.shape

    # --- pseudo CLIP text encoder: word features + sentence feature ---
    w_feat = pallas_matmul(tok.reshape(b * seq, dt),
                           params["w_txt"]).reshape(b, seq, d)
    s_feat = pallas_matmul(jnp.mean(tok, axis=1), params["w_txt_s"])   # [B, D]

    # --- pseudo CLIP image encoder: frame features (tiled bf16 matmul) ---
    video = data["video"].reshape(-1, 3, res, res)        # NCHW, as in PyTorch
    f_feat = pallas_matmul(
        video.reshape(batch_size * num_frames, 3 * res * res),
        params["w_img"]).reshape(batch_size, num_frames, d)

    # --- video transformer pooling ---
    v_feat = pallas_video_transformer(s_feat, f_feat,
                                      params["vt_m"], params["vt_wvo"])

    # --- fused: normalization + similarity matrix + intra contrastive loss ---
    sim_matrix, intra11 = pallas_sim_intra(s_feat, v_feat)

    # --- fused probabilistic text / video branches (normalize in-kernel) ---
    mu_t, sigma_t = pallas_prob_branch(
        s_feat, w_feat, params["lfa_t_w1"], params["lfa_t_b1"],
        params["lfa_t_w2"], params["per_t_wmu"], params["per_t_wsig"],
        params["per_t_bsig"])
    mu_v, sigma_v = pallas_prob_branch(
        v_feat, f_feat, params["lfa_v_w1"], params["lfa_v_b1"],
        params["lfa_v_w2"], params["per_v_wmu"], params["per_v_wsig"],
        params["per_v_bsig"])

    # --- fused: sampling + pairwise distance matrix + inter loss + KL ---
    eps_t = jax.random.normal(jax.random.fold_in(key, 1),
                              (b, kt, d), jnp.float32)
    eps_v = jax.random.normal(jax.random.fold_in(key, 2),
                              (batch_size, kv, d), jnp.float32)
    dis_matrix, inter11, kl11 = pallas_dist_inter_kl(
        mu_t, sigma_t, eps_t, mu_v, sigma_v, eps_v, kt, kv)

    total_loss = (cfg["alpha"] * (intra11[0, 0] + inter11[0, 0])
                  + cfg["beta"] * kl11[0, 0])
    return sim_matrix, dis_matrix, total_loss


# ----------------------------------------------------------------------------
# Main
# ----------------------------------------------------------------------------
if __name__ == "__main__":
    cfg = dict(
        alpha=0.1,
        beta=1e-4,
        embed_dim=32,         # (512 in the real config; kept small here)
        n_text_samples=3,
        n_video_samples=3,
        num_frames=4,
        input_res=16,
        token_dim=32,
        max_words=8,
        clip_arch="ViT-B/32",
    )

    key = jax.random.PRNGKey(0)
    k_param, k_text, k_video, k_samp = jax.random.split(key, 4)

    params = init_params(k_param, cfg)

    B = 2
    data = {
        "text": jax.random.normal(
            k_text, (B, cfg["max_words"], cfg["token_dim"]), jnp.float32),
        "video": jax.random.normal(
            k_video, (B, cfg["num_frames"], 3, cfg["input_res"],
                      cfg["input_res"]), jnp.float32),
    }

    fwd = jax.jit(lambda p, d_, k_: clip_stochastic_forward(p, d_, cfg, k_))
    sim_matrix, dis_matrix, loss = fwd(params, data, k_samp)
    jax.block_until_ready((sim_matrix, dis_matrix, loss))

    assert sim_matrix.shape == (B, B)
    assert dis_matrix.shape == (B, B)
    assert bool(jnp.isfinite(loss))
    assert bool(jnp.all(jnp.isfinite(sim_matrix)))
    assert bool(jnp.all(jnp.isfinite(dis_matrix)))
    print("KERNEL_OK")
</pallas_src>

<mosaic_0001>
module attributes {stable_mosaic.version = 11 : i64} {
  func.func @_matmul_kernel(%arg0: i32, %arg1: i32, %arg2: memref<8x768xf32, #tpu.memory_space<vmem>>, %arg3: memref<768x32xbf16, #tpu.memory_space<vmem>>, %arg4: memref<8x32xf32, #tpu.memory_space<vmem>>, %arg5: memref<8x32xf32, #tpu.memory_space<vmem>>) attributes {dimension_semantics = [#tpu.dimension_semantics<parallel>, #tpu.dimension_semantics<arbitrary>], iteration_bounds = array<i64: 1, 1>, scalar_prefetch = 0 : i64, scratch_operands = 1 : i64, tpu.core_type = #tpu.core_type<tc>, window_params = [{transform_indices = @transform_0, window_bounds = array<i64: 8, 768>}, {transform_indices = @transform_1, window_bounds = array<i64: 768, 32>}, {transform_indices = @transform_2, window_bounds = array<i64: 8, 32>}]} {
    %c0_i32 = arith.constant 0 : i32
    %0 = arith.cmpi eq, %arg1, %c0_i32 : i32
    %1 = arith.extui %0 : i1 to i32
    %c0_i32_0 = arith.constant 0 : i32
    %2 = arith.cmpi ne, %1, %c0_i32_0 : i32
    scf.if %2 {
      %cst_10 = arith.constant 0.000000e+00 : f32
      %13 = vector.broadcast %cst_10 : f32 to vector<8x32xf32>
      %c0_11 = arith.constant 0 : index
      %c0_12 = arith.constant 0 : index
      %14 = vector.load %arg5[%c0_11, %c0_12] : memref<8x32xf32, #tpu.memory_space<vmem>>, vector<8x32xf32>
      tpu.vector_store %arg5[%c0_11, %c0_12], %13 {strides = array<i32>} : memref<8x32xf32, #tpu.memory_space<vmem>>, vector<8x32xf32>,
    } else {
    }
    %c0 = arith.constant 0 : index
    %c0_1 = arith.constant 0 : index
    %3 = vector.load %arg5[%c0, %c0_1] : memref<8x32xf32, #tpu.memory_space<vmem>>, vector<8x32xf32>
    %c0_2 = arith.constant 0 : index
    %c0_3 = arith.constant 0 : index
    %4 = vector.load %arg2[%c0_2, %c0_3] : memref<8x768xf32, #tpu.memory_space<vmem>>, vector<8x768xf32>
    %5 = arith.truncf %4 : vector<8x768xf32> to vector<8x768xbf16>
    %c0_4 = arith.constant 0 : index
    %c0_5 = arith.constant 0 : index
    %6 = vector.load %arg3[%c0_4, %c0_5] : memref<768x32xbf16, #tpu.memory_space<vmem>>, vector<768x32xbf16>
    %cst = arith.constant dense<0.000000e+00> : vector<8x32xf32>
    %7 = tpu.matmul %5, %6, %cst {dimension_numbers = #tpu.dot_dimension_numbers<[1], [0], [0], [1], [0, 0, 1, 1], [], []>} : vector<8x768xbf16>, vector<768x32xbf16>, vector<8x32xf32> -> vector<8x32xf32>
    %8 = arith.addf %3, %7 : vector<8x32xf32>
    %c0_6 = arith.constant 0 : index
    %c0_7 = arith.constant 0 : index
    %9 = vector.load %arg5[%c0_6, %c0_7] : memref<8x32xf32, #tpu.memory_space<vmem>>, vector<8x32xf32>
    tpu.vector_store %arg5[%c0_6, %c0_7], %8 {strides = array<i32>} : memref<8x32xf32, #tpu.memory_space<vmem>>, vector<8x32xf32>,
    %c0_i32_8 = arith.constant 0 : i32
    %10 = arith.cmpi eq, %arg1, %c0_i32_8 : i32
    %11 = arith.extui %10 : i1 to i32
    %c0_i32_9 = arith.constant 0 : i32
    %12 = arith.cmpi ne, %11, %c0_i32_9 : i32
    scf.if %12 {
      %c0_10 = arith.constant 0 : index
      %c0_11 = arith.constant 0 : index
      %13 = vector.load %arg5[%c0_10, %c0_11] : memref<8x32xf32, #tpu.memory_space<vmem>>, vector<8x32xf32>
      %c0_12 = arith.constant 0 : index
      %c0_13 = arith.constant 0 : index
      %14 = vector.load %arg4[%c0_12, %c0_13] : memref<8x32xf32, #tpu.memory_space<vmem>>, vector<8x32xf32>
      tpu.vector_store %arg4[%c0_12, %c0_13], %13 {strides = array<i32>} : memref<8x32xf32, #tpu.memory_space<vmem>>, vector<8x32xf32>,
    } else {
    }
    return
  }
  func.func @transform_0(%arg0: i32, %arg1: i32) -> (i32, i32) {
    %c0_i32 = arith.constant 0 : i32
    return %arg0, %arg1 : i32, i32
  }
  func.func @transform_1(%arg0: i32, %arg1: i32) -> (i32, i32) {
    %c0_i32 = arith.constant 0 : i32
    %c0_i32_0 = arith.constant 0 : i32
    return %arg1, %c0_i32 : i32, i32
  }
  func.func @transform_2(%arg0: i32, %arg1: i32) -> (i32, i32) {
    %c0_i32 = arith.constant 0 : i32
    %c0_i32_0 = arith.constant 0 : i32
    return %arg0, %c0_i32 : i32, i32
  }
}

module attributes {stable_mosaic.version = 11 : i64} {
  func.func @_matmul_kernel(%arg0: i32, %arg1: i32, %arg2: memref<8x128xf32, #tpu.memory_space<vmem>>, %arg3: memref<128x32xbf16, #tpu.memory_space<vmem>>, %arg4: memref<8x32xf32, #tpu.memory_space<vmem>>, %arg5: memref<8x32xf32, #tpu.memory_space<vmem>>) attributes {dimension_semantics = [#tpu.dimension_semantics<parallel>, #tpu.dimension_semantics<arbitrary>], iteration_bounds = array<i64: 1, 1>, scalar_prefetch = 0 : i64, scratch_operands = 1 : i64, tpu.core_type = #tpu.core_type<tc>, window_params = [{transform_indices = @transform_0, window_bounds = array<i64: 8, 128>}, {transform_indices = @transform_1, window_bounds = array<i64: 128, 32>}, {transform_indices = @transform_2, window_bounds = array<i64: 8, 32>}]} {
    %c0_i32 = arith.constant 0 : i32
    %0 = arith.cmpi eq, %arg1, %c0_i32 : i32
    %1 = arith.extui %0 : i1 to i32
    %c0_i32_0 = arith.constant 0 : i32
    %2 = arith.cmpi ne, %1, %c0_i32_0 : i32
    scf.if %2 {
      %cst_10 = arith.constant 0.000000e+00 : f32
      %13 = vector.broadcast %cst_10 : f32 to vector<8x32xf32>
      %c0_11 = arith.constant 0 : index
      %c0_12 = arith.constant 0 : index
      %14 = vector.load %arg5[%c0_11, %c0_12] : memref<8x32xf32, #tpu.memory_space<vmem>>, vector<8x32xf32>
      tpu.vector_store %arg5[%c0_11, %c0_12], %13 {strides = array<i32>} : memref<8x32xf32, #tpu.memory_space<vmem>>, vector<8x32xf32>,
    } else {
    }
    %c0 = arith.constant 0 : index
    %c0_1 = arith.constant 0 : index
    %3 = vector.load %arg5[%c0, %c0_1] : memref<8x32xf32, #tpu.memory_space<vmem>>, vector<8x32xf32>
    %c0_2 = arith.constant 0 : index
    %c0_3 = arith.constant 0 : index
    %4 = vector.load %arg2[%c0_2, %c0_3] : memref<8x128xf32, #tpu.memory_space<vmem>>, vector<8x128xf32>
    %5 = arith.truncf %4 : vector<8x128xf32> to vector<8x128xbf16>
    %c0_4 = arith.constant 0 : index
    %c0_5 = arith.constant 0 : index
    %6 = vector.load %arg3[%c0_4, %c0_5] : memref<128x32xbf16, #tpu.memory_space<vmem>>, vector<128x32xbf16>
    %cst = arith.constant dense<0.000000e+00> : vector<8x32xf32>
    %7 = tpu.matmul %5, %6, %cst {dimension_numbers = #tpu.dot_dimension_numbers<[1], [0], [0], [1], [0, 0, 1, 1], [], []>} : vector<8x128xbf16>, vector<128x32xbf16>, vector<8x32xf32> -> vector<8x32xf32>
    %8 = arith.addf %3, %7 : vector<8x32xf32>
    %c0_6 = arith.constant 0 : index
    %c0_7 = arith.constant 0 : index
    %9 = vector.load %arg5[%c0_6, %c0_7] : memref<8x32xf32, #tpu.memory_space<vmem>>, vector<8x32xf32>
    tpu.vector_store %arg5[%c0_6, %c0_7], %8 {strides = array<i32>} : memref<8x32xf32, #tpu.memory_space<vmem>>, vector<8x32xf32>,
    %c0_i32_8 = arith.constant 0 : i32
    %10 = arith.cmpi eq, %arg1, %c0_i32_8 : i32
    %11 = arith.extui %10 : i1 to i32
    %c0_i32_9 = arith.constant 0 : i32
    %12 = arith.cmpi ne, %11, %c0_i32_9 : i32
    scf.if %12 {
      %c0_10 = arith.constant 0 : index
      %c0_11 = arith.constant 0 : index
      %13 = vector.load %arg5[%c0_10, %c0_11] : memref<8x32xf32, #tpu.memory_space<vmem>>, vector<8x32xf32>
      %c0_12 = arith.constant 0 : index
      %c0_13 = arith.constant 0 : index
      %14 = vector.load %arg4[%c0_12, %c0_13] : memref<8x32xf32, #tpu.memory_space<vmem>>, vector<8x32xf32>
      tpu.vector_store %arg4[%c0_12, %c0_13], %13 {strides = array<i32>} : memref<8x32xf32, #tpu.memory_space<vmem>>, vector<8x32xf32>,
    } else {
    }
    return
  }
  func.func @transform_0(%arg0: i32, %arg1: i32) -> (i32, i32) {
    %c0_i32 = arith.constant 0 : i32
    return %arg0, %arg1 : i32, i32
  }
  func.func @transform_1(%arg0: i32, %arg1: i32) -> (i32, i32) {
    %c0_i32 = arith.constant 0 : i32
    %c0_i32_0 = arith.constant 0 : i32
    return %arg1, %c0_i32 : i32, i32
  }
  func.func @transform_2(%arg0: i32, %arg1: i32) -> (i32, i32) {
    %c0_i32 = arith.constant 0 : i32
    %c0_i32_0 = arith.constant 0 : i32
    return %arg0, %c0_i32 : i32, i32
  }
}

module attributes {stable_mosaic.version = 11 : i64} {
  func.func @_video_pool_kernel(%arg0: i32, %arg1: memref<2x32xf32, #tpu.memory_space<vmem>>, %arg2: memref<2x4x32xf32, #tpu.memory_space<vmem>>, %arg3: memref<32x32xbf16, #tpu.memory_space<vmem>>, %arg4: memref<32x32xbf16, #tpu.memory_space<vmem>>, %arg5: memref<2x32xf32, #tpu.memory_space<vmem>>) attributes {dimension_semantics = [#tpu.dimension_semantics<parallel>], iteration_bounds = array<i64: 1>, scalar_prefetch = 0 : i64, scratch_operands = 0 : i64, tpu.core_type = #tpu.core_type<tc>, window_params = [{transform_indices = @transform_0, window_bounds = array<i64: 2, 32>}, {transform_indices = @transform_1, window_bounds = array<i64: 2, 4, 32>}, {pipeline_mode = #tpu.pipeline_mode<synchronous>, transform_indices = @transform_2, window_bounds = array<i64: 32, 32>}, {pipeline_mode = #tpu.pipeline_mode<synchronous>, transform_indices = @transform_3, window_bounds = array<i64: 32, 32>}, {transform_indices = @transform_4, window_bounds = array<i64: 2, 32>}]} {
    %c0 = arith.constant 0 : index
    %c0_0 = arith.constant 0 : index
    %0 = vector.load %arg1[%c0, %c0_0] : memref<2x32xf32, #tpu.memory_space<vmem>>, vector<2x32xf32>
    %c0_1 = arith.constant 0 : index
    %c0_2 = arith.constant 0 : index
    %c0_3 = arith.constant 0 : index
    %1 = vector.load %arg2[%c0_1, %c0_2, %c0_3] : memref<2x4x32xf32, #tpu.memory_space<vmem>>, vector<2x4x32xf32>
    %2 = arith.truncf %1 : vector<2x4x32xf32> to vector<2x4x32xbf16>
    %3 = arith.truncf %0 : vector<2x32xf32> to vector<2x32xbf16>
    %c0_4 = arith.constant 0 : index
    %c0_5 = arith.constant 0 : index
    %4 = vector.load %arg3[%c0_4, %c0_5] : memref<32x32xbf16, #tpu.memory_space<vmem>>, vector<32x32xbf16>
    %cst = arith.constant dense<0.000000e+00> : vector<2x32xf32>
    %5 = tpu.matmul %3, %4, %cst {dimension_numbers = #tpu.dot_dimension_numbers<[1], [0], [0], [1], [0, 0, 1, 1], [], []>} : vector<2x32xbf16>, vector<32x32xbf16>, vector<2x32xf32> -> vector<2x32xf32>
    %6 = vector.shape_cast %5 : vector<2x32xf32> to vector<2x1x32xf32>
    %7 = arith.truncf %6 : vector<2x1x32xf32> to vector<2x1x32xbf16>
    "tpu.trace_start"() <{level = 10 : i32, message = "bqd,bfd->bqf"}> : () -> ()
    %cst_6 = arith.constant dense<0.000000e+00> : vector<2x1x4xf32>
    %8 = tpu.matmul %7, %2, %cst_6 {dimension_numbers = #tpu.dot_dimension_numbers<[2], [2], [1], [1], [0, 0, 0, 1, 1, 1], [0], [0]>} : vector<2x1x32xbf16>, vector<2x4x32xbf16>, vector<2x1x4xf32> -> vector<2x1x4xf32>
    "tpu.trace_stop"() : () -> ()
    %cst_7 = arith.constant 0.176776692 : f32
    %9 = vector.broadcast %cst_7 : f32 to vector<2x1x4xf32>
    %10 = arith.mulf %8, %9 : vector<2x1x4xf32>
    %cst_8 = arith.constant dense<0xFF800000> : vector<2x1xf32>
    %11 = vector.multi_reduction <maximumf>, %10, %cst_8 [2] : vector<2x1x4xf32> to vector<2x1xf32>
    %12 = vector.shape_cast %11 : vector<2x1xf32> to vector<2x1x1xf32>
    %13 = vector.broadcast %12 : vector<2x1x1xf32> to vector<2x1x4xf32>
    %14 = arith.subf %10, %13 : vector<2x1x4xf32>
    %15 = math.exp %14 : vector<2x1x4xf32>
    %cst_9 = arith.constant dense<0.000000e+00> : vector<2x1xf32>
    %16 = vector.multi_reduction <add>, %15, %cst_9 [2] : vector<2x1x4xf32> to vector<2x1xf32>
    %17 = vector.shape_cast %16 : vector<2x1xf32> to vector<2x1x1xf32>
    %18 = tpu.reciprocal %17 {approx = true} : vector<2x1x1xf32> -> vector<2x1x1xf32>
    %19 = vector.broadcast %18 : vector<2x1x1xf32> to vector<2x1x4xf32>
    %20 = arith.mulf %15, %19 : vector<2x1x4xf32>
    %21 = arith.truncf %20 : vector<2x1x4xf32> to vector<2x1x4xbf16>
    "tpu.trace_start"() <{level = 10 : i32, message = "bqf,bfd->bqd"}> : () -> ()
    %cst_10 = arith.constant dense<0.000000e+00> : vector<2x1x32xf32>
    %22 = tpu.matmul %21, %2, %cst_10 {dimension_numbers = #tpu.dot_dimension_numbers<[2], [1], [1], [2], [0, 0, 0, 1, 1, 2], [0], [0]>} : vector<2x1x4xbf16>, vector<2x4x32xbf16>, vector<2x1x32xf32> -> vector<2x1x32xf32>
    "tpu.trace_stop"() : () -> ()
    %23 = vector.shape_cast %22 : vector<2x1x32xf32> to vector<2x32xf32>
    %24 = arith.truncf %23 : vector<2x32xf32> to vector<2x32xbf16>
    %c0_11 = arith.constant 0 : index
    %c0_12 = arith.constant 0 : index
    %25 = vector.load %arg4[%c0_11, %c0_12] : memref<32x32xbf16, #tpu.memory_space<vmem>>, vector<32x32xbf16>
    %cst_13 = arith.constant dense<0.000000e+00> : vector<2x32xf32>
    %26 = tpu.matmul %24, %25, %cst_13 {dimension_numbers = #tpu.dot_dimension_numbers<[1], [0], [0], [1], [0, 0, 1, 1], [], []>} : vector<2x32xbf16>, vector<32x32xbf16>, vector<2x32xf32> -> vector<2x32xf32>
    %27 = arith.addf %26, %0 : vector<2x32xf32>
    %c0_14 = arith.constant 0 : index
    %c0_15 = arith.constant 0 : index
    %28 = vector.load %arg5[%c0_14, %c0_15] : memref<2x32xf32, #tpu.memory_space<vmem>>, vector<2x32xf32>
    tpu.vector_store %arg5[%c0_14, %c0_15], %27 {strides = array<i32>} : memref<2x32xf32, #tpu.memory_space<vmem>>, vector<2x32xf32>,
    return
  }
  func.func @transform_0(%arg0: i32) -> (i32, i32) {
    %c0_i32 = arith.constant 0 : i32
    %c0_i32_0 = arith.constant 0 : i32
    return %arg0, %c0_i32 : i32, i32
  }
  func.func @transform_1(%arg0: i32) -> (i32, i32, i32) {
    %c0_i32 = arith.constant 0 : i32
    %c0_i32_0 = arith.constant 0 : i32
    %c0_i32_1 = arith.constant 0 : i32
    return %arg0, %c0_i32, %c0_i32_0 : i32, i32, i32
  }
  func.func @transform_2(%arg0: i32) -> (i32, i32) {
    %c0_i32 = arith.constant 0 : i32
    %c0_i32_0 = arith.constant 0 : i32
    %c0_i32_1 = arith.constant 0 : i32
    return %c0_i32, %c0_i32_0 : i32, i32
  }
  func.func @transform_3(%arg0: i32) -> (i32, i32) {
    %c0_i32 = arith.constant 0 : i32
    %c0_i32_0 = arith.constant 0 : i32
    %c0_i32_1 = arith.constant 0 : i32
    return %c0_i32, %c0_i32_0 : i32, i32
  }
  func.func @transform_4(%arg0: i32) -> (i32, i32) {
    %c0_i32 = arith.constant 0 : i32
    %c0_i32_0 = arith.constant 0 : i32
    return %arg0, %c0_i32 : i32, i32
  }
}

module attributes {stable_mosaic.version = 11 : i64} {
  func.func @_sim_intra_kernel(%arg0: memref<2x32xf32, #tpu.memory_space<vmem>>, %arg1: memref<2x32xf32, #tpu.memory_space<vmem>>, %arg2: memref<2x2xf32, #tpu.memory_space<vmem>>, %arg3: memref<1x1xf32, #tpu.memory_space<vmem>>) attributes {dimension_semantics = [], scalar_prefetch = 0 : i64, scratch_operands = 0 : i64, tpu.core_type = #tpu.core_type<tc>} {
    %c0 = arith.constant 0 : index
    %c0_0 = arith.constant 0 : index
    %0 = vector.load %arg0[%c0, %c0_0] : memref<2x32xf32, #tpu.memory_space<vmem>>, vector<2x32xf32>
    %c0_1 = arith.constant 0 : index
    %c0_2 = arith.constant 0 : index
    %1 = vector.load %arg1[%c0_1, %c0_2] : memref<2x32xf32, #tpu.memory_space<vmem>>, vector<2x32xf32>
    %2 = arith.mulf %0, %0 : vector<2x32xf32>
    %cst = arith.constant dense<0.000000e+00> : vector<2xf32>
    %3 = vector.multi_reduction <add>, %2, %cst [1] : vector<2x32xf32> to vector<2xf32>
    %4 = vector.shape_cast %3 : vector<2xf32> to vector<2x1xf32>
    %cst_3 = arith.constant 9.99999996E-13 : f32
    %5 = vector.broadcast %cst_3 : f32 to vector<2x1xf32>
    %6 = arith.addf %4, %5 : vector<2x1xf32>
    %7 = math.rsqrt %6 : vector<2x1xf32>
    %8 = vector.broadcast %7 : vector<2x1xf32> to vector<2x32xf32>
    %9 = arith.mulf %0, %8 : vector<2x32xf32>
    %10 = arith.mulf %1, %1 : vector<2x32xf32>
    %cst_4 = arith.constant dense<0.000000e+00> : vector<2xf32>
    %11 = vector.multi_reduction <add>, %10, %cst_4 [1] : vector<2x32xf32> to vector<2xf32>
    %12 = vector.shape_cast %11 : vector<2xf32> to vector<2x1xf32>
    %cst_5 = arith.constant 9.99999996E-13 : f32
    %13 = vector.broadcast %cst_5 : f32 to vector<2x1xf32>
    %14 = arith.addf %12, %13 : vector<2x1xf32>
    %15 = math.rsqrt %14 : vector<2x1xf32>
    %16 = vector.broadcast %15 : vector<2x1xf32> to vector<2x32xf32>
    %17 = arith.mulf %1, %16 : vector<2x32xf32>
    %cst_6 = arith.constant dense<0.000000e+00> : vector<2x2xf32>
    %18 = tpu.matmul %9, %17, %cst_6 {dimension_numbers = #tpu.dot_dimension_numbers<[1], [1], [0], [0], [0, 0, 1, 0], [], []>} : vector<2x32xf32>, vector<2x32xf32>, vector<2x2xf32> -> vector<2x2xf32>
    %c0_7 = arith.constant 0 : index
    %c0_8 = arith.constant 0 : index
    %19 = vector.load %arg2[%c0_7, %c0_8] : memref<2x2xf32, #tpu.memory_space<vmem>>, vector<2x2xf32>
    tpu.vector_store %arg2[%c0_7, %c0_8], %18 {strides = array<i32>} : memref<2x2xf32, #tpu.memory_space<vmem>>, vector<2x2xf32>,
    %20 = tpu.iota {dimensions = array<i32: 0>} : vector<2x2xi32>
    %21 = tpu.iota {dimensions = array<i32: 1>} : vector<2x2xi32>
    %22 = arith.cmpi eq, %20, %21 : vector<2x2xi32>
    %cst_9 = arith.constant dense<0xFF800000> : vector<2xf32>
    %23 = vector.multi_reduction <maximumf>, %18, %cst_9 [1] : vector<2x2xf32> to vector<2xf32>
    %24 = vector.shape_cast %23 : vector<2xf32> to vector<2x1xf32>
    %25 = vector.broadcast %24 : vector<2x1xf32> to vector<2x2xf32>
    %26 = arith.subf %18, %25 : vector<2x2xf32>
    %27 = math.exp %26 : vector<2x2xf32>
    %cst_10 = arith.constant dense<0.000000e+00> : vector<2xf32>
    %28 = vector.multi_reduction <add>, %27, %cst_10 [1] : vector<2x2xf32> to vector<2xf32>
    %29 = vector.shape_cast %28 : vector<2xf32> to vector<2x1xf32>
    %30 = math.log %29 : vector<2x1xf32>
    %31 = arith.addf %24, %30 : vector<2x1xf32>
    %32 = vector.broadcast %31 : vector<2x1xf32> to vector<2x2xf32>
    %33 = arith.subf %18, %32 : vector<2x2xf32>
    %cst_11 = arith.constant 0.000000e+00 : f32
    %34 = vector.broadcast %cst_11 : f32 to vector<2x2xf32>
    %35 = arith.select %22, %33, %34 : vector<2x2xi1>, vector<2x2xf32>
    %cst_12 = arith.constant dense<0.000000e+00> : vector<2xf32>
    %36 = vector.multi_reduction <add>, %35, %cst_12 [1] : vector<2x2xf32> to vector<2xf32>
    %37 = vector.shape_cast %36 : vector<2xf32> to vector<2x1xf32>
    %cst_13 = arith.constant dense<0.000000e+00> : vector<1xf32>
    %38 = vector.multi_reduction <add>, %37, %cst_13 [0] : vector<2x1xf32> to vector<1xf32>
    %39 = vector.shape_cast %38 : vector<1xf32> to vector<1x1xf32>
    %cst_14 = arith.constant 2.000000e+00 : f32
    %40 = vector.broadcast %cst_14 : f32 to vector<1x1xf32>
    %41 = arith.divf %39, %40 : vector<1x1xf32>
    %cst_15 = arith.constant 0.000000e+00 : f32
    %42 = vector.broadcast %cst_15 : f32 to vector<1x1xf32>
    %43 = arith.subf %42, %41 : vector<1x1xf32>
    %cst_16 = arith.constant dense<0xFF800000> : vector<2xf32>
    %44 = vector.multi_reduction <maximumf>, %18, %cst_16 [0] : vector<2x2xf32> to vector<2xf32>
    %45 = vector.shape_cast %44 : vector<2xf32> to vector<1x2xf32>
    %46 = vector.broadcast %45 : vector<1x2xf32> to vector<2x2xf32>
    %47 = arith.subf %18, %46 : vector<2x2xf32>
    %48 = math.exp %47 : vector<2x2xf32>
    %cst_17 = arith.constant dense<0.000000e+00> : vector<2xf32>
    %49 = vector.multi_reduction <add>, %48, %cst_17 [0] : vector<2x2xf32> to vector<2xf32>
    %50 = vector.shape_cast %49 : vector<2xf32> to vector<1x2xf32>
    %51 = math.log %50 : vector<1x2xf32>
    %52 = arith.addf %45, %51 : vector<1x2xf32>
    %53 = vector.broadcast %52 : vector<1x2xf32> to vector<2x2xf32>
    %54 = arith.subf %18, %53 : vector<2x2xf32>
    %cst_18 = arith.constant 0.000000e+00 : f32
    %55 = vector.broadcast %cst_18 : f32 to vector<2x2xf32>
    %56 = arith.select %22, %54, %55 : vector<2x2xi1>, vector<2x2xf32>
    %cst_19 = arith.constant dense<0.000000e+00> : vector<2xf32>
    %57 = vector.multi_reduction <add>, %56, %cst_19 [0] : vector<2x2xf32> to vector<2xf32>
    %58 = vector.shape_cast %57 : vector<2xf32> to vector<1x2xf32>
    %cst_20 = arith.constant dense<0.000000e+00> : vector<1xf32>
    %59 = vector.multi_reduction <add>, %58, %cst_20 [1] : vector<1x2xf32> to vector<1xf32>
    %60 = vector.shape_cast %59 : vector<1xf32> to vector<1x1xf32>
    %cst_21 = arith.constant 2.000000e+00 : f32
    %61 = vector.broadcast %cst_21 : f32 to vector<1x1xf32>
    %62 = arith.divf %60, %61 : vector<1x1xf32>
    %cst_22 = arith.constant 0.000000e+00 : f32
    %63 = vector.broadcast %cst_22 : f32 to vector<1x1xf32>
    %64 = arith.subf %63, %62 : vector<1x1xf32>
    %65 = arith.addf %43, %64 : vector<1x1xf32>
    %cst_23 = arith.constant 5.000000e-01 : f32
    %66 = vector.broadcast %cst_23 : f32 to vector<1x1xf32>
    %67 = arith.mulf %66, %65 : vector<1x1xf32>
    %c0_24 = arith.constant 0 : index
    %c0_25 = arith.constant 0 : index
    %68 = vector.load %arg3[%c0_24, %c0_25] : memref<1x1xf32, #tpu.memory_space<vmem>>, vector<1x1xf32>
    tpu.vector_store %arg3[%c0_24, %c0_25], %67 {strides = array<i32>} : memref<1x1xf32, #tpu.memory_space<vmem>>, vector<1x1xf32>,
    return
  }
}

module attributes {stable_mosaic.version = 11 : i64} {
  func.func @_matmul_kernel(%arg0: i32, %arg1: i32, %arg2: memref<16x128xf32, #tpu.memory_space<vmem>>, %arg3: memref<128x32xbf16, #tpu.memory_space<vmem>>, %arg4: memref<16x32xf32, #tpu.memory_space<vmem>>, %arg5: memref<16x32xf32, #tpu.memory_space<vmem>>) attributes {dimension_semantics = [#tpu.dimension_semantics<parallel>, #tpu.dimension_semantics<arbitrary>], iteration_bounds = array<i64: 1, 1>, scalar_prefetch = 0 : i64, scratch_operands = 1 : i64, tpu.core_type = #tpu.core_type<tc>, window_params = [{transform_indices = @transform_0, window_bounds = array<i64: 16, 128>}, {transform_indices = @transform_1, window_bounds = array<i64: 128, 32>}, {transform_indices = @transform_2, window_bounds = array<i64: 16, 32>}]} {
    %c0_i32 = arith.constant 0 : i32
    %0 = arith.cmpi eq, %arg1, %c0_i32 : i32
    %1 = arith.extui %0 : i1 to i32
    %c0_i32_0 = arith.constant 0 : i32
    %2 = arith.cmpi ne, %1, %c0_i32_0 : i32
    scf.if %2 {
      %cst_10 = arith.constant 0.000000e+00 : f32
      %13 = vector.broadcast %cst_10 : f32 to vector<16x32xf32>
      %c0_11 = arith.constant 0 : index
      %c0_12 = arith.constant 0 : index
      %14 = vector.load %arg5[%c0_11, %c0_12] : memref<16x32xf32, #tpu.memory_space<vmem>>, vector<16x32xf32>
      tpu.vector_store %arg5[%c0_11, %c0_12], %13 {strides = array<i32>} : memref<16x32xf32, #tpu.memory_space<vmem>>, vector<16x32xf32>,
    } else {
    }
    %c0 = arith.constant 0 : index
    %c0_1 = arith.constant 0 : index
    %3 = vector.load %arg5[%c0, %c0_1] : memref<16x32xf32, #tpu.memory_space<vmem>>, vector<16x32xf32>
    %c0_2 = arith.constant 0 : index
    %c0_3 = arith.constant 0 : index
    %4 = vector.load %arg2[%c0_2, %c0_3] : memref<16x128xf32, #tpu.memory_space<vmem>>, vector<16x128xf32>
    %5 = arith.truncf %4 : vector<16x128xf32> to vector<16x128xbf16>
    %c0_4 = arith.constant 0 : index
    %c0_5 = arith.constant 0 : index
    %6 = vector.load %arg3[%c0_4, %c0_5] : memref<128x32xbf16, #tpu.memory_space<vmem>>, vector<128x32xbf16>
    %cst = arith.constant dense<0.000000e+00> : vector<16x32xf32>
    %7 = tpu.matmul %5, %6, %cst {dimension_numbers = #tpu.dot_dimension_numbers<[1], [0], [0], [1], [0, 0, 1, 1], [], []>} : vector<16x128xbf16>, vector<128x32xbf16>, vector<16x32xf32> -> vector<16x32xf32>
    %8 = arith.addf %3, %7 : vector<16x32xf32>
    %c0_6 = arith.constant 0 : index
    %c0_7 = arith.constant 0 : index
    %9 = vector.load %arg5[%c0_6, %c0_7] : memref<16x32xf32, #tpu.memory_space<vmem>>, vector<16x32xf32>
    tpu.vector_store %arg5[%c0_6, %c0_7], %8 {strides = array<i32>} : memref<16x32xf32, #tpu.memory_space<vmem>>, vector<16x32xf32>,
    %c0_i32_8 = arith.constant 0 : i32
    %10 = arith.cmpi eq, %arg1, %c0_i32_8 : i32
    %11 = arith.extui %10 : i1 to i32
    %c0_i32_9 = arith.constant 0 : i32
    %12 = arith.cmpi ne, %11, %c0_i32_9 : i32
    scf.if %12 {
      %c0_10 = arith.constant 0 : index
      %c0_11 = arith.constant 0 : index
      %13 = vector.load %arg5[%c0_10, %c0_11] : memref<16x32xf32, #tpu.memory_space<vmem>>, vector<16x32xf32>
      %c0_12 = arith.constant 0 : index
      %c0_13 = arith.constant 0 : index
      %14 = vector.load %arg4[%c0_12, %c0_13] : memref<16x32xf32, #tpu.memory_space<vmem>>, vector<16x32xf32>
      tpu.vector_store %arg4[%c0_12, %c0_13], %13 {strides = array<i32>} : memref<16x32xf32, #tpu.memory_space<vmem>>, vector<16x32xf32>,
    } else {
    }
    return
  }
  func.func @transform_0(%arg0: i32, %arg1: i32) -> (i32, i32) {
    %c0_i32 = arith.constant 0 : i32
    return %arg0, %arg1 : i32, i32
  }
  func.func @transform_1(%arg0: i32, %arg1: i32) -> (i32, i32) {
    %c0_i32 = arith.constant 0 : i32
    %c0_i32_0 = arith.constant 0 : i32
    return %arg1, %c0_i32 : i32, i32
  }
  func.func @transform_2(%arg0: i32, %arg1: i32) -> (i32, i32) {
    %c0_i32 = arith.constant 0 : i32
    %c0_i32_0 = arith.constant 0 : i32
    return %arg0, %c0_i32 : i32, i32
  }
}

module attributes {stable_mosaic.version = 11 : i64} {
  func.func @_prob_branch_kernel(%arg0: i32, %arg1: memref<2x32xf32, #tpu.memory_space<vmem>>, %arg2: memref<2x8x32xf32, #tpu.memory_space<vmem>>, %arg3: memref<32x16xbf16, #tpu.memory_space<vmem>>, %arg4: memref<1x16xf32, #tpu.memory_space<vmem>>, %arg5: memref<1x16xf32, #tpu.memory_space<vmem>>, %arg6: memref<32x32xbf16, #tpu.memory_space<vmem>>, %arg7: memref<32x32xbf16, #tpu.memory_space<vmem>>, %arg8: memref<1x32xf32, #tpu.memory_space<vmem>>, %arg9: memref<2x32xf32, #tpu.memory_space<vmem>>, %arg10: memref<2x32xf32, #tpu.memory_space<vmem>>) attributes {dimension_semantics = [#tpu.dimension_semantics<parallel>], iteration_bounds = array<i64: 1>, scalar_prefetch = 0 : i64, scratch_operands = 0 : i64, tpu.core_type = #tpu.core_type<tc>, window_params = [{transform_indices = @transform_0, window_bounds = array<i64: 2, 32>}, {transform_indices = @transform_1, window_bounds = array<i64: 2, 8, 32>}, {pipeline_mode = #tpu.pipeline_mode<synchronous>, transform_indices = @transform_2, window_bounds = array<i64: 32, 16>}, {pipeline_mode = #tpu.pipeline_mode<synchronous>, transform_indices = @transform_3, window_bounds = array<i64: 1, 16>}, {pipeline_mode = #tpu.pipeline_mode<synchronous>, transform_indices = @transform_4, window_bounds = array<i64: 1, 16>}, {pipeline_mode = #tpu.pipeline_mode<synchronous>, transform_indices = @transform_5, window_bounds = array<i64: 32, 32>}, {pipeline_mode = #tpu.pipeline_mode<synchronous>, transform_indices = @transform_6, window_bounds = array<i64: 32, 32>}, {pipeline_mode = #tpu.pipeline_mode<synchronous>, transform_indices = @transform_7, window_bounds = array<i64: 1, 32>}, {transform_indices = @transform_8, window_bounds = array<i64: 2, 32>}, {transform_indices = @transform_9, window_bounds = array<i64: 2, 32>}]} {
    %c0 = arith.constant 0 : index
    %c0_0 = arith.constant 0 : index
    %0 = vector.load %arg1[%c0, %c0_0] : memref<2x32xf32, #tpu.memory_space<vmem>>, vector<2x32xf32>
    %1 = arith.mulf %0, %0 : vector<2x32xf32>
    %cst = arith.constant dense<0.000000e+00> : vector<2xf32>
    %2 = vector.multi_reduction <add>, %1, %cst [1] : vector<2x32xf32> to vector<2xf32>
    %3 = vector.shape_cast %2 : vector<2xf32> to vector<2x1xf32>
    %cst_1 = arith.constant 9.99999996E-13 : f32
    %4 = vector.broadcast %cst_1 : f32 to vector<2x1xf32>
    %5 = arith.addf %3, %4 : vector<2x1xf32>
    %6 = math.rsqrt %5 : vector<2x1xf32>
    %7 = vector.broadcast %6 : vector<2x1xf32> to vector<2x32xf32>
    %8 = arith.mulf %0, %7 : vector<2x32xf32>
    %c0_2 = arith.constant 0 : index
    %c0_3 = arith.constant 0 : index
    %c0_4 = arith.constant 0 : index
    %9 = vector.load %arg2[%c0_2, %c0_3, %c0_4] : memref<2x8x32xf32, #tpu.memory_space<vmem>>, vector<2x8x32xf32>
    %10 = arith.mulf %9, %9 : vector<2x8x32xf32>
    %cst_5 = arith.constant dense<0.000000e+00> : vector<2x8xf32>
    %11 = vector.multi_reduction <add>, %10, %cst_5 [2] : vector<2x8x32xf32> to vector<2x8xf32>
    %12 = vector.shape_cast %11 : vector<2x8xf32> to vector<2x8x1xf32>
    %cst_6 = arith.constant 9.99999996E-13 : f32
    %13 = vector.broadcast %cst_6 : f32 to vector<2x8x1xf32>
    %14 = arith.addf %12, %13 : vector<2x8x1xf32>
    %15 = math.rsqrt %14 : vector<2x8x1xf32>
    %16 = vector.broadcast %15 : vector<2x8x1xf32> to vector<2x8x32xf32>
    %17 = arith.mulf %9, %16 : vector<2x8x32xf32>
    %18 = vector.shape_cast %8 : vector<2x32xf32> to vector<2x1x32xf32>
    %19 = vector.broadcast %18 : vector<2x1x32xf32> to vector<2x8x32xf32>
    %20 = arith.addf %17, %19 : vector<2x8x32xf32>
    %21 = vector.shape_cast %20 : vector<2x8x32xf32> to vector<16x32xf32>
    %22 = arith.truncf %21 : vector<16x32xf32> to vector<16x32xbf16>
    %c0_7 = arith.constant 0 : index
    %c0_8 = arith.constant 0 : index
    %23 = vector.load %arg3[%c0_7, %c0_8] : memref<32x16xbf16, #tpu.memory_space<vmem>>, vector<32x16xbf16>
    %cst_9 = arith.constant dense<0.000000e+00> : vector<16x16xf32>
    %24 = tpu.matmul %22, %23, %cst_9 {dimension_numbers = #tpu.dot_dimension_numbers<[1], [0], [0], [1], [0, 0, 1, 1], [], []>} : vector<16x32xbf16>, vector<32x16xbf16>, vector<16x16xf32> -> vector<16x16xf32>
    %c0_10 = arith.constant 0 : index
    %c0_11 = arith.constant 0 : index
    %25 = vector.load %arg4[%c0_10, %c0_11] : memref<1x16xf32, #tpu.memory_space<vmem>>, vector<1x16xf32>
    %26 = vector.broadcast %25 : vector<1x16xf32> to vector<16x16xf32>
    %27 = arith.addf %24, %26 : vector<16x16xf32>
    %28 = math.tanh %27 : vector<16x16xf32>
    %29 = vector.shape_cast %28 : vector<16x16xf32> to vector<2x8x16xf32>
    %c0_12 = arith.constant 0 : index
    %c0_13 = arith.constant 0 : index
    %30 = vector.load %arg5[%c0_12, %c0_13] : memref<1x16xf32, #tpu.memory_space<vmem>>, vector<1x16xf32>
    %31 = vector.shape_cast %30 : vector<1x16xf32> to vector<1x1x16xf32>
    %32 = vector.broadcast %31 : vector<1x1x16xf32> to vector<2x8x16xf32>
    %33 = arith.mulf %29, %32 : vector<2x8x16xf32>
    %cst_14 = arith.constant dense<0.000000e+00> : vector<2x8xf32>
    %34 = vector.multi_reduction <add>, %33, %cst_14 [2] : vector<2x8x16xf32> to vector<2x8xf32>
    %cst_15 = arith.constant dense<0xFF800000> : vector<2xf32>
    %35 = vector.multi_reduction <maximumf>, %34, %cst_15 [1] : vector<2x8xf32> to vector<2xf32>
    %36 = vector.shape_cast %35 : vector<2xf32> to vector<2x1xf32>
    %37 = vector.broadcast %36 : vector<2x1xf32> to vector<2x8xf32>
    %38 = arith.subf %34, %37 : vector<2x8xf32>
    %39 = math.exp %38 : vector<2x8xf32>
    %cst_16 = arith.constant dense<0.000000e+00> : vector<2xf32>
    %40 = vector.multi_reduction <add>, %39, %cst_16 [1] : vector<2x8xf32> to vector<2xf32>
    %41 = vector.shape_cast %40 : vector<2xf32> to vector<2x1xf32>
    %42 = tpu.reciprocal %41 {approx = true} : vector<2x1xf32> -> vector<2x1xf32>
    %43 = vector.broadcast %42 : vector<2x1xf32> to vector<2x8xf32>
    %44 = arith.mulf %39, %43 : vector<2x8xf32>
    %45 = vector.shape_cast %44 : vector<2x8xf32> to vector<2x1x8xf32>
    %46 = arith.truncf %45 : vector<2x1x8xf32> to vector<2x1x8xbf16>
    %47 = arith.truncf %17 : vector<2x8x32xf32> to vector<2x8x32xbf16>
    "tpu.trace_start"() <{level = 10 : i32, message = "bql,bld->bqd"}> : () -> ()
    %cst_17 = arith.constant dense<0.000000e+00> : vector<2x1x32xf32>
    %48 = tpu.matmul %46, %47, %cst_17 {dimension_numbers = #tpu.dot_dimension_numbers<[2], [1], [1], [2], [0, 0, 0, 1, 1, 2], [0], [0]>} : vector<2x1x8xbf16>, vector<2x8x32xbf16>, vector<2x1x32xf32> -> vector<2x1x32xf32>
    "tpu.trace_stop"() : () -> ()
    %49 = vector.shape_cast %48 : vector<2x1x32xf32> to vector<2x32xf32>
    %50 = arith.truncf %49 : vector<2x32xf32> to vector<2x32xbf16>
    %c0_18 = arith.constant 0 : index
    %c0_19 = arith.constant 0 : index
    %51 = vector.load %arg6[%c0_18, %c0_19] : memref<32x32xbf16, #tpu.memory_space<vmem>>, vector<32x32xbf16>
    %cst_20 = arith.constant dense<0.000000e+00> : vector<2x32xf32>
    %52 = tpu.matmul %50, %51, %cst_20 {dimension_numbers = #tpu.dot_dimension_numbers<[1], [0], [0], [1], [0, 0, 1, 1], [], []>} : vector<2x32xbf16>, vector<32x32xbf16>, vector<2x32xf32> -> vector<2x32xf32>
    %53 = arith.addf %8, %52 : vector<2x32xf32>
    %54 = arith.mulf %53, %53 : vector<2x32xf32>
    %cst_21 = arith.constant dense<0.000000e+00> : vector<2xf32>
    %55 = vector.multi_reduction <add>, %54, %cst_21 [1] : vector<2x32xf32> to vector<2xf32>
    %56 = vector.shape_cast %55 : vector<2xf32> to vector<2x1xf32>
    %cst_22 = arith.constant 9.99999996E-13 : f32
    %57 = vector.broadcast %cst_22 : f32 to vector<2x1xf32>
    %58 = arith.addf %56, %57 : vector<2x1xf32>
    %59 = math.rsqrt %58 : vector<2x1xf32>
    %60 = vector.broadcast %59 : vector<2x1xf32> to vector<2x32xf32>
    %61 = arith.mulf %53, %60 : vector<2x32xf32>
    %c0_23 = arith.constant 0 : index
    %c0_24 = arith.constant 0 : index
    %62 = vector.load %arg9[%c0_23, %c0_24] : memref<2x32xf32, #tpu.memory_space<vmem>>, vector<2x32xf32>
    tpu.vector_store %arg9[%c0_23, %c0_24], %61 {strides = array<i32>} : memref<2x32xf32, #tpu.memory_space<vmem>>, vector<2x32xf32>,
    %c0_25 = arith.constant 0 : index
    %c0_26 = arith.constant 0 : index
    %63 = vector.load %arg7[%c0_25, %c0_26] : memref<32x32xbf16, #tpu.memory_space<vmem>>, vector<32x32xbf16>
    %cst_27 = arith.constant dense<0.000000e+00> : vector<2x32xf32>
    %64 = tpu.matmul %50, %63, %cst_27 {dimension_numbers = #tpu.dot_dimension_numbers<[1], [0], [0], [1], [0, 0, 1, 1], [], []>} : vector<2x32xbf16>, vector<32x32xbf16>, vector<2x32xf32> -> vector<2x32xf32>
    %c0_28 = arith.constant 0 : index
    %c0_29 = arith.constant 0 : index
    %65 = vector.load %arg8[%c0_28, %c0_29] : memref<1x32xf32, #tpu.memory_space<vmem>>, vector<1x32xf32>
    %66 = vector.broadcast %65 : vector<1x32xf32> to vector<2x32xf32>
    %67 = arith.addf %64, %66 : vector<2x32xf32>
    %cst_30 = arith.constant 5.000000e-01 : f32
    %68 = vector.broadcast %cst_30 : f32 to vector<2x32xf32>
    %69 = arith.mulf %68, %67 : vector<2x32xf32>
    %cst_31 = arith.constant -5.000000e+00 : f32
    %cst_32 = arith.constant 5.000000e+00 : f32
    %70 = vector.broadcast %cst_31 : f32 to vector<2x32xf32>
    %71 = arith.maximumf %70, %69 : vector<2x32xf32>
    %72 = vector.broadcast %cst_32 : f32 to vector<2x32xf32>
    %73 = arith.minimumf %72, %71 : vector<2x32xf32>
    %74 = math.exp %73 : vector<2x32xf32>
    %c0_33 = arith.constant 0 : index
    %c0_34 = arith.constant 0 : index
    %75 = vector.load %arg10[%c0_33, %c0_34] : memref<2x32xf32, #tpu.memory_space<vmem>>, vector<2x32xf32>
    tpu.vector_store %arg10[%c0_33, %c0_34], %74 {strides = array<i32>} : memref<2x32xf32, #tpu.memory_space<vmem>>, vector<2x32xf32>,
    return
  }
  func.func @transform_0(%arg0: i32) -> (i32, i32) {
    %c0_i32 = arith.constant 0 : i32
    %c0_i32_0 = arith.constant 0 : i32
    return %arg0, %c0_i32 : i32, i32
  }
  func.func @transform_1(%arg0: i32) -> (i32, i32, i32) {
    %c0_i32 = arith.constant 0 : i32
    %c0_i32_0 = arith.constant 0 : i32
    %c0_i32_1 = arith.constant 0 : i32
    return %arg0, %c0_i32, %c0_i32_0 : i32, i32, i32
  }
  func.func @transform_2(%arg0: i32) -> (i32, i32) {
    %c0_i32 = arith.constant 0 : i32
    %c0_i32_0 = arith.constant 0 : i32
    %c0_i32_1 = arith.constant 0 : i32
    return %c0_i32, %c0_i32_0 : i32, i32
  }
  func.func @transform_3(%arg0: i32) -> (i32, i32) {
    %c0_i32 = arith.constant 0 : i32
    %c0_i32_0 = arith.constant 0 : i32
    %c0_i32_1 = arith.constant 0 : i32
    return %c0_i32, %c0_i32_0 : i32, i32
  }
  func.func @transform_4(%arg0: i32) -> (i32, i32) {
    %c0_i32 = arith.constant 0 : i32
    %c0_i32_0 = arith.constant 0 : i32
    %c0_i32_1 = arith.constant 0 : i32
    return %c0_i32, %c0_i32_0 : i32, i32
  }
  func.func @transform_5(%arg0: i32) -> (i32, i32) {
    %c0_i32 = arith.constant 0 : i32
    %c0_i32_0 = arith.constant 0 : i32
    %c0_i32_1 = arith.constant 0 : i32
    return %c0_i32, %c0_i32_0 : i32, i32
  }
  func.func @transform_6(%arg0: i32) -> (i32, i32) {
    %c0_i32 = arith.constant 0 : i32
    %c0_i32_0 = arith.constant 0 : i32
    %c0_i32_1 = arith.constant 0 : i32
    return %c0_i32, %c0_i32_0 : i32, i32
  }
  func.func @transform_7(%arg0: i32) -> (i32, i32) {
    %c0_i32 = arith.constant 0 : i32
    %c0_i32_0 = arith.constant 0 : i32
    %c0_i32_1 = arith.constant 0 : i32
    return %c0_i32, %c0_i32_0 : i32, i32
  }
  func.func @transform_8(%arg0: i32) -> (i32, i32) {
    %c0_i32 = arith.constant 0 : i32
    %c0_i32_0 = arith.constant 0 : i32
    return %arg0, %c0_i32 : i32, i32
  }
  func.func @transform_9(%arg0: i32) -> (i32, i32) {
    %c0_i32 = arith.constant 0 : i32
    %c0_i32_0 = arith.constant 0 : i32
    return %arg0, %c0_i32 : i32, i32
  }
}

module attributes {stable_mosaic.version = 11 : i64} {
  func.func @_prob_branch_kernel(%arg0: i32, %arg1: memref<2x32xf32, #tpu.memory_space<vmem>>, %arg2: memref<2x4x32xf32, #tpu.memory_space<vmem>>, %arg3: memref<32x16xbf16, #tpu.memory_space<vmem>>, %arg4: memref<1x16xf32, #tpu.memory_space<vmem>>, %arg5: memref<1x16xf32, #tpu.memory_space<vmem>>, %arg6: memref<32x32xbf16, #tpu.memory_space<vmem>>, %arg7: memref<32x32xbf16, #tpu.memory_space<vmem>>, %arg8: memref<1x32xf32, #tpu.memory_space<vmem>>, %arg9: memref<2x32xf32, #tpu.memory_space<vmem>>, %arg10: memref<2x32xf32, #tpu.memory_space<vmem>>) attributes {dimension_semantics = [#tpu.dimension_semantics<parallel>], iteration_bounds = array<i64: 1>, scalar_prefetch = 0 : i64, scratch_operands = 0 : i64, tpu.core_type = #tpu.core_type<tc>, window_params = [{transform_indices = @transform_0, window_bounds = array<i64: 2, 32>}, {transform_indices = @transform_1, window_bounds = array<i64: 2, 4, 32>}, {pipeline_mode = #tpu.pipeline_mode<synchronous>, transform_indices = @transform_2, window_bounds = array<i64: 32, 16>}, {pipeline_mode = #tpu.pipeline_mode<synchronous>, transform_indices = @transform_3, window_bounds = array<i64: 1, 16>}, {pipeline_mode = #tpu.pipeline_mode<synchronous>, transform_indices = @transform_4, window_bounds = array<i64: 1, 16>}, {pipeline_mode = #tpu.pipeline_mode<synchronous>, transform_indices = @transform_5, window_bounds = array<i64: 32, 32>}, {pipeline_mode = #tpu.pipeline_mode<synchronous>, transform_indices = @transform_6, window_bounds = array<i64: 32, 32>}, {pipeline_mode = #tpu.pipeline_mode<synchronous>, transform_indices = @transform_7, window_bounds = array<i64: 1, 32>}, {transform_indices = @transform_8, window_bounds = array<i64: 2, 32>}, {transform_indices = @transform_9, window_bounds = array<i64: 2, 32>}]} {
    %c0 = arith.constant 0 : index
    %c0_0 = arith.constant 0 : index
    %0 = vector.load %arg1[%c0, %c0_0] : memref<2x32xf32, #tpu.memory_space<vmem>>, vector<2x32xf32>
    %1 = arith.mulf %0, %0 : vector<2x32xf32>
    %cst = arith.constant dense<0.000000e+00> : vector<2xf32>
    %2 = vector.multi_reduction <add>, %1, %cst [1] : vector<2x32xf32> to vector<2xf32>
    %3 = vector.shape_cast %2 : vector<2xf32> to vector<2x1xf32>
    %cst_1 = arith.constant 9.99999996E-13 : f32
    %4 = vector.broadcast %cst_1 : f32 to vector<2x1xf32>
    %5 = arith.addf %3, %4 : vector<2x1xf32>
    %6 = math.rsqrt %5 : vector<2x1xf32>
    %7 = vector.broadcast %6 : vector<2x1xf32> to vector<2x32xf32>
    %8 = arith.mulf %0, %7 : vector<2x32xf32>
    %c0_2 = arith.constant 0 : index
    %c0_3 = arith.constant 0 : index
    %c0_4 = arith.constant 0 : index
    %9 = vector.load %arg2[%c0_2, %c0_3, %c0_4] : memref<2x4x32xf32, #tpu.memory_space<vmem>>, vector<2x4x32xf32>
    %10 = arith.mulf %9, %9 : vector<2x4x32xf32>
    %cst_5 = arith.constant dense<0.000000e+00> : vector<2x4xf32>
    %11 = vector.multi_reduction <add>, %10, %cst_5 [2] : vector<2x4x32xf32> to vector<2x4xf32>
    %12 = vector.shape_cast %11 : vector<2x4xf32> to vector<2x4x1xf32>
    %cst_6 = arith.constant 9.99999996E-13 : f32
    %13 = vector.broadcast %cst_6 : f32 to vector<2x4x1xf32>
    %14 = arith.addf %12, %13 : vector<2x4x1xf32>
    %15 = math.rsqrt %14 : vector<2x4x1xf32>
    %16 = vector.broadcast %15 : vector<2x4x1xf32> to vector<2x4x32xf32>
    %17 = arith.mulf %9, %16 : vector<2x4x32xf32>
    %18 = vector.shape_cast %8 : vector<2x32xf32> to vector<2x1x32xf32>
    %19 = vector.broadcast %18 : vector<2x1x32xf32> to vector<2x4x32xf32>
    %20 = arith.addf %17, %19 : vector<2x4x32xf32>
    %21 = vector.shape_cast %20 : vector<2x4x32xf32> to vector<8x32xf32>
    %22 = arith.truncf %21 : vector<8x32xf32> to vector<8x32xbf16>
    %c0_7 = arith.constant 0 : index
    %c0_8 = arith.constant 0 : index
    %23 = vector.load %arg3[%c0_7, %c0_8] : memref<32x16xbf16, #tpu.memory_space<vmem>>, vector<32x16xbf16>
    %cst_9 = arith.constant dense<0.000000e+00> : vector<8x16xf32>
    %24 = tpu.matmul %22, %23, %cst_9 {dimension_numbers = #tpu.dot_dimension_numbers<[1], [0], [0], [1], [0, 0, 1, 1], [], []>} : vector<8x32xbf16>, vector<32x16xbf16>, vector<8x16xf32> -> vector<8x16xf32>
    %c0_10 = arith.constant 0 : index
    %c0_11 = arith.constant 0 : index
    %25 = vector.load %arg4[%c0_10, %c0_11] : memref<1x16xf32, #tpu.memory_space<vmem>>, vector<1x16xf32>
    %26 = vector.broadcast %25 : vector<1x16xf32> to vector<8x16xf32>
    %27 = arith.addf %24, %26 : vector<8x16xf32>
    %28 = math.tanh %27 : vector<8x16xf32>
    %29 = vector.shape_cast %28 : vector<8x16xf32> to vector<2x4x16xf32>
    %c0_12 = arith.constant 0 : index
    %c0_13 = arith.constant 0 : index
    %30 = vector.load %arg5[%c0_12, %c0_13] : memref<1x16xf32, #tpu.memory_space<vmem>>, vector<1x16xf32>
    %31 = vector.shape_cast %30 : vector<1x16xf32> to vector<1x1x16xf32>
    %32 = vector.broadcast %31 : vector<1x1x16xf32> to vector<2x4x16xf32>
    %33 = arith.mulf %29, %32 : vector<2x4x16xf32>
    %cst_14 = arith.constant dense<0.000000e+00> : vector<2x4xf32>
    %34 = vector.multi_reduction <add>, %33, %cst_14 [2] : vector<2x4x16xf32> to vector<2x4xf32>
    %cst_15 = arith.constant dense<0xFF800000> : vector<2xf32>
    %35 = vector.multi_reduction <maximumf>, %34, %cst_15 [1] : vector<2x4xf32> to vector<2xf32>
    %36 = vector.shape_cast %35 : vector<2xf32> to vector<2x1xf32>
    %37 = vector.broadcast %36 : vector<2x1xf32> to vector<2x4xf32>
    %38 = arith.subf %34, %37 : vector<2x4xf32>
    %39 = math.exp %38 : vector<2x4xf32>
    %cst_16 = arith.constant dense<0.000000e+00> : vector<2xf32>
    %40 = vector.multi_reduction <add>, %39, %cst_16 [1] : vector<2x4xf32> to vector<2xf32>
    %41 = vector.shape_cast %40 : vector<2xf32> to vector<2x1xf32>
    %42 = tpu.reciprocal %41 {approx = true} : vector<2x1xf32> -> vector<2x1xf32>
    %43 = vector.broadcast %42 : vector<2x1xf32> to vector<2x4xf32>
    %44 = arith.mulf %39, %43 : vector<2x4xf32>
    %45 = vector.shape_cast %44 : vector<2x4xf32> to vector<2x1x4xf32>
    %46 = arith.truncf %45 : vector<2x1x4xf32> to vector<2x1x4xbf16>
    %47 = arith.truncf %17 : vector<2x4x32xf32> to vector<2x4x32xbf16>
    "tpu.trace_start"() <{level = 10 : i32, message = "bql,bld->bqd"}> : () -> ()
    %cst_17 = arith.constant dense<0.000000e+00> : vector<2x1x32xf32>
    %48 = tpu.matmul %46, %47, %cst_17 {dimension_numbers = #tpu.dot_dimension_numbers<[2], [1], [1], [2], [0, 0, 0, 1, 1, 2], [0], [0]>} : vector<2x1x4xbf16>, vector<2x4x32xbf16>, vector<2x1x32xf32> -> vector<2x1x32xf32>
    "tpu.trace_stop"() : () -> ()
    %49 = vector.shape_cast %48 : vector<2x1x32xf32> to vector<2x32xf32>
    %50 = arith.truncf %49 : vector<2x32xf32> to vector<2x32xbf16>
    %c0_18 = arith.constant 0 : index
    %c0_19 = arith.constant 0 : index
    %51 = vector.load %arg6[%c0_18, %c0_19] : memref<32x32xbf16, #tpu.memory_space<vmem>>, vector<32x32xbf16>
    %cst_20 = arith.constant dense<0.000000e+00> : vector<2x32xf32>
    %52 = tpu.matmul %50, %51, %cst_20 {dimension_numbers = #tpu.dot_dimension_numbers<[1], [0], [0], [1], [0, 0, 1, 1], [], []>} : vector<2x32xbf16>, vector<32x32xbf16>, vector<2x32xf32> -> vector<2x32xf32>
    %53 = arith.addf %8, %52 : vector<2x32xf32>
    %54 = arith.mulf %53, %53 : vector<2x32xf32>
    %cst_21 = arith.constant dense<0.000000e+00> : vector<2xf32>
    %55 = vector.multi_reduction <add>, %54, %cst_21 [1] : vector<2x32xf32> to vector<2xf32>
    %56 = vector.shape_cast %55 : vector<2xf32> to vector<2x1xf32>
    %cst_22 = arith.constant 9.99999996E-13 : f32
    %57 = vector.broadcast %cst_22 : f32 to vector<2x1xf32>
    %58 = arith.addf %56, %57 : vector<2x1xf32>
    %59 = math.rsqrt %58 : vector<2x1xf32>
    %60 = vector.broadcast %59 : vector<2x1xf32> to vector<2x32xf32>
    %61 = arith.mulf %53, %60 : vector<2x32xf32>
    %c0_23 = arith.constant 0 : index
    %c0_24 = arith.constant 0 : index
    %62 = vector.load %arg9[%c0_23, %c0_24] : memref<2x32xf32, #tpu.memory_space<vmem>>, vector<2x32xf32>
    tpu.vector_store %arg9[%c0_23, %c0_24], %61 {strides = array<i32>} : memref<2x32xf32, #tpu.memory_space<vmem>>, vector<2x32xf32>,
    %c0_25 = arith.constant 0 : index
    %c0_26 = arith.constant 0 : index
    %63 = vector.load %arg7[%c0_25, %c0_26] : memref<32x32xbf16, #tpu.memory_space<vmem>>, vector<32x32xbf16>
    %cst_27 = arith.constant dense<0.000000e+00> : vector<2x32xf32>
    %64 = tpu.matmul %50, %63, %cst_27 {dimension_numbers = #tpu.dot_dimension_numbers<[1], [0], [0], [1], [0, 0, 1, 1], [], []>} : vector<2x32xbf16>, vector<32x32xbf16>, vector<2x32xf32> -> vector<2x32xf32>
    %c0_28 = arith.constant 0 : index
    %c0_29 = arith.constant 0 : index
    %65 = vector.load %arg8[%c0_28, %c0_29] : memref<1x32xf32, #tpu.memory_space<vmem>>, vector<1x32xf32>
    %66 = vector.broadcast %65 : vector<1x32xf32> to vector<2x32xf32>
    %67 = arith.addf %64, %66 : vector<2x32xf32>
    %cst_30 = arith.constant 5.000000e-01 : f32
    %68 = vector.broadcast %cst_30 : f32 to vector<2x32xf32>
    %69 = arith.mulf %68, %67 : vector<2x32xf32>
    %cst_31 = arith.constant -5.000000e+00 : f32
    %cst_32 = arith.constant 5.000000e+00 : f32
    %70 = vector.broadcast %cst_31 : f32 to vector<2x32xf32>
    %71 = arith.maximumf %70, %69 : vector<2x32xf32>
    %72 = vector.broadcast %cst_32 : f32 to vector<2x32xf32>
    %73 = arith.minimumf %72, %71 : vector<2x32xf32>
    %74 = math.exp %73 : vector<2x32xf32>
    %c0_33 = arith.constant 0 : index
    %c0_34 = arith.constant 0 : index
    %75 = vector.load %arg10[%c0_33, %c0_34] : memref<2x32xf32, #tpu.memory_space<vmem>>, vector<2x32xf32>
    tpu.vector_store %arg10[%c0_33, %c0_34], %74 {strides = array<i32>} : memref<2x32xf32, #tpu.memory_space<vmem>>, vector<2x32xf32>,
    return
  }
  func.func @transform_0(%arg0: i32) -> (i32, i32) {
    %c0_i32 = arith.constant 0 : i32
    %c0_i32_0 = arith.constant 0 : i32
    return %arg0, %c0_i32 : i32, i32
  }
  func.func @transform_1(%arg0: i32) -> (i32, i32, i32) {
    %c0_i32 = arith.constant 0 : i32
    %c0_i32_0 = arith.constant 0 : i32
    %c0_i32_1 = arith.constant 0 : i32
    return %arg0, %c0_i32, %c0_i32_0 : i32, i32, i32
  }
  func.func @transform_2(%arg0: i32) -> (i32, i32) {
    %c0_i32 = arith.constant 0 : i32
    %c0_i32_0 = arith.constant 0 : i32
    %c0_i32_1 = arith.constant 0 : i32
    return %c0_i32, %c0_i32_0 : i32, i32
  }
  func.func @transform_3(%arg0: i32) -> (i32, i32) {
    %c0_i32 = arith.constant 0 : i32
    %c0_i32_0 = arith.constant 0 : i32
    %c0_i32_1 = arith.constant 0 : i32
    return %c0_i32, %c0_i32_0 : i32, i32
  }
  func.func @transform_4(%arg0: i32) -> (i32, i32) {
    %c0_i32 = arith.constant 0 : i32
    %c0_i32_0 = arith.constant 0 : i32
    %c0_i32_1 = arith.constant 0 : i32
    return %c0_i32, %c0_i32_0 : i32, i32
  }
  func.func @transform_5(%arg0: i32) -> (i32, i32) {
    %c0_i32 = arith.constant 0 : i32
    %c0_i32_0 = arith.constant 0 : i32
    %c0_i32_1 = arith.constant 0 : i32
    return %c0_i32, %c0_i32_0 : i32, i32
  }
  func.func @transform_6(%arg0: i32) -> (i32, i32) {
    %c0_i32 = arith.constant 0 : i32
    %c0_i32_0 = arith.constant 0 : i32
    %c0_i32_1 = arith.constant 0 : i32
    return %c0_i32, %c0_i32_0 : i32, i32
  }
  func.func @transform_7(%arg0: i32) -> (i32, i32) {
    %c0_i32 = arith.constant 0 : i32
    %c0_i32_0 = arith.constant 0 : i32
    %c0_i32_1 = arith.constant 0 : i32
    return %c0_i32, %c0_i32_0 : i32, i32
  }
  func.func @transform_8(%arg0: i32) -> (i32, i32) {
    %c0_i32 = arith.constant 0 : i32
    %c0_i32_0 = arith.constant 0 : i32
    return %arg0, %c0_i32 : i32, i32
  }
  func.func @transform_9(%arg0: i32) -> (i32, i32) {
    %c0_i32 = arith.constant 0 : i32
    %c0_i32_0 = arith.constant 0 : i32
    return %arg0, %c0_i32 : i32, i32
  }
}

module attributes {stable_mosaic.version = 11 : i64} {
  func.func @_dist_inter_kl_kernel(%arg0: memref<2x32xf32, #tpu.memory_space<vmem>>, %arg1: memref<2x32xf32, #tpu.memory_space<vmem>>, %arg2: memref<2x3x32xf32, #tpu.memory_space<vmem>>, %arg3: memref<2x32xf32, #tpu.memory_space<vmem>>, %arg4: memref<2x32xf32, #tpu.memory_space<vmem>>, %arg5: memref<2x3x32xf32, #tpu.memory_space<vmem>>, %arg6: memref<2x2xf32, #tpu.memory_space<vmem>>, %arg7: memref<1x1xf32, #tpu.memory_space<vmem>>, %arg8: memref<1x1xf32, #tpu.memory_space<vmem>>) attributes {dimension_semantics = [], scalar_prefetch = 0 : i64, scratch_operands = 0 : i64, tpu.core_type = #tpu.core_type<tc>} {
    %c0 = arith.constant 0 : index
    %c0_0 = arith.constant 0 : index
    %0 = vector.load %arg0[%c0, %c0_0] : memref<2x32xf32, #tpu.memory_space<vmem>>, vector<2x32xf32>
    %c0_1 = arith.constant 0 : index
    %c0_2 = arith.constant 0 : index
    %1 = vector.load %arg1[%c0_1, %c0_2] : memref<2x32xf32, #tpu.memory_space<vmem>>, vector<2x32xf32>
    %c0_3 = arith.constant 0 : index
    %c0_4 = arith.constant 0 : index
    %2 = vector.load %arg3[%c0_3, %c0_4] : memref<2x32xf32, #tpu.memory_space<vmem>>, vector<2x32xf32>
    %c0_5 = arith.constant 0 : index
    %c0_6 = arith.constant 0 : index
    %3 = vector.load %arg4[%c0_5, %c0_6] : memref<2x32xf32, #tpu.memory_space<vmem>>, vector<2x32xf32>
    %4 = vector.shape_cast %0 : vector<2x32xf32> to vector<2x1x32xf32>
    %5 = vector.shape_cast %1 : vector<2x32xf32> to vector<2x1x32xf32>
    %c0_7 = arith.constant 0 : index
    %c0_8 = arith.constant 0 : index
    %c0_9 = arith.constant 0 : index
    %6 = vector.load %arg2[%c0_7, %c0_8, %c0_9] : memref<2x3x32xf32, #tpu.memory_space<vmem>>, vector<2x3x32xf32>
    %7 = vector.broadcast %5 : vector<2x1x32xf32> to vector<2x3x32xf32>
    %8 = arith.mulf %7, %6 : vector<2x3x32xf32>
    %9 = vector.broadcast %4 : vector<2x1x32xf32> to vector<2x3x32xf32>
    %10 = arith.addf %9, %8 : vector<2x3x32xf32>
    %11 = vector.shape_cast %10 : vector<2x3x32xf32> to vector<6x32xf32>
    %12 = vector.shape_cast %2 : vector<2x32xf32> to vector<2x1x32xf32>
    %13 = vector.shape_cast %3 : vector<2x32xf32> to vector<2x1x32xf32>
    %c0_10 = arith.constant 0 : index
    %c0_11 = arith.constant 0 : index
    %c0_12 = arith.constant 0 : index
    %14 = vector.load %arg5[%c0_10, %c0_11, %c0_12] : memref<2x3x32xf32, #tpu.memory_space<vmem>>, vector<2x3x32xf32>
    %15 = vector.broadcast %13 : vector<2x1x32xf32> to vector<2x3x32xf32>
    %16 = arith.mulf %15, %14 : vector<2x3x32xf32>
    %17 = vector.broadcast %12 : vector<2x1x32xf32> to vector<2x3x32xf32>
    %18 = arith.addf %17, %16 : vector<2x3x32xf32>
    %19 = vector.shape_cast %18 : vector<2x3x32xf32> to vector<6x32xf32>
    %20 = arith.truncf %11 : vector<6x32xf32> to vector<6x32xbf16>
    %21 = arith.truncf %19 : vector<6x32xf32> to vector<6x32xbf16>
    %cst = arith.constant dense<0.000000e+00> : vector<6x6xf32>
    %22 = tpu.matmul %20, %21, %cst {dimension_numbers = #tpu.dot_dimension_numbers<[1], [1], [0], [0], [0, 0, 1, 0], [], []>} : vector<6x32xbf16>, vector<6x32xbf16>, vector<6x6xf32> -> vector<6x6xf32>
    %23 = arith.mulf %11, %11 : vector<6x32xf32>
    %cst_13 = arith.constant dense<0.000000e+00> : vector<6xf32>
    %24 = vector.multi_reduction <add>, %23, %cst_13 [1] : vector<6x32xf32> to vector<6xf32>
    %25 = vector.shape_cast %24 : vector<6xf32> to vector<6x1xf32>
    %26 = arith.mulf %19, %19 : vector<6x32xf32>
    %cst_14 = arith.constant dense<0.000000e+00> : vector<6xf32>
    %27 = vector.multi_reduction <add>, %26, %cst_14 [1] : vector<6x32xf32> to vector<6xf32>
    %28 = vector.shape_cast %27 : vector<6xf32> to vector<6x1xf32>
    %29 = tpu.transpose %28, [1, 0] : vector<6x1xf32> -> vector<1x6xf32>
    %30 = vector.broadcast %25 : vector<6x1xf32> to vector<6x6xf32>
    %31 = vector.broadcast %29 : vector<1x6xf32> to vector<6x6xf32>
    %32 = arith.addf %30, %31 : vector<6x6xf32>
    %cst_15 = arith.constant 2.000000e+00 : f32
    %33 = vector.broadcast %cst_15 : f32 to vector<6x6xf32>
    %34 = arith.mulf %33, %22 : vector<6x6xf32>
    %35 = arith.subf %32, %34 : vector<6x6xf32>
    %cst_16 = arith.constant 9.99999996E-13 : f32
    %36 = vector.broadcast %cst_16 : f32 to vector<6x6xf32>
    %37 = arith.maximumf %35, %36 : vector<6x6xf32>
    %38 = math.sqrt %37 : vector<6x6xf32>
    %39 = tpu.iota {dimensions = array<i32: 0>} : vector<6x2xi32>
    %40 = tpu.iota {dimensions = array<i32: 1>} : vector<6x2xi32>
    %c3_i32 = arith.constant 3 : i32
    %41 = vector.broadcast %c3_i32 : i32 to vector<6x2xi32>
    %42 = arith.muli %40, %41 : vector<6x2xi32>
    %43 = arith.cmpi sge, %39, %42 : vector<6x2xi32>
    %c3_i32_17 = arith.constant 3 : i32
    %44 = vector.broadcast %c3_i32_17 : i32 to vector<6x2xi32>
    %45 = arith.muli %40, %44 : vector<6x2xi32>
    %c3_i32_18 = arith.constant 3 : i32
    %46 = vector.broadcast %c3_i32_18 : i32 to vector<6x2xi32>
    %47 = arith.addi %45, %46 : vector<6x2xi32>
    %48 = arith.cmpi slt, %39, %47 : vector<6x2xi32>
    %49 = arith.andi %43, %48 : vector<6x2xi1>
    %cst_19 = arith.constant 1.000000e+00 : f32
    %cst_20 = arith.constant 0.000000e+00 : f32
    %50 = vector.broadcast %cst_19 : f32 to vector<6x2xf32>
    %51 = vector.broadcast %cst_20 : f32 to vector<6x2xf32>
    %52 = arith.select %49, %50, %51 : vector<6x2xi1>, vector<6x2xf32>
    %53 = tpu.iota {dimensions = array<i32: 0>} : vector<6x2xi32>
    %54 = tpu.iota {dimensions = array<i32: 1>} : vector<6x2xi32>
    %c3_i32_21 = arith.constant 3 : i32
    %55 = vector.broadcast %c3_i32_21 : i32 to vector<6x2xi32>
    %56 = arith.muli %54, %55 : vector<6x2xi32>
    %57 = arith.cmpi sge, %53, %56 : vector<6x2xi32>
    %c3_i32_22 = arith.constant 3 : i32
    %58 = vector.broadcast %c3_i32_22 : i32 to vector<6x2xi32>
    %59 = arith.muli %54, %58 : vector<6x2xi32>
    %c3_i32_23 = arith.constant 3 : i32
    %60 = vector.broadcast %c3_i32_23 : i32 to vector<6x2xi32>
    %61 = arith.addi %59, %60 : vector<6x2xi32>
    %62 = arith.cmpi slt, %53, %61 : vector<6x2xi32>
    %63 = arith.andi %57, %62 : vector<6x2xi1>
    %cst_24 = arith.constant 1.000000e+00 : f32
    %cst_25 = arith.constant 0.000000e+00 : f32
    %64 = vector.broadcast %cst_24 : f32 to vector<6x2xf32>
    %65 = vector.broadcast %cst_25 : f32 to vector<6x2xf32>
    %66 = arith.select %63, %64, %65 : vector<6x2xi1>, vector<6x2xf32>
    %cst_26 = arith.constant dense<0.000000e+00> : vector<2x6xf32>
    %67 = tpu.matmul %52, %38, %cst_26 {dimension_numbers = #tpu.dot_dimension_numbers<[0], [0], [1], [1], [0, 1, 1, 1], [], []>} : vector<6x2xf32>, vector<6x6xf32>, vector<2x6xf32> -> vector<2x6xf32>
    %cst_27 = arith.constant dense<0.000000e+00> : vector<2x2xf32>
    %68 = tpu.matmul %67, %66, %cst_27 {dimension_numbers = #tpu.dot_dimension_numbers<[1], [0], [0], [1], [0, 0, 1, 1], [], []>} : vector<2x6xf32>, vector<6x2xf32>, vector<2x2xf32> -> vector<2x2xf32>
    %cst_28 = arith.constant 0.111111112 : f32
    %69 = vector.broadcast %cst_28 : f32 to vector<2x2xf32>
    %70 = arith.mulf %68, %69 : vector<2x2xf32>
    %c0_29 = arith.constant 0 : index
    %c0_30 = arith.constant 0 : index
    %71 = vector.load %arg6[%c0_29, %c0_30] : memref<2x2xf32, #tpu.memory_space<vmem>>, vector<2x2xf32>
    tpu.vector_store %arg6[%c0_29, %c0_30], %70 {strides = array<i32>} : memref<2x2xf32, #tpu.memory_space<vmem>>, vector<2x2xf32>,
    %cst_31 = arith.constant 0.000000e+00 : f32
    %72 = vector.broadcast %cst_31 : f32 to vector<2x2xf32>
    %73 = arith.subf %72, %70 : vector<2x2xf32>
    %74 = tpu.iota {dimensions = array<i32: 0>} : vector<2x2xi32>
    %75 = tpu.iota {dimensions = array<i32: 1>} : vector<2x2xi32>
    %76 = arith.cmpi eq, %74, %75 : vector<2x2xi32>
    %cst_32 = arith.constant dense<0xFF800000> : vector<2xf32>
    %77 = vector.multi_reduction <maximumf>, %73, %cst_32 [1] : vector<2x2xf32> to vector<2xf32>
    %78 = vector.shape_cast %77 : vector<2xf32> to vector<2x1xf32>
    %79 = vector.broadcast %78 : vector<2x1xf32> to vector<2x2xf32>
    %80 = arith.subf %73, %79 : vector<2x2xf32>
    %81 = math.exp %80 : vector<2x2xf32>
    %cst_33 = arith.constant dense<0.000000e+00> : vector<2xf32>
    %82 = vector.multi_reduction <add>, %81, %cst_33 [1] : vector<2x2xf32> to vector<2xf32>
    %83 = vector.shape_cast %82 : vector<2xf32> to vector<2x1xf32>
    %84 = math.log %83 : vector<2x1xf32>
    %85 = arith.addf %78, %84 : vector<2x1xf32>
    %86 = vector.broadcast %85 : vector<2x1xf32> to vector<2x2xf32>
    %87 = arith.subf %73, %86 : vector<2x2xf32>
    %cst_34 = arith.constant 0.000000e+00 : f32
    %88 = vector.broadcast %cst_34 : f32 to vector<2x2xf32>
    %89 = arith.select %76, %87, %88 : vector<2x2xi1>, vector<2x2xf32>
    %cst_35 = arith.constant dense<0.000000e+00> : vector<2xf32>
    %90 = vector.multi_reduction <add>, %89, %cst_35 [1] : vector<2x2xf32> to vector<2xf32>
    %91 = vector.shape_cast %90 : vector<2xf32> to vector<2x1xf32>
    %cst_36 = arith.constant dense<0.000000e+00> : vector<1xf32>
    %92 = vector.multi_reduction <add>, %91, %cst_36 [0] : vector<2x1xf32> to vector<1xf32>
    %93 = vector.shape_cast %92 : vector<1xf32> to vector<1x1xf32>
    %cst_37 = arith.constant 2.000000e+00 : f32
    %94 = vector.broadcast %cst_37 : f32 to vector<1x1xf32>
    %95 = arith.divf %93, %94 : vector<1x1xf32>
    %cst_38 = arith.constant 0.000000e+00 : f32
    %96 = vector.broadcast %cst_38 : f32 to vector<1x1xf32>
    %97 = arith.subf %96, %95 : vector<1x1xf32>
    %cst_39 = arith.constant dense<0xFF800000> : vector<2xf32>
    %98 = vector.multi_reduction <maximumf>, %73, %cst_39 [0] : vector<2x2xf32> to vector<2xf32>
    %99 = vector.shape_cast %98 : vector<2xf32> to vector<1x2xf32>
    %100 = vector.broadcast %99 : vector<1x2xf32> to vector<2x2xf32>
    %101 = arith.subf %73, %100 : vector<2x2xf32>
    %102 = math.exp %101 : vector<2x2xf32>
    %cst_40 = arith.constant dense<0.000000e+00> : vector<2xf32>
    %103 = vector.multi_reduction <add>, %102, %cst_40 [0] : vector<2x2xf32> to vector<2xf32>
    %104 = vector.shape_cast %103 : vector<2xf32> to vector<1x2xf32>
    %105 = math.log %104 : vector<1x2xf32>
    %106 = arith.addf %99, %105 : vector<1x2xf32>
    %107 = vector.broadcast %106 : vector<1x2xf32> to vector<2x2xf32>
    %108 = arith.subf %73, %107 : vector<2x2xf32>
    %cst_41 = arith.constant 0.000000e+00 : f32
    %109 = vector.broadcast %cst_41 : f32 to vector<2x2xf32>
    %110 = arith.select %76, %108, %109 : vector<2x2xi1>, vector<2x2xf32>
    %cst_42 = arith.constant dense<0.000000e+00> : vector<2xf32>
    %111 = vector.multi_reduction <add>, %110, %cst_42 [0] : vector<2x2xf32> to vector<2xf32>
    %112 = vector.shape_cast %111 : vector<2xf32> to vector<1x2xf32>
    %cst_43 = arith.constant dense<0.000000e+00> : vector<1xf32>
    %113 = vector.multi_reduction <add>, %112, %cst_43 [1] : vector<1x2xf32> to vector<1xf32>
    %114 = vector.shape_cast %113 : vector<1xf32> to vector<1x1xf32>
    %cst_44 = arith.constant 2.000000e+00 : f32
    %115 = vector.broadcast %cst_44 : f32 to vector<1x1xf32>
    %116 = arith.divf %114, %115 : vector<1x1xf32>
    %cst_45 = arith.constant 0.000000e+00 : f32
    %117 = vector.broadcast %cst_45 : f32 to vector<1x1xf32>
    %118 = arith.subf %117, %116 : vector<1x1xf32>
    %119 = arith.addf %97, %118 : vector<1x1xf32>
    %cst_46 = arith.constant 5.000000e-01 : f32
    %120 = vector.broadcast %cst_46 : f32 to vector<1x1xf32>
    %121 = arith.mulf %120, %119 : vector<1x1xf32>
    %c0_47 = arith.constant 0 : index
    %c0_48 = arith.constant 0 : index
    %122 = vector.load %arg7[%c0_47, %c0_48] : memref<1x1xf32, #tpu.memory_space<vmem>>, vector<1x1xf32>
    tpu.vector_store %arg7[%c0_47, %c0_48], %121 {strides = array<i32>} : memref<1x1xf32, #tpu.memory_space<vmem>>, vector<1x1xf32>,
    %123 = arith.mulf %3, %3 : vector<2x32xf32>
    %cst_49 = arith.constant 9.99999993E-9 : f32
    %124 = vector.broadcast %cst_49 : f32 to vector<2x32xf32>
    %125 = arith.addf %123, %124 : vector<2x32xf32>
    %126 = arith.mulf %1, %1 : vector<2x32xf32>
    %cst_50 = arith.constant 9.99999993E-9 : f32
    %127 = vector.broadcast %cst_50 : f32 to vector<2x32xf32>
    %128 = arith.addf %126, %127 : vector<2x32xf32>
    %129 = arith.subf %2, %0 : vector<2x32xf32>
    %130 = arith.divf %128, %125 : vector<2x32xf32>
    %131 = math.log %130 : vector<2x32xf32>
    %132 = arith.mulf %129, %129 : vector<2x32xf32>
    %133 = arith.addf %125, %132 : vector<2x32xf32>
    %134 = arith.divf %133, %128 : vector<2x32xf32>
    %135 = arith.addf %131, %134 : vector<2x32xf32>
    %cst_51 = arith.constant 1.000000e+00 : f32
    %136 = vector.broadcast %cst_51 : f32 to vector<2x32xf32>
    %137 = arith.subf %135, %136 : vector<2x32xf32>
    %cst_52 = arith.constant 5.000000e-01 : f32
    %138 = vector.broadcast %cst_52 : f32 to vector<2x32xf32>
    %139 = arith.mulf %138, %137 : vector<2x32xf32>
    %cst_53 = arith.constant dense<0.000000e+00> : vector<2xf32>
    %140 = vector.multi_reduction <add>, %139, %cst_53 [1] : vector<2x32xf32> to vector<2xf32>
    %141 = vector.shape_cast %140 : vector<2xf32> to vector<2x1xf32>
    %cst_54 = arith.constant dense<0.000000e+00> : vector<1xf32>
    %142 = vector.multi_reduction <add>, %141, %cst_54 [0] : vector<2x1xf32> to vector<1xf32>
    %143 = vector.shape_cast %142 : vector<1xf32> to vector<1x1xf32>
    %cst_55 = arith.constant 2.000000e+00 : f32
    %144 = vector.broadcast %cst_55 : f32 to vector<1x1xf32>
    %145 = arith.divf %143, %144 : vector<1x1xf32>
    %c0_56 = arith.constant 0 : index
    %c0_57 = arith.constant 0 : index
    %146 = vector.load %arg8[%c0_56, %c0_57] : memref<1x1xf32, #tpu.memory_space<vmem>>, vector<1x1xf32>
    tpu.vector_store %arg8[%c0_56, %c0_57], %145 {strides = array<i32>} : memref<1x1xf32, #tpu.memory_space<vmem>>, vector<1x1xf32>,
    return
  }
}

</mosaic_0001>

<llo_original>
// kernel: _lambda_.8
$region0: #{_lambda_.8}
  #allocation0 [shape = 'u32[]', space=smem, size = 0x4, offset = 0x4, fixed_abs, tag = 'smem constant byte address 0x4 - core index']
  #allocation1 [shape = 'u32[144,128]{1,0:T(1,128)}', space=vmem, size = 0x12000, scoped, tag = 'internal scratch']
  #allocation2 [shape = 'f32[8,32]{1,0:T(8,128)}', space=vmem, size = 0x1000, scoped, tag = 'scratch operand']
  %s0 = inlined_call_operand.vmem [shape: f32[8,128], index: 0, kind: input, shape index: {}]
  %s1 = inlined_call_operand.vmem [shape: bf16[128,32], index: 1, kind: input, shape index: {}]
  %s2 = inlined_call_operand.vmem [shape: f32[8,32], index: 2, kind: output, shape index: {}]
  %s3 = sld [smem:[#allocation0]]
  $region26: #{_lambda_.8} parent=0
    _
  %s5 = ssub.s32 1, %s3
  %s6 = scalar_select 0, %s5, %s3
  // Predicated region
  $region2: #{_lambda_.8} parent=0 // pred_check
    _
  $region3: #{_lambda_.8} parent=0 // pred_check_branch
    %8 = sbr.rel (0) target = $region5
  $region4: #{_lambda_.8} parent=0 // pred_region
    _
  $region5: #{_lambda_.8} parent=0 // pred_fallthru
    _
  // Predicated region
  $region6: #{_lambda_.8} parent=0 // pred_check
    _
  $region7: #{_lambda_.8} parent=0 // pred_check_branch
    %10 = sbr.rel (0) target = $region9
  $region8: #{_lambda_.8} parent=0 // pred_region
    _
  $region9: #{_lambda_.8} parent=0 // pred_fallthru
    _
  %p12 = scmp.eq.s32.totalorder 0, 0
  // Predicated region
  $region10: #{_lambda_.8} parent=0 // pred_check
    %p13 = pneg %p12
  $region11: #{_lambda_.8} parent=0 // pred_check_branch
    %15 = sbr.rel (%p13) target = $region13
  $region12: #{_lambda_.8} parent=0 // pred_region
    %vm16 = vcmask 261120
    %17 = vst.msk [vmem:[#allocation2] sm:$0xff] %vm16, 0.0
  $region13: #{_lambda_.8} parent=0 // pred_fallthru
    _
  %v18 = vld [vmem:[#allocation2] sm:$0xff]
  %v19 = vld [vmem:[%s0] sm:$0xff]
  %v20 = vpack.c.bf16 %v19, %v19
  %v21 = vld [vmem:[%s1] sm:$0xf]
  %v22 = vld [vmem:[%s1 + $0x4] sm:$0xf]
  %v23 = vld [vmem:[%s1 + $0x8] sm:$0xf]
  %v24 = vld [vmem:[%s1 + $0xc] sm:$0xf]
  %v25 = vld [vmem:[%s1 + $0x10] sm:$0xf]
  %v26 = vld [vmem:[%s1 + $0x14] sm:$0xf]
  %v27 = vld [vmem:[%s1 + $0x18] sm:$0xf]
  %v28 = vld [vmem:[%s1 + $0x1c] sm:$0xf]
  %v29 = vld [vmem:[%s1 + $0x20] sm:$0xf]
  %v30 = vld [vmem:[%s1 + $0x24] sm:$0xf]
  %v31 = vld [vmem:[%s1 + $0x28] sm:$0xf]
  %v32 = vld [vmem:[%s1 + $0x2c] sm:$0xf]
  %v33 = vld [vmem:[%s1 + $0x30] sm:$0xf]
  %v34 = vld [vmem:[%s1 + $0x34] sm:$0xf]
  %v35 = vld [vmem:[%s1 + $0x38] sm:$0xf]
  %v36 = vld [vmem:[%s1 + $0x3c] sm:$0xf]
  %v53 = vunpack.c.l.b16 %v21
  %v54 = vunpack.c.l.b16 %v22
  %v55 = vunpack.c.l.b16 %v23
  %v56 = vunpack.c.l.b16 %v24
  %v57 = vunpack.c.l.b16 %v25
  %v58 = vunpack.c.l.b16 %v26
  %v59 = vunpack.c.l.b16 %v27
  %v60 = vunpack.c.l.b16 %v28
  %v61 = vunpack.c.l.b16 %v29
  %v62 = vunpack.c.l.b16 %v30
  %v63 = vunpack.c.l.b16 %v31
  %v64 = vunpack.c.l.b16 %v32
  %v65 = vunpack.c.l.b16 %v33
  %v66 = vunpack.c.l.b16 %v34
  %v67 = vunpack.c.l.b16 %v35
  %v68 = vunpack.c.l.b16 %v36
  %v69 = vpack.c.b16 %v54, %v53
  %v70 = vpack.c.b16 %v56, %v55
  %v71 = vpack.c.b16 %v58, %v57
  %v72 = vpack.c.b16 %v60, %v59
  %v73 = vpack.c.b16 %v62, %v61
  %v74 = vpack.c.b16 %v64, %v63
  %v75 = vpack.c.b16 %v66, %v65
  %v76 = vpack.c.b16 %v68, %v67
  %85 = vmatprep.subr.bf16.mxu0 0
  %86 = vmatpush1.bf16.msra.mxu0 %v69
  %87 = vmatprep.subr.bf16.mxu0 0
  %88 = vmatpush1.bf16.msra.mxu0 %v70
  %89 = vmatprep.subr.bf16.mxu0 0
  %90 = vmatpush1.bf16.msra.mxu0 %v71
  %91 = vmatprep.subr.bf16.mxu0 0
  %92 = vmatpush1.bf16.msra.mxu0 %v72
  %93 = vmatprep.subr.bf16.mxu0 0
  %94 = vmatpush1.bf16.msra.mxu0 %v73
  %95 = vmatprep.subr.bf16.mxu0 0
  %96 = vmatpush1.bf16.msra.mxu0 %v74
  %97 = vmatprep.subr.bf16.mxu0 0
  %98 = vmatpush1.bf16.msra.mxu0 %v75
  %99 = vmatprep.subr.bf16.mxu0 0
  %100 = vmatpush1.bf16.msra.mxu0 %v76
  %101 = vmatprep.subr.bf16.mxu0 0
  %102 = vmatpush1.bf16.msra.mxu0 0
  %103 = vmatprep.subr.bf16.mxu0 0
  %104 = vmatpush1.bf16.msra.mxu0 0
  %105 = vmatprep.subr.bf16.mxu0 0
  %106 = vmatpush1.bf16.msra.mxu0 0
  %107 = vmatprep.subr.bf16.mxu0 0
  %108 = vmatpush1.bf16.msra.mxu0 0
  %109 = vmatprep.subr.bf16.mxu0 0
  %110 = vmatpush1.bf16.msra.mxu0 0
  %111 = vmatprep.subr.bf16.mxu0 0
  %112 = vmatpush1.bf16.msra.mxu0 0
  %113 = vmatprep.subr.bf16.mxu0 0
  %114 = vmatpush1.bf16.msra.mxu0 0
  %115 = vmatprep.subr.bf16.mxu0 0
  %116 = vmatpush1.bf16.msra.mxu0 0
  %117 = vmatprep.mubr.bf16.mxu0 0
  %118 = vmatmul.mubr.bf16.gmra.mrb[0].mxu0 %v20
  %v119 = vpop.f32.mrb[0].mxu0
  %v120 = vadd.f32 0.0, %v119
  %v121 = vpop.f32.mrb[0].mxu0
  %v122 = vpop.f32.mrb[0].mxu0
  %v123 = vpop.f32.mrb[0].mxu0
  %124 = vdwg.mxu0
  %v125 = vadd.f32 %v18, %v120
  %vm126 = vcmask 261120
  %127 = vst.msk [vmem:[#allocation2] sm:$0xff] %vm126, %v125
  // Predicated region
  $region14: #{_lambda_.8} parent=0 // pred_check
    %p128 = pneg %p12
  $region15: #{_lambda_.8} parent=0 // pred_check_branch
    %130 = sbr.rel (%p128) target = $region17
  $region16: #{_lambda_.8} parent=0 // pred_region
    %v131 = vld [vmem:[#allocation2] sm:$0xff]
    %132 = vst.msk [vmem:[%s2] sm:$0xff] %vm126, %v131
  $region17: #{_lambda_.8} parent=0 // pred_fallthru
    _
  // Predicated region
  $region18: #{_lambda_.8} parent=0 // pred_check
    _
  $region19: #{_lambda_.8} parent=0 // pred_check_branch
    %134 = sbr.rel (0) target = $region21
  $region20: #{_lambda_.8} parent=0 // pred_region
    _
  $region21: #{_lambda_.8} parent=0 // pred_fallthru
    _
  // Predicated region
  $region22: #{_lambda_.8} parent=0 // pred_check
    _
  $region23: #{_lambda_.8} parent=0 // pred_check_branch
    %136 = sbr.rel (0) target = $region25
  $region24: #{_lambda_.8} parent=0 // pred_region
    _
  $region25: #{_lambda_.8} parent=0 // pred_fallthru
    _

// kernel: _lambda_.9
$region0: #{_lambda_.9}
  #allocation0 [shape = 'u32[]', space=smem, size = 0x4, offset = 0x4, fixed_abs, tag = 'smem constant byte address 0x4 - core index']
  #allocation1 [shape = 'u32[144,128]{1,0:T(1,128)}', space=vmem, size = 0x12000, scoped, tag = 'internal scratch']
  #allocation2 [shape = 'f32[8,32]{1,0:T(8,128)}', space=vmem, size = 0x1000, scoped, tag = 'scratch operand']
  %s0 = inlined_call_operand.vmem [shape: f32[8,768], index: 0, kind: input, shape index: {}]
  %s1 = inlined_call_operand.vmem [shape: bf16[768,32], index: 1, kind: input, shape index: {}]
  %s2 = inlined_call_operand.vmem [shape: f32[8,32], index: 2, kind: output, shape index: {}]
  %s3 = sld [smem:[#allocation0]]
  $region26: #{_lambda_.9} parent=0
    _
  %s5 = ssub.s32 1, %s3
  %s6 = scalar_select 0, %s5, %s3
  // Predicated region
  $region2: #{_lambda_.9} parent=0 // pred_check
    _
  $region3: #{_lambda_.9} parent=0 // pred_check_branch
    %8 = sbr.rel (0) target = $region5
  $region4: #{_lambda_.9} parent=0 // pred_region
    _
  $region5: #{_lambda_.9} parent=0 // pred_fallthru
    _
  // Predicated region
  $region6: #{_lambda_.9} parent=0 // pred_check
    _
  $region7: #{_lambda_.9} parent=0 // pred_check_branch
    %10 = sbr.rel (0) target = $region9
  $region8: #{_lambda_.9} parent=0 // pred_region
    _
  $region9: #{_lambda_.9} parent=0 // pred_fallthru
    _
  %p12 = scmp.eq.s32.totalorder 0, 0
  // Predicated region
  $region10: #{_lambda_.9} parent=0 // pred_check
    %p13 = pneg %p12
  $region11: #{_lambda_.9} parent=0 // pred_check_branch
    %15 = sbr.rel (%p13) target = $region13
  $region12: #{_lambda_.9} parent=0 // pred_region
    %vm16 = vcmask 261120
    %17 = vst.msk [vmem:[#allocation2] sm:$0xff] %vm16, 0.0
  $region13: #{_lambda_.9} parent=0 // pred_fallthru
    _
  %v18 = vld [vmem:[#allocation2] sm:$0xff]
  %v19 = vld [vmem:[%s0] sm:$0xff]
  %v20 = vld [vmem:[%s0 + $0x8] sm:$0xff]
  %v21 = vld [vmem:[%s0 + $0x10] sm:$0xff]
  %v22 = vld [vmem:[%s0 + $0x18] sm:$0xff]
  %v23 = vld [vmem:[%s0 + $0x20] sm:$0xff]
  %v24 = vld [vmem:[%s0 + $0x28] sm:$0xff]
  %v25 = vpack.c.bf16 %v19, %v19
  %v26 = vpack.c.bf16 %v20, %v20
  %v27 = vpack.c.bf16 %v21, %v21
  %v28 = vpack.c.bf16 %v22, %v22
  %v29 = vpack.c.bf16 %v23, %v23
  %v30 = vpack.c.bf16 %v24, %v24
  %v31 = vld [vmem:[%s1] sm:$0xf]
  %v32 = vld [vmem:[%s1 + $0x4] sm:$0xf]
  %v33 = vld [vmem:[%s1 + $0x8] sm:$0xf]
  %v34 = vld [vmem:[%s1 + $0xc] sm:$0xf]
  %v35 = vld [vmem:[%s1 + $0x10] sm:$0xf]
  %v36 = vld [vmem:[%s1 + $0x14] sm:$0xf]
  %v37 = vld [vmem:[%s1 + $0x18] sm:$0xf]
  %v38 = vld [vmem:[%s1 + $0x1c] sm:$0xf]
  %v39 = vld [vmem:[%s1 + $0x20] sm:$0xf]
  %v40 = vld [vmem:[%s1 + $0x24] sm:$0xf]
  %v41 = vld [vmem:[%s1 + $0x28] sm:$0xf]
  %v42 = vld [vmem:[%s1 + $0x2c] sm:$0xf]
  %v43 = vld [vmem:[%s1 + $0x30] sm:$0xf]
  %v44 = vld [vmem:[%s1 + $0x34] sm:$0xf]
  %v45 = vld [vmem:[%s1 + $0x38] sm:$0xf]
  %v46 = vld [vmem:[%s1 + $0x3c] sm:$0xf]
  %v47 = vld [vmem:[%s1 + $0x40] sm:$0xf]
  %v48 = vld [vmem:[%s1 + $0x44] sm:$0xf]
  %v49 = vld [vmem:[%s1 + $0x48] sm:$0xf]
  %v50 = vld [vmem:[%s1 + $0x4c] sm:$0xf]
  %v51 = vld [vmem:[%s1 + $0x50] sm:$0xf]
  %v52 = vld [vmem:[%s1 + $0x54] sm:$0xf]
  %v53 = vld [vmem:[%s1 + $0x58] sm:$0xf]
  %v54 = vld [vmem:[%s1 + $0x5c] sm:$0xf]
  %v55 = vld [vmem:[%s1 + $0x60] sm:$0xf]
  %v56 = vld [vmem:[%s1 + $0x64] sm:$0xf]
  %v57 = vld [vmem:[%s1 + $0x68] sm:$0xf]
  %v58 = vld [vmem:[%s1 + $0x6c] sm:$0xf]
  %v59 = vld [vmem:[%s1 + $0x70] sm:$0xf]
  %v60 = vld [vmem:[%s1 + $0x74] sm:$0xf]
  %v61 = vld [vmem:[%s1 + $0x78] sm:$0xf]
  %v62 = vld [vmem:[%s1 + $0x7c] sm:$0xf]
  %v63 = vld [vmem:[%s1 + $0x80] sm:$0xf]
  %v64 = vld [vmem:[%s1 + $0x84] sm:$0xf]
  %v65 = vld [vmem:[%s1 + $0x88] sm:$0xf]
  %v66 = vld [vmem:[%s1 + $0x8c] sm:$0xf]
  %v67 = vld [vmem:[%s1 + $0x90] sm:$0xf]
  %v68 = vld [vmem:[%s1 + $0x94] sm:$0xf]
  %v69 = vld [vmem:[%s1 + $0x98] sm:$0xf]
  %v70 = vld [vmem:[%s1 + $0x9c] sm:$0xf]
  %v71 = vld [vmem:[%s1 + $0xa0] sm:$0xf]
  %v72 = vld [vmem:[%s1 + $0xa4] sm:$0xf]
  %v73 = vld [vmem:[%s1 + $0xa8] sm:$0xf]
  %v74 = vld [vmem:[%s1 + $0xac] sm:$0xf]
  %v75 = vld [vmem:[%s1 + $0xb0] sm:$0xf]
  %v76 = vld [vmem:[%s1 + $0xb4] sm:$0xf]
  %v77 = vld [vmem:[%s1 + $0xb8] sm:$0xf]
  %v78 = vld [vmem:[%s1 + $0xbc] sm:$0xf]
  %v79 = vld [vmem:[%s1 + $0xc0] sm:$0xf]
  %v80 = vld [vmem:[%s1 + $0xc4] sm:$0xf]
  %v81 = vld [vmem:[%s1 + $0xc8] sm:$0xf]
  %v82 = vld [vmem:[%s1 + $0xcc] sm:$0xf]
  %v83 = vld [vmem:[%s1 + $0xd0] sm:$0xf]
  %v84 = vld [vmem:[%s1 + $0xd4] sm:$0xf]
  %v85 = vld [vmem:[%s1 + $0xd8] sm:$0xf]
  %v86 = vld [vmem:[%s1 + $0xdc] sm:$0xf]
  %v87 = vld [vmem:[%s1 + $0xe0] sm:$0xf]
  %v88 = vld [vmem:[%s1 + $0xe4] sm:$0xf]
  %v89 = vld [vmem:[%s1 + $0xe8] sm:$0xf]
  %v90 = vld [vmem:[%s1 + $0xec] sm:$0xf]
  %v91 = vld [vmem:[%s1 + $0xf0] sm:$0xf]
  %v92 = vld [vmem:[%s1 + $0xf4] sm:$0xf]
  %v93 = vld [vmem:[%s1 + $0xf8] sm:$0xf]
  %v94 = vld [vmem:[%s1 + $0xfc] sm:$0xf]
  %v95 = vld [vmem:[%s1 + $0x100] sm:$0xf]
  %v96 = vld [vmem:[%s1 + $0x104] sm:$0xf]
  %v97 = vld [vmem:[%s1 + $0x108] sm:$0xf]
  %v98 = vld [vmem:[%s1 + $0x10c] sm:$0xf]
  %v99 = vld [vmem:[%s1 + $0x110] sm:$0xf]
  %v100 = vld [vmem:[%s1 + $0x114] sm:$0xf]
  %v101 = vld [vmem:[%s1 + $0x118] sm:$0xf]
  %v102 = vld [vmem:[%s1 + $0x11c] sm:$0xf]
  %v103 = vld [vmem:[%s1 + $0x120] sm:$0xf]
  %v104 = vld [vmem:[%s1 + $0x124] sm:$0xf]
  %v105 = vld [vmem:[%s1 + $0x128] sm:$0xf]
  %v106 = vld [vmem:[%s1 + $0x12c] sm:$0xf]
  %v107 = vld [vmem:[%s1 + $0x130] sm:$0xf]
  %v108 = vld [vmem:[%s1 + $0x134] sm:$0xf]
  %v109 = vld [vmem:[%s1 + $0x138] sm:$0xf]
  %v110 = vld [vmem:[%s1 + $0x13c] sm:$0xf]
  %v111 = vld [vmem:[%s1 + $0x140] sm:$0xf]
  %v112 = vld [vmem:[%s1 + $0x144] sm:$0xf]
  %v113 = vld [vmem:[%s1 + $0x148] sm:$0xf]
  %v114 = vld [vmem:[%s1 + $0x14c] sm:$0xf]
  %v115 = vld [vmem:[%s1 + $0x150] sm:$0xf]
  %v116 = vld [vmem:[%s1 + $0x154] sm:$0xf]
  %v117 = vld [vmem:[%s1 + $0x158] sm:$0xf]
  %v118 = vld [vmem:[%s1 + $0x15c] sm:$0xf]
  %v119 = vld [vmem:[%s1 + $0x160] sm:$0xf]
  %v120 = vld [vmem:[%s1 + $0x164] sm:$0xf]
  %v121 = vld [vmem:[%s1 + $0x168] sm:$0xf]
  %v122 = vld [vmem:[%s1 + $0x16c] sm:$0xf]
  %v123 = vld [vmem:[%s1 + $0x170] sm:$0xf]
  %v124 = vld [vmem:[%s1 + $0x174] sm:$0xf]
  %v125 = vld [vmem:[%s1 + $0x178] sm:$0xf]
  %v126 = vld [vmem:[%s1 + $0x17c] sm:$0xf]
  %v223 = vunpack.c.l.b16 %v31
  %v224 = vunpack.c.l.b16 %v32
  %v225 = vunpack.c.l.b16 %v33
  %v226 = vunpack.c.l.b16 %v34
  %v227 = vunpack.c.l.b16 %v35
  %v228 = vunpack.c.l.b16 %v36
  %v229 = vunpack.c.l.b16 %v37
  %v230 = vunpack.c.l.b16 %v38
  %v231 = vunpack.c.l.b16 %v39
  %v232 = vunpack.c.l.b16 %v40
  %v233 = vunpack.c.l.b16 %v41
  %v234 = vunpack.c.l.b16 %v42
  %v235 = vunpack.c.l.b16 %v43
  %v236 = vunpack.c.l.b16 %v44
  %v237 = vunpack.c.l.b16 %v45
  %v238 = vunpack.c.l.b16 %v46
  %v239 = vunpack.c.l.b16 %v47
  %v240 = vunpack.c.l.b16 %v48
  %v241 = vunpack.c.l.b16 %v49
  %v242 = vunpack.c.l.b16 %v50
  %v243 = vunpack.c.l.b16 %v51
  %v244 = vunpack.c.l.b16 %v52
  %v245 = vunpack.c.l.b16 %v53
  %v246 = vunpack.c.l.b16 %v54
  %v247 = vunpack.c.l.b16 %v55
  %v248 = vunpack.c.l.b16 %v56
  %v249 = vunpack.c.l.b16 %v57
  %v250 = vunpack.c.l.b16 %v58
  %v251 = vunpack.c.l.b16 %v59
  %v252 = vunpack.c.l.b16 %v60
  %v253 = vunpack.c.l.b16 %v61
  %v254 = vunpack.c.l.b16 %v62
  %v255 = vunpack.c.l.b16 %v63
  %v256 = vunpack.c.l.b16 %v64
  %v257 = vunpack.c.l.b16 %v65
  %v258 = vunpack.c.l.b16 %v66
  %v259 = vunpack.c.l.b16 %v67
  %v260 = vunpack.c.l.b16 %v68
  %v261 = vunpack.c.l.b16 %v69
  %v262 = vunpack.c.l.b16 %v70
  %v263 = vunpack.c.l.b16 %v71
  %v264 = vunpack.c.l.b16 %v72
  %v265 = vunpack.c.l.b16 %v73
  %v266 = vunpack.c.l.b16 %v74
  %v267 = vunpack.c.l.b16 %v75
  %v268 = vunpack.c.l.b16 %v76
  %v269 = vunpack.c.l.b16 %v77
  %v270 = vunpack.c.l.b16 %v78
  %v271 = vunpack.c.l.b16 %v79
  %v272 = vunpack.c.l.b16 %v80
  %v273 = vunpack.c.l.b16 %v81
  %v274 = vunpack.c.l.b16 %v82
  %v275 = vunpack.c.l.b16 %v83
  %v276 = vunpack.c.l.b16 %v84
  %v277 = vunpack.c.l.b16 %v85
  %v278 = vunpack.c.l.b16 %v86
  %v279 = vunpack.c.l.b16 %v87
  %v280 = vunpack.c.l.b16 %v88
  %v281 = vunpack.c.l.b16 %v89
  %v282 = vunpack.c.l.b16 %v90
  %v283 = vunpack.c.l.b16 %v91
  %v284 = vunpack.c.l.b16 %v92
  %v285 = vunpack.c.l.b16 %v93
  %v286 = vunpack.c.l.b16 %v94
  %v287 = vunpack.c.l.b16 %v95
  %v288 = vunpack.c.l.b16 %v96
  %v289 = vunpack.c.l.b16 %v97
  %v290 = vunpack.c.l.b16 %v98
  %v291 = vunpack.c.l.b16 %v99
  %v292 = vunpack.c.l.b16 %v100
  %v293 = vunpack.c.l.b16 %v101
  %v294 = vunpack.c.l.b16 %v102
  %v295 = vunpack.c.l.b16 %v103
  %v296 = vunpack.c.l.b16 %v104
  %v297 = vunpack.c.l.b16 %v105
  %v298 = vunpack.c.l.b16 %v106
  %v299 = vunpack.c.l.b16 %v107
  %v300 = vunpack.c.l.b16 %v108
  %v301 = vunpack.c.l.b16 %v109
  %v302 = vunpack.c.l.b16 %v110
  %v303 = vunpack.c.l.b16 %v111
  %v304 = vunpack.c.l.b16 %v112
  %v305 = vunpack.c.l.b16 %v113
  %v306 = vunpack.c.l.b16 %v114
  %v307 = vunpack.c.l.b16 %v115
  %v308 = vunpack.c.l.b16 %v116
  %v309 = vunpack.c.l.b16 %v117
  %v310 = vunpack.c.l.b16 %v118
  %v311 = vunpack.c.l.b16 %v119
  %v312 = vunpack.c.l.b16 %v120
  %v313 = vunpack.c.l.b16 %v121
  %v314 = vunpack.c.l.b16 %v122
  %v315 = vunpack.c.l.b16 %v123
  %v316 = vunpack.c.l.b16 %v124
  %v317 = vunpack.c.l.b16 %v125
  %v318 = vunpack.c.l.b16 %v126
  %v319 = vpack.c.b16 %v224, %v223
  %v320 = vpack.c.b16 %v226, %v225
  %v321 = vpack.c.b16 %v228, %v227
  %v322 = vpack.c.b16 %v230, %v229
  %v323 = vpack.c.b16 %v232, %v231
  %v324 = vpack.c.b16 %v234, %v233
  %v325 = vpack.c.b16 %v236, %v235
  %v326 = vpack.c.b16 %v238, %v237
  %v327 = vpack.c.b16 %v240, %v239
  %v328 = vpack.c.b16 %v242, %v241
  %v329 = vpack.c.b16 %v244, %v243
  %v330 = vpack.c.b16 %v246, %v245
  %v331 = vpack.c.b16 %v248, %v247
  %v332 = vpack.c.b16 %v250, %v249
  %v333 = vpack.c.b16 %v252, %v251
  %v334 = vpack.c.b16 %v254, %v253
  %v335 = vpack.c.b16 %v256, %v255
  %v336 = vpack.c.b16 %v258, %v257
  %v337 = vpack.c.b16 %v260, %v259
  %v338 = vpack.c.b16 %v262, %v261
  %v339 = vpack.c.b16 %v264, %v263
  %v340 = vpack.c.b16 %v266, %v265
  %v341 = vpack.c.b16 %v268, %v267
  %v342 = vpack.c.b16 %v270, %v269
  %v343 = vpack.c.b16 %v272, %v271
  %v344 = vpack.c.b16 %v274, %v273
  %v345 = vpack.c.b16 %v276, %v275
  %v346 = vpack.c.b16 %v278, %v277
  %v347 = vpack.c.b16 %v280, %v279
  %v348 = vpack.c.b16 %v282, %v281
  %v349 = vpack.c.b16 %v284, %v283
  %v350 = vpack.c.b16 %v286, %v285
  %v351 = vpack.c.b16 %v288, %v287
  %v352 = vpack.c.b16 %v290, %v289
  %v353 = vpack.c.b16 %v292, %v291
  %v354 = vpack.c.b16 %v294, %v293
  %v355 = vpack.c.b16 %v296, %v295
  %v356 = vpack.c.b16 %v298, %v297
  %v357 = vpack.c.b16 %v300, %v299
  %v358 = vpack.c.b16 %v302, %v301
  %v359 = vpack.c.b16 %v304, %v303
  %v360 = vpack.c.b16 %v306, %v305
  %v361 = vpack.c.b16 %v308, %v307
  %v362 = vpack.c.b16 %v310, %v309
  %v363 = vpack.c.b16 %v312, %v311
  %v364 = vpack.c.b16 %v314, %v313
  %v365 = vpack.c.b16 %v316, %v315
  %v366 = vpack.c.b16 %v318, %v317
  %415 = vmatprep.subr.bf16.mxu0 0
  %416 = vmatpush1.bf16.msra.mxu0 %v319
  %417 = vmatprep.subr.bf16.mxu0 0
  %418 = vmatpush1.bf16.msra.mxu0 %v320
  %419 = vmatprep.subr.bf16.mxu0 0
  %420 = vmatpush1.bf16.msra.mxu0 %v321
  %421 = vmatprep.subr.bf16.mxu0 0
  %422 = vmatpush1.bf16.msra.mxu0 %v322
  %423 = vmatprep.subr.bf16.mxu0 0
  %424 = vmatpush1.bf16.msra.mxu0 %v323
  %425 = vmatprep.subr.bf16.mxu0 0
  %426 = vmatpush1.bf16.msra.mxu0 %v324
  %427 = vmatprep.subr.bf16.mxu0 0
  %428 = vmatpush1.bf16.msra.mxu0 %v325
  %429 = vmatprep.subr.bf16.mxu0 0
  %430 = vmatpush1.bf16.msra.mxu0 %v326
  %431 = vmatprep.subr.bf16.mxu0 0
  %432 = vmatpush1.bf16.msra.mxu0 %v327
  %433 = vmatprep.subr.bf16.mxu0 0
  %434 = vmatpush1.bf16.msra.mxu0 %v328
  %435 = vmatprep.subr.bf16.mxu0 0
  %436 = vmatpush1.bf16.msra.mxu0 %v329
  %437 = vmatprep.subr.bf16.mxu0 0
  %438 = vmatpush1.bf16.msra.mxu0 %v330
  %439 = vmatprep.subr.bf16.mxu0 0
  %440 = vmatpush1.bf16.msra.mxu0 %v331
  %441 = vmatprep.subr.bf16.mxu0 0
  %442 = vmatpush1.bf16.msra.mxu0 %v332
  %443 = vmatprep.subr.bf16.mxu0 0
  %444 = vmatpush1.bf16.msra.mxu0 %v333
  %445 = vmatprep.subr.bf16.mxu0 0
  %446 = vmatpush1.bf16.msra.mxu0 %v334
  %447 = vmatprep.mubr.bf16.mxu0 %v26
  %448 = vmatmul.mubr.bf16.gmra.mrb[0].mxu0 %v25
  %v449 = vpop.f32.mrb[0].mxu0
  %v450 = vadd.f32 0.0, %v449
  %v451 = vpop.f32.mrb[0].mxu0
  %v452 = vpop.f32.mrb[0].mxu0
  %v453 = vpop.f32.mrb[0].mxu0
  %454 = vdwg.mxu0
  %455 = vmatprep.subr.bf16.mxu0 0
  %456 = vmatpush1.bf16.msra.mxu0 %v335
  %457 = vmatprep.subr.bf16.mxu0 0
  %458 = vmatpush1.bf16.msra.mxu0 %v336
  %459 = vmatprep.subr.bf16.mxu0 0
  %460 = vmatpush1.bf16.msra.mxu0 %v337
  %461 = vmatprep.subr.bf16.mxu0 0
  %462 = vmatpush1.bf16.msra.mxu0 %v338
  %463 = vmatprep.subr.bf16.mxu0 0
  %464 = vmatpush1.bf16.msra.mxu0 %v339
  %465 = vmatprep.subr.bf16.mxu0 0
  %466 = vmatpush1.bf16.msra.mxu0 %v340
  %467 = vmatprep.subr.bf16.mxu0 0
  %468 = vmatpush1.bf16.msra.mxu0 %v341
  %469 = vmatprep.subr.bf16.mxu0 0
  %470 = vmatpush1.bf16.msra.mxu0 %v342
  %471 = vmatprep.subr.bf16.mxu0 0
  %472 = vmatpush1.bf16.msra.mxu0 %v343
  %473 = vmatprep.subr.bf16.mxu0 0
  %474 = vmatpush1.bf16.msra.mxu0 %v344
  %475 = vmatprep.subr.bf16.mxu0 0
  %476 = vmatpush1.bf16.msra.mxu0 %v345
  %477 = vmatprep.subr.bf16.mxu0 0
  %478 = vmatpush1.bf16.msra.mxu0 %v346
  %479 = vmatprep.subr.bf16.mxu0 0
  %480 = vmatpush1.bf16.msra.mxu0 %v347
  %481 = vmatprep.subr.bf16.mxu0 0
  %482 = vmatpush1.bf16.msra.mxu0 %v348
  %483 = vmatprep.subr.bf16.mxu0 0
  %484 = vmatpush1.bf16.msra.mxu0 %v349
  %485 = vmatprep.subr.bf16.mxu0 0
  %486 = vmatpush1.bf16.msra.mxu0 %v350
  %487 = vmatprep.mubr.bf16.mxu0 %v28
  %488 = vmatmul.mubr.bf16.gmra.mrb[0].mxu0 %v27
  %v489 = vpop.f32.mrb[0].mxu0
  %v490 = vadd.f32 %v450, %v489
  %v491 = vpop.f32.mrb[0].mxu0
  %v492 = vpop.f32.mrb[0].mxu0
  %v493 = vpop.f32.mrb[0].mxu0
  %494 = vdwg.mxu0
  %495 = vmatprep.subr.bf16.mxu0 0
  %496 = vmatpush1.bf16.msra.mxu0 %v351
  %497 = vmatprep.subr.bf16.mxu0 0
  %498 = vmatpush1.bf16.msra.mxu0 %v352
  %499 = vmatprep.subr.bf16.mxu0 0
  %500 = vmatpush1.bf16.msra.mxu0 %v353
  %501 = vmatprep.subr.bf16.mxu0 0
  %502 = vmatpush1.bf16.msra.mxu0 %v354
  %503 = vmatprep.subr.bf16.mxu0 0
  %504 = vmatpush1.bf16.msra.mxu0 %v355
  %505 = vmatprep.subr.bf16.mxu0 0
  %506 = vmatpush1.bf16.msra.mxu0 %v356
  %507 = vmatprep.subr.bf16.mxu0 0
  %508 = vmatpush1.bf16.msra.mxu0 %v357
  %509 = vmatprep.subr.bf16.mxu0 0
  %510 = vmatpush1.bf16.msra.mxu0 %v358
  %511 = vmatprep.subr.bf16.mxu0 0
  %512 = vmatpush1.bf16.msra.mxu0 %v359
  %513 = vmatprep.subr.bf16.mxu0 0
  %514 = vmatpush1.bf16.msra.mxu0 %v360
  %515 = vmatprep.subr.bf16.mxu0 0
  %516 = vmatpush1.bf16.msra.mxu0 %v361
  %517 = vmatprep.subr.bf16.mxu0 0
  %518 = vmatpush1.bf16.msra.mxu0 %v362
  %519 = vmatprep.subr.bf16.mxu0 0
  %520 = vmatpush1.bf16.msra.mxu0 %v363
  %521 = vmatprep.subr.bf16.mxu0 0
  %522 = vmatpush1.bf16.msra.mxu0 %v364
  %523 = vmatprep.subr.bf16.mxu0 0
  %524 = vmatpush1.bf16.msra.mxu0 %v365
  %525 = vmatprep.subr.bf16.mxu0 0
  %526 = vmatpush1.bf16.msra.mxu0 %v366
  %527 = vmatprep.mubr.bf16.mxu0 %v30
  %528 = vmatmul.mubr.bf16.gmra.mrb[0].mxu0 %v29
  %v529 = vpop.f32.mrb[0].mxu0
  %v530 = vadd.f32 %v490, %v529
  %v531 = vpop.f32.mrb[0].mxu0
  %v532 = vpop.f32.mrb[0].mxu0
  %v533 = vpop.f32.mrb[0].mxu0
  %534 = vdwg.mxu0
  %v535 = vadd.f32 %v18, %v530
  %vm536 = vcmask 261120
  %537 = vst.msk [vmem:[#allocation2] sm:$0xff] %vm536, %v535
  // Predicated region
  $region14: #{_lambda_.9} parent=0 // pred_check
    %p538 = pneg %p12
  $region15: #{_lambda_.9} parent=0 // pred_check_branch
    %540 = sbr.rel (%p538) target = $region17
  $region16: #{_lambda_.9} parent=0 // pred_region
    %v541 = vld [vmem:[#allocation2] sm:$0xff]
    %542 = vst.msk [vmem:[%s2] sm:$0xff] %vm536, %v541
  $region17: #{_lambda_.9} parent=0 // pred_fallthru
    _
  // Predicated region
  $region18: #{_lambda_.9} parent=0 // pred_check
    _
  $region19: #{_lambda_.9} parent=0 // pred_check_branch
    %544 = sbr.rel (0) target = $region21
  $region20: #{_lambda_.9} parent=0 // pred_region
    _
  $region21: #{_lambda_.9} parent=0 // pred_fallthru
    _
  // Predicated region
  $region22: #{_lambda_.9} parent=0 // pred_check
    _
  $region23: #{_lambda_.9} parent=0 // pred_check_branch
    %546 = sbr.rel (0) target = $region25
  $region24: #{_lambda_.9} parent=0 // pred_region
    _
  $region25: #{_lambda_.9} parent=0 // pred_fallthru
    _

// kernel: _lambda_.11
$region0: #{_lambda_.11}
  #allocation0 [shape = 'u32[]', space=smem, size = 0x4, offset = 0x4, fixed_abs, tag = 'smem constant byte address 0x4 - core index']
  #allocation1 [shape = 'u32[144,128]{1,0:T(1,128)}', space=vmem, size = 0x12000, scoped, tag = 'internal scratch']
  %s0 = inlined_call_operand.vmem [shape: f32[2,32], index: 0, kind: input, shape index: {}]
  %s1 = inlined_call_operand.vmem [shape: f32[2,32], index: 1, kind: input, shape index: {}]
  %s2 = inlined_call_operand.hbm [shape: f32[2,2], index: 2, kind: output, shape index: {0}]
  %s3 = inlined_call_operand.hbm [shape: f32[1,1], index: 3, kind: output, shape index: {1}]
  %4 = xla_tuple %s2, %s3
  %s5 = sld [smem:[#allocation0]]
  $region26: #{_lambda_.11} parent=0
    _
  %s7 = ssub.s32 1, %s5
  %s8 = scalar_select 0, %s7, %s5
  $region1: #{_lambda_.11} parent=0
    #allocation2 [shape = 'u8[1024]{0}', space=vmem, size = 0x400, scoped, tag = 'output window, operand 0, single buffered']
    #allocation3 [shape = 's32[1]{0}', space=sflag, size = 0x4, scoped, tag = 'scoped memory for _lambda_.11']
    #allocation4 [shape = 'u8[512]{0}', space=vmem, size = 0x400, scoped, tag = 'output window, operand 1, single buffered']
    #allocation5 [shape = 's32[1]{0}', space=sflag, size = 0x4, scoped, tag = 'scoped memory for _lambda_.11']
    %9 = vsyncpa [#allocation3], 0
    %10 = vsyncpa [#allocation5], 0
    // Predicated region
    $region2: #{_lambda_.11} parent=1 // pred_check
      _
    $region3: #{_lambda_.11} parent=1 // pred_check_branch
      %12 = sbr.rel (0) target = $region5
    $region4: #{_lambda_.11} parent=1 // pred_region
      _
    $region5: #{_lambda_.11} parent=1 // pred_fallthru
      _
    // Predicated region
    $region6: #{_lambda_.11} parent=1 // pred_check
      _
    $region7: #{_lambda_.11} parent=1 // pred_check_branch
      %14 = sbr.rel (0) target = $region9
    $region8: #{_lambda_.11} parent=1 // pred_region
      _
    $region9: #{_lambda_.11} parent=1 // pred_fallthru
      _
    %v15 = vld [vmem:[%s0] sm:$0x3]
    %v16 = vld [vmem:[%s1] sm:$0x3]
    %v17 = vmul.f32 %v15, %v15
    %vm18 = vcmask 254976
    %v19 = vsel %vm18, %v17, 0.0
    %20 = vadd.xlane.f32.xlu0 %v19
    %v21 = vpop.xlane.xlu0 %20
    %v22 = vadd.f32 %v21, 1e-12
    %v23 = vrsqrt.pop %v22
    %v24 = vmul.f32 %v15, %v23
    %v25 = vmul.f32 %v16, %v16
    %v26 = vsel %vm18, %v25, 0.0
    %27 = vadd.xlane.f32.xlu0 %v26
    %v28 = vpop.xlane.xlu0 %27
    %v29 = vadd.f32 %v28, 1e-12
    %v30 = vrsqrt.pop %v29
    %v31 = vmul.f32 %v16, %v30
    %vm32 = vcmask 261120
    %v34 = vsel %vm32, %v24, 0
    %v37 = vsel %vm32, %v31, 0
    %39 = vmatprep.subr.mxu0 0.0
    %40 = vmatpush1.xpose.msra.mxu0 %v37
    %41 = vmatprep.subr.mxu0 0.0
    %42 = vmatpush1.xpose.msra.mxu0 0.0
    %43 = vmatprep.subr.mxu0 0.0
    %44 = vmatpush1.xpose.msra.mxu0 0.0
    %45 = vmatprep.subr.mxu0 0.0
    %46 = vmatpush1.xpose.msra.mxu0 0.0
    %47 = vmatprep.subr.mxu0 0.0
    %48 = vmatpush1.xpose.msra.mxu0 0.0
    %49 = vmatprep.subr.mxu0 0.0
    %50 = vmatpush1.xpose.msra.mxu0 0.0
    %51 = vmatprep.subr.mxu0 0.0
    %52 = vmatpush1.xpose.msra.mxu0 0.0
    %53 = vmatprep.subr.mxu0 0.0
    %54 = vmatpush1.xpose.msra.mxu0 0.0
    %55 = vmatprep.subr.mxu0 0.0
    %56 = vmatpush1.xpose.msra.mxu0 0.0
    %57 = vmatprep.subr.mxu0 0.0
    %58 = vmatpush1.xpose.msra.mxu0 0.0
    %59 = vmatprep.subr.mxu0 0.0
    %60 = vmatpush1.xpose.msra.mxu0 0.0
    %61 = vmatprep.subr.mxu0 0.0
    %62 = vmatpush1.xpose.msra.mxu0 0.0
    %63 = vmatprep.subr.mxu0 0.0
    %64 = vmatpush1.xpose.msra.mxu0 0.0
    %65 = vmatprep.subr.mxu0 0.0
    %66 = vmatpush1.xpose.msra.mxu0 0.0
    %67 = vmatprep.subr.mxu0 0.0
    %68 = vmatpush1.xpose.msra.mxu0 0.0
    %69 = vmatprep.subr.mxu0 0.0
    %70 = vmatpush1.xpose.msra.mxu0 0.0
    %71 = vmatprep.subr.mxu0 0.0
    %72 = vmatpush1.xpose.msra.mxu0 0.0
    %73 = vmatprep.subr.mxu0 0.0
    %74 = vmatpush1.xpose.msra.mxu0 0.0
    %75 = vmatprep.subr.mxu0 0.0
    %76 = vmatpush1.xpose.msra.mxu0 0.0
    %77 = vmatprep.subr.mxu0 0.0
    %78 = vmatpush1.xpose.msra.mxu0 0.0
    %79 = vmatprep.subr.mxu0 0.0
    %80 = vmatpush1.xpose.msra.mxu0 0.0
    %81 = vmatprep.subr.mxu0 0.0
    %82 = vmatpush1.xpose.msra.mxu0 0.0
    %83 = vmatprep.subr.mxu0 0.0
    %84 = vmatpush1.xpose.msra.mxu0 0.0
    %85 = vmatprep.subr.mxu0 0.0
    %86 = vmatpush1.xpose.msra.mxu0 0.0
    %87 = vmatprep.subr.mxu0 0.0
    %88 = vmatpush1.xpose.msra.mxu0 0.0
    %89 = vmatprep.subr.mxu0 0.0
    %90 = vmatpush1.xpose.msra.mxu0 0.0
    %91 = vmatprep.subr.mxu0 0.0
    %92 = vmatpush1.xpose.msra.mxu0 0.0
    %93 = vmatprep.subr.mxu0 0.0
    %94 = vmatpush1.xpose.msra.mxu0 0.0
    %95 = vmatprep.subr.mxu0 0.0
    %96 = vmatpush1.xpose.msra.mxu0 0.0
    %97 = vmatprep.subr.mxu0 0.0
    %98 = vmatpush1.xpose.msra.mxu0 0.0
    %99 = vmatprep.subr.mxu0 0.0
    %100 = vmatpush1.xpose.msra.mxu0 0.0
    %101 = vmatprep.subr.mxu0 0.0
    %102 = vmatpush1.xpose.msra.mxu0 0.0
    %103 = vmatprep.mubr.f32.mxu0 0.0
    %104 = vmatmul.mubr.f32.gmra.mrb[0].mxu0 %v34
    %v105 = vpop.f32.mrb[0].mxu0
    %v106 = vadd.f32 0.0, %v105
    %v107 = vpop.f32.mrb[0].mxu0
    %108 = vdwg.mxu0
    %vm109 = vcmask 9216
    %110 = vst.msk [vmem:[#allocation2] sm:$0x3] %vm109, %v106
    %v111 = vlaneseq
    %v112 = vshrl.u32 %v111, 7
    %v113 = vlaneseq
    %v114 = vand.u32 %v113, 127
    %vm115 = vcmp.eq.s32.totalorder %v112, %v114
    %v116 = vsel %vm109, %v106, -inf
    %117 = vmax.xlane.f32.xlu0 %v116
    %v118 = vpop.xlane.xlu0 %117
    %v119 = vsub.f32 %v106, %v118
    %v120 = vmul.f32 %v119, 1.442695
    %v121 = vpow.pop %v120
    %v122 = vsel %vm109, %v121, 0.0
    %123 = vadd.xlane.f32.xlu0 %v122
    %v124 = vpop.xlane.xlu0 %123
    %v125 = vlog2.pop %v124
    %v126 = vmul.f32 %v125, 0.6931472
    %v127 = vadd.f32 %v118, %v126
    %v128 = vsub.f32 %v106, %v127
    %v129 = vsel %vm115, %v128, 0.0
    %v130 = vsel %vm109, %v129, 0.0
    %131 = vadd.xlane.f32.xlu0 %v130
    %v132 = vpop.xlane.xlu0 %131
    %vm133 = vcmask 1041408
    %v134 = vsel %vm133, %v132, 0.0
    %v135 = vrot.slane %v134, 4
    %v136 = vadd.f32 %v134, %v135
    %v137 = vrot.slane %v136, 2
    %v138 = vadd.f32 %v136, %v137
    %v139 = vrot.slane %v138, 1
    %v140 = vadd.f32 %v138, %v139
    %v141 = vrcp.pop 2.0
    %v142 = vmul.f32 %v140, %v141
    %v143 = vsub.f32 0.0, %v142
    %v144 = vrot.slane %v116, 4
    %v145 = vmax.f32 %v116, %v144
    %v146 = vrot.slane %v145, 2
    %v147 = vmax.f32 %v145, %v146
    %v148 = vrot.slane %v147, 1
    %v149 = vmax.f32 %v147, %v148
    %v150 = vsub.f32 %v106, %v149
    %v151 = vmul.f32 %v150, 1.442695
    %v152 = vpow.pop %v151
    %v153 = vsel %vm109, %v152, 0.0
    %v154 = vrot.slane %v153, 4
    %v155 = vadd.f32 %v153, %v154
    %v156 = vrot.slane %v155, 2
    %v157 = vadd.f32 %v155, %v156
    %v158 = vrot.slane %v157, 1
    %v159 = vadd.f32 %v157, %v158
    %v160 = vlog2.pop %v159
    %v161 = vmul.f32 %v160, 0.6931472
    %v162 = vadd.f32 %v149, %v161
    %v163 = vsub.f32 %v106, %v162
    %v164 = vsel %vm115, %v163, 0.0
    %v165 = vsel %vm109, %v164, 0.0
    %v166 = vrot.slane %v165, 4
    %v167 = vadd.f32 %v165, %v166
    %v168 = vrot.slane %v167, 2
    %v169 = vadd.f32 %v167, %v168
    %v170 = vrot.slane %v169, 1
    %v171 = vadd.f32 %v169, %v170
    %vm172 = vcmask 15360
    %v173 = vsel %vm172, %v171, 0.0
    %174 = vadd.xlane.f32.xlu0 %v173
    %v175 = vpop.xlane.xlu0 %174
    %v176 = vmul.f32 %v175, %v141
    %v177 = vsub.f32 0.0, %v176
    %v178 = vadd.f32 %v143, %v177
    %v179 = vmul.f32 %v178, 0.5
    %vm180 = vcmask 0
    %181 = vst.msk [vmem:[#allocation4] sm:$0x1] %vm180, %v179
    // Predicated region
    $region10: #{_lambda_.11} parent=1 // pred_check
      _
    $region11: #{_lambda_.11} parent=1 // pred_check_branch
      %183 = sbr.rel (0) target = $region13
    $region12: #{_lambda_.11} parent=1 // pred_region
      %s185 = ssub.s32 32, 32
      %186 = vsyncadd [#allocation3], %s185
      %s188 = sshll.u32 [#allocation2], 4
      %s189 = int_to_ptr.vmem [resolvable:$true] %s188
      %191 = dma.vmem_to_hbm [thread:$0]  %s189, 32, %s2, [#allocation3]
    $region13: #{_lambda_.11} parent=1 // pred_fallthru
      _
    // Predicated region
    $region14: #{_lambda_.11} parent=1 // pred_check
      _
    $region15: #{_lambda_.11} parent=1 // pred_check_branch
      %193 = sbr.rel (0) target = $region17
    $region16: #{_lambda_.11} parent=1 // pred_region
      %s195 = ssub.s32 16, 16
      %196 = vsyncadd [#allocation5], %s195
      %s198 = sshll.u32 [#allocation4], 4
      %s199 = int_to_ptr.vmem [resolvable:$true] %s198
      %201 = dma.vmem_to_hbm [thread:$0]  %s199, 16, %s3, [#allocation5]
    $region17: #{_lambda_.11} parent=1 // pred_fallthru
      _
    // Predicated region
    $region18: #{_lambda_.11} parent=1 // pred_check
      _
    $region19: #{_lambda_.11} parent=1 // pred_check_branch
      %203 = sbr.rel (0) target = $region21
    $region20: #{_lambda_.11} parent=1 // pred_region
      %204 = dma.done [#allocation3], 32
    $region21: #{_lambda_.11} parent=1 // pred_fallthru
      _
    // Predicated region
    $region22: #{_lambda_.11} parent=1 // pred_check
      _
    $region23: #{_lambda_.11} parent=1 // pred_check_branch
      %206 = sbr.rel (0) target = $region25
    $region24: #{_lambda_.11} parent=1 // pred_region
      %207 = dma.done [#allocation5], 16
    $region25: #{_lambda_.11} parent=1 // pred_fallthru
      _
    %208 = vsyncpa [#allocation3], 1
    %209 = vsyncpa [#allocation5], 1

// kernel: _lambda_.10
$region0: #{_lambda_.10}
  #allocation0 [shape = 'u32[]', space=smem, size = 0x4, offset = 0x4, fixed_abs, tag = 'smem constant byte address 0x4 - core index']
  #allocation1 [shape = 'u32[144,128]{1,0:T(1,128)}', space=vmem, size = 0x12000, scoped, tag = 'internal scratch']
  %s0 = inlined_call_operand.vmem [shape: f32[2,32], index: 0, kind: input, shape index: {}]
  %s1 = inlined_call_operand.vmem [shape: f32[2,4,32], index: 1, kind: input, shape index: {}]
  %s2 = inlined_call_operand.vmem [shape: bf16[32,32], index: 2, kind: input, shape index: {}]
  %s3 = inlined_call_operand.vmem [shape: bf16[32,32], index: 3, kind: input, shape index: {}]
  %s4 = inlined_call_operand.vmem [shape: f32[2,32], index: 4, kind: output, shape index: {}]
  %s5 = sld [smem:[#allocation0]]
  $region26: #{_lambda_.10} parent=0
    _
  %s7 = ssub.s32 1, %s5
  %s8 = scalar_select 0, %s7, %s5
  // Predicated region
  $region2: #{_lambda_.10} parent=0 // pred_check
    _
  $region3: #{_lambda_.10} parent=0 // pred_check_branch
    %10 = sbr.rel (0) target = $region5
  $region4: #{_lambda_.10} parent=0 // pred_region
    _
  $region5: #{_lambda_.10} parent=0 // pred_fallthru
    _
  // Predicated region
  $region6: #{_lambda_.10} parent=0 // pred_check
    _
  $region7: #{_lambda_.10} parent=0 // pred_check_branch
    %12 = sbr.rel (0) target = $region9
  $region8: #{_lambda_.10} parent=0 // pred_region
    _
  $region9: #{_lambda_.10} parent=0 // pred_fallthru
    _
  // Predicated region
  $region10: #{_lambda_.10} parent=0 // pred_check
    _
  $region11: #{_lambda_.10} parent=0 // pred_check_branch
    %14 = sbr.rel (0) target = $region13
  $region12: #{_lambda_.10} parent=0 // pred_region
    _
  $region13: #{_lambda_.10} parent=0 // pred_fallthru
    _
  // Predicated region
  $region14: #{_lambda_.10} parent=0 // pred_check
    _
  $region15: #{_lambda_.10} parent=0 // pred_check_branch
    %16 = sbr.rel (0) target = $region17
  $region16: #{_lambda_.10} parent=0 // pred_region
    _
  $region17: #{_lambda_.10} parent=0 // pred_fallthru
    _
  %v18 = vld [vmem:[%s0] sm:$0x3]
  %v19 = vld [vmem:[%s1] sm:$0xf]
  %v20 = vld [vmem:[%s1 + $0x4] sm:$0xf]
  %v21 = vpack.c.bf16 %v19, %v19
  %v22 = vpack.c.bf16 %v20, %v20
  %v23 = vpack.c.bf16 %v18, %v18
  %v24 = vld [vmem:[%s2] sm:$0xf]
  %v25 = vld [vmem:[%s2 + $0x4] sm:$0xf]
  %v26 = vld [vmem:[%s2 + $0x8] sm:$0xf]
  %v27 = vld [vmem:[%s2 + $0xc] sm:$0xf]
  %v32 = vunpack.c.l.b16 %v24
  %v33 = vunpack.c.l.b16 %v25
  %v34 = vunpack.c.l.b16 %v26
  %v35 = vunpack.c.l.b16 %v27
  %v36 = vpack.c.b16 %v33, %v32
  %v37 = vpack.c.b16 %v35, %v34
  %vm40 = vcmask 261120
  %v42 = vsel %vm40, %v23, 0
  %44 = vmatprep.subr.bf16.mxu0 0
  %45 = vmatpush1.bf16.msra.mxu0 %v36
  %46 = vmatprep.subr.bf16.mxu0 0
  %47 = vmatpush1.bf16.msra.mxu0 %v37
  %48 = vmatprep.subr.bf16.mxu0 0
  %49 = vmatpush1.bf16.msra.mxu0 0
  %50 = vmatprep.subr.bf16.mxu0 0
  %51 = vmatpush1.bf16.msra.mxu0 0
  %52 = vmatprep.subr.bf16.mxu0 0
  %53 = vmatpush1.bf16.msra.mxu0 0
  %54 = vmatprep.subr.bf16.mxu0 0
  %55 = vmatpush1.bf16.msra.mxu0 0
  %56 = vmatprep.subr.bf16.mxu0 0
  %57 = vmatpush1.bf16.msra.mxu0 0
  %58 = vmatprep.subr.bf16.mxu0 0
  %59 = vmatpush1.bf16.msra.mxu0 0
  %60 = vmatprep.subr.bf16.mxu0 0
  %61 = vmatpush1.bf16.msra.mxu0 0
  %62 = vmatprep.subr.bf16.mxu0 0
  %63 = vmatpush1.bf16.msra.mxu0 0
  %64 = vmatprep.subr.bf16.mxu0 0
  %65 = vmatpush1.bf16.msra.mxu0 0
  %66 = vmatprep.subr.bf16.mxu0 0
  %67 = vmatpush1.bf16.msra.mxu0 0
  %68 = vmatprep.subr.bf16.mxu0 0
  %69 = vmatpush1.bf16.msra.mxu0 0
  %70 = vmatprep.subr.bf16.mxu0 0
  %71 = vmatpush1.bf16.msra.mxu0 0
  %72 = vmatprep.subr.bf16.mxu0 0
  %73 = vmatpush1.bf16.msra.mxu0 0
  %74 = vmatprep.subr.bf16.mxu0 0
  %75 = vmatpush1.bf16.msra.mxu0 0
  %76 = vmatprep.mubr.bf16.mxu0 0
  %77 = vmatmul.mubr.bf16.gmra.mrb[0].mxu0 %v42
  %v78 = vpop.f32.mrb[0].mxu0
  %v79 = vadd.f32 0.0, %v78
  %v80 = vpop.f32.mrb[0].mxu0
  %v81 = vpop.f32.mrb[0].mxu0
  %v82 = vpop.f32.mrb[0].mxu0
  %83 = vdwg.mxu0
  %v86 = vunpack.c.l.s4 1966171168
  %v87 = vunpack.c.0.s8 %v86
  %v88 = vlaneseq
  %v89 = vshrl.u32 %v88, 7
  %v90 = vsub.s32 %v87, %v89
  %v91 = vrot.slane %v79, %v90
  %v92 = vcombine.high %v91, %v91
  %v94 = vunpack.c.l.s4 1966171168
  %v95 = vunpack.c.0.s8 %v94
  %v96 = vlaneseq
  %v97 = vshrl.u32 %v96, 7
  %v98 = vsub.s32 %v95, %v97
  %v99 = vrot.slane %v91, %v98
  %v101 = vunpack.c.l.s4 1966171168
  %v102 = vunpack.c.0.s8 %v101
  %v103 = vlaneseq
  %v104 = vshrl.u32 %v103, 7
  %v105 = vsub.s32 %v102, %v104
  %v106 = vrot.slane %v92, %v105
  %v109 = vpack.c.bf16 %v99, %v99
  %v110 = vpack.c.bf16 %v106, %v106
  %v112 = vsel %vm40, %v109, 0
  %v115 = vsel %vm40, %v21, 0
  %117 = vmatprep.subr.bf16.mxu0 0
  %118 = vmatpush1.bf16.xpose.msra.mxu0 %v115
  %119 = vmatprep.subr.bf16.mxu0 0
  %120 = vmatpush1.bf16.xpose.msra.mxu0 0
  %121 = vmatprep.subr.bf16.mxu0 0
  %122 = vmatpush1.bf16.xpose.msra.mxu0 0
  %123 = vmatprep.subr.bf16.mxu0 0
  %124 = vmatpush1.bf16.xpose.msra.mxu0 0
  %125 = vmatprep.subr.bf16.mxu0 0
  %126 = vmatpush1.bf16.xpose.msra.mxu0 0
  %127 = vmatprep.subr.bf16.mxu0 0
  %128 = vmatpush1.bf16.xpose.msra.mxu0 0
  %129 = vmatprep.subr.bf16.mxu0 0
  %130 = vmatpush1.bf16.xpose.msra.mxu0 0
  %131 = vmatprep.subr.bf16.mxu0 0
  %132 = vmatpush1.bf16.xpose.msra.mxu0 0
  %133 = vmatprep.subr.bf16.mxu0 0
  %134 = vmatpush1.bf16.xpose.msra.mxu0 0
  %135 = vmatprep.subr.bf16.mxu0 0
  %136 = vmatpush1.bf16.xpose.msra.mxu0 0
  %137 = vmatprep.subr.bf16.mxu0 0
  %138 = vmatpush1.bf16.xpose.msra.mxu0 0
  %139 = vmatprep.subr.bf16.mxu0 0
  %140 = vmatpush1.bf16.xpose.msra.mxu0 0
  %141 = vmatprep.subr.bf16.mxu0 0
  %142 = vmatpush1.bf16.xpose.msra.mxu0 0
  %143 = vmatprep.subr.bf16.mxu0 0
  %144 = vmatpush1.bf16.xpose.msra.mxu0 0
  %145 = vmatprep.subr.bf16.mxu0 0
  %146 = vmatpush1.bf16.xpose.msra.mxu0 0
  %147 = vmatprep.subr.bf16.mxu0 0
  %148 = vmatpush1.bf16.xpose.msra.mxu0 0
  %149 = vmatprep.mubr.bf16.mxu0 0
  %150 = vmatmul.mubr.bf16.gmra.mrb[0].mxu0 %v112
  %v151 = vpop.f32.mrb[0].mxu0
  %v152 = vadd.f32 0.0, %v151
  %v153 = vpop.f32.mrb[0].mxu0
  %v154 = vpop.f32.mrb[0].mxu0
  %v155 = vpop.f32.mrb[0].mxu0
  %156 = vdwg.mxu0
  %v158 = vsel %vm40, %v110, 0
  %v161 = vsel %vm40, %v22, 0
  %163 = vmatprep.subr.bf16.mxu0 0
  %164 = vmatpush1.bf16.xpose.msra.mxu0 %v161
  %165 = vmatprep.subr.bf16.mxu0 0
  %166 = vmatpush1.bf16.xpose.msra.mxu0 0
  %167 = vmatprep.subr.bf16.mxu0 0
  %168 = vmatpush1.bf16.xpose.msra.mxu0 0
  %169 = vmatprep.subr.bf16.mxu0 0
  %170 = vmatpush1.bf16.xpose.msra.mxu0 0
  %171 = vmatprep.subr.bf16.mxu0 0
  %172 = vmatpush1.bf16.xpose.msra.mxu0 0
  %173 = vmatprep.subr.bf16.mxu0 0
  %174 = vmatpush1.bf16.xpose.msra.mxu0 0
  %175 = vmatprep.subr.bf16.mxu0 0
  %176 = vmatpush1.bf16.xpose.msra.mxu0 0
  %177 = vmatprep.subr.bf16.mxu0 0
  %178 = vmatpush1.bf16.xpose.msra.mxu0 0
  %179 = vmatprep.subr.bf16.mxu0 0
  %180 = vmatpush1.bf16.xpose.msra.mxu0 0
  %181 = vmatprep.subr.bf16.mxu0 0
  %182 = vmatpush1.bf16.xpose.msra.mxu0 0
  %183 = vmatprep.subr.bf16.mxu0 0
  %184 = vmatpush1.bf16.xpose.msra.mxu0 0
  %185 = vmatprep.subr.bf16.mxu0 0
  %186 = vmatpush1.bf16.xpose.msra.mxu0 0
  %187 = vmatprep.subr.bf16.mxu0 0
  %188 = vmatpush1.bf16.xpose.msra.mxu0 0
  %189 = vmatprep.subr.bf16.mxu0 0
  %190 = vmatpush1.bf16.xpose.msra.mxu0 0
  %191 = vmatprep.subr.bf16.mxu0 0
  %192 = vmatpush1.bf16.xpose.msra.mxu0 0
  %193 = vmatprep.subr.bf16.mxu0 0
  %194 = vmatpush1.bf16.xpose.msra.mxu0 0
  %195 = vmatprep.mubr.bf16.mxu0 0
  %196 = vmatmul.mubr.bf16.gmra.mrb[0].mxu0 %v158
  %v197 = vpop.f32.mrb[0].mxu0
  %v198 = vadd.f32 0.0, %v197
  %v199 = vpop.f32.mrb[0].mxu0
  %v200 = vpop.f32.mrb[0].mxu0
  %v201 = vpop.f32.mrb[0].mxu0
  %202 = vdwg.mxu0
  %v203 = vmul.f32 %v152, 0.17677669
  %v204 = vmul.f32 %v198, 0.17677669
  %vm205 = vcmask 24576
  %v206 = vsel %vm205, %v203, -inf
  %207 = vmax.xlane.f32.xlu0 %v206
  %v208 = vpop.xlane.xlu0 %207
  %v209 = vsel %vm205, %v204, -inf
  %210 = vmax.xlane.f32.xlu0 %v209
  %v211 = vpop.xlane.xlu0 %210
  %v212 = vsub.f32 %v203, %v208
  %v213 = vsub.f32 %v204, %v211
  %v214 = vmul.f32 %v212, 1.442695
  %v215 = vpow.pop %v214
  %v216 = vmul.f32 %v213, 1.442695
  %v217 = vpow.pop %v216
  %v218 = vsel %vm205, %v215, 0.0
  %219 = vadd.xlane.f32.xlu0 %v218
  %v220 = vpop.xlane.xlu0 %219
  %v221 = vsel %vm205, %v217, 0.0
  %222 = vadd.xlane.f32.xlu0 %v221
  %v223 = vpop.xlane.xlu0 %222
  %v224 = vrcp.pop %v220
  %v225 = vrcp.pop %v223
  %v226 = vmul.f32 %v215, %v224
  %v227 = vmul.f32 %v217, %v225
  %v228 = vpack.c.bf16 %v226, %v226
  %v229 = vpack.c.bf16 %v227, %v227
  %vm230 = vcmask 31744
  %v232 = vsel %vm230, %v228, 0
  %vm234 = vcmask 1041408
  %v235 = vsel %vm234, %v21, 0
  %237 = vmatprep.subr.bf16.mxu0 0
  %238 = vmatpush1.bf16.msra.mxu0 %v235
  %239 = vmatprep.subr.bf16.mxu0 0
  %240 = vmatpush1.bf16.msra.mxu0 0
  %241 = vmatprep.subr.bf16.mxu0 0
  %242 = vmatpush1.bf16.msra.mxu0 0
  %243 = vmatprep.subr.bf16.mxu0 0
  %244 = vmatpush1.bf16.msra.mxu0 0
  %245 = vmatprep.subr.bf16.mxu0 0
  %246 = vmatpush1.bf16.msra.mxu0 0
  %247 = vmatprep.subr.bf16.mxu0 0
  %248 = vmatpush1.bf16.msra.mxu0 0
  %249 = vmatprep.subr.bf16.mxu0 0
  %250 = vmatpush1.bf16.msra.mxu0 0
  %251 = vmatprep.subr.bf16.mxu0 0
  %252 = vmatpush1.bf16.msra.mxu0 0
  %253 = vmatprep.subr.bf16.mxu0 0
  %254 = vmatpush1.bf16.msra.mxu0 0
  %255 = vmatprep.subr.bf16.mxu0 0
  %256 = vmatpush1.bf16.msra.mxu0 0
  %257 = vmatprep.subr.bf16.mxu0 0
  %258 = vmatpush1.bf16.msra.mxu0 0
  %259 = vmatprep.subr.bf16.mxu0 0
  %260 = vmatpush1.bf16.msra.mxu0 0
  %261 = vmatprep.subr.bf16.mxu0 0
  %262 = vmatpush1.bf16.msra.mxu0 0
  %263 = vmatprep.subr.bf16.mxu0 0
  %264 = vmatpush1.bf16.msra.mxu0 0
  %265 = vmatprep.subr.bf16.mxu0 0
  %266 = vmatpush1.bf16.msra.mxu0 0
  %267 = vmatprep.subr.bf16.mxu0 0
  %268 = vmatpush1.bf16.msra.mxu0 0
  %269 = vmatprep.mubr.bf16.mxu0 0
  %270 = vmatmul.mubr.bf16.gmra.mrb[0].mxu0 %v232
  %v271 = vpop.f32.mrb[0].mxu0
  %v272 = vadd.f32 0.0, %v271
  %v273 = vpop.f32.mrb[0].mxu0
  %v274 = vpop.f32.mrb[0].mxu0
  %v275 = vpop.f32.mrb[0].mxu0
  %276 = vdwg.mxu0
  %v278 = vsel %vm230, %v229, 0
  %v280 = vsel %vm234, %v22, 0
  %282 = vmatprep.subr.bf16.mxu0 0
  %283 = vmatpush1.bf16.msra.mxu0 %v280
  %284 = vmatprep.subr.bf16.mxu0 0
  %285 = vmatpush1.bf16.msra.mxu0 0
  %286 = vmatprep.subr.bf16.mxu0 0
  %287 = vmatpush1.bf16.msra.mxu0 0
  %288 = vmatprep.subr.bf16.mxu0 0
  %289 = vmatpush1.bf16.msra.mxu0 0
  %290 = vmatprep.subr.bf16.mxu0 0
  %291 = vmatpush1.bf16.msra.mxu0 0
  %292 = vmatprep.subr.bf16.mxu0 0
  %293 = vmatpush1.bf16.msra.mxu0 0
  %294 = vmatprep.subr.bf16.mxu0 0
  %295 = vmatpush1.bf16.msra.mxu0 0
  %296 = vmatprep.subr.bf16.mxu0 0
  %297 = vmatpush1.bf16.msra.mxu0 0
  %298 = vmatprep.subr.bf16.mxu0 0
  %299 = vmatpush1.bf16.msra.mxu0 0
  %300 = vmatprep.subr.bf16.mxu0 0
  %301 = vmatpush1.bf16.msra.mxu0 0
  %302 = vmatprep.subr.bf16.mxu0 0
  %303 = vmatpush1.bf16.msra.mxu0 0
  %304 = vmatprep.subr.bf16.mxu0 0
  %305 = vmatpush1.bf16.msra.mxu0 0
  %306 = vmatprep.subr.bf16.mxu0 0
  %307 = vmatpush1.bf16.msra.mxu0 0
  %308 = vmatprep.subr.bf16.mxu0 0
  %309 = vmatpush1.bf16.msra.mxu0 0
  %310 = vmatprep.subr.bf16.mxu0 0
  %311 = vmatpush1.bf16.msra.mxu0 0
  %312 = vmatprep.subr.bf16.mxu0 0
  %313 = vmatpush1.bf16.msra.mxu0 0
  %314 = vmatprep.mubr.bf16.mxu0 0
  %315 = vmatmul.mubr.bf16.gmra.mrb[0].mxu0 %v278
  %v316 = vpop.f32.mrb[0].mxu0
  %v317 = vadd.f32 0.0, %v316
  %v318 = vpop.f32.mrb[0].mxu0
  %v319 = vpop.f32.mrb[0].mxu0
  %v320 = vpop.f32.mrb[0].mxu0
  %321 = vdwg.mxu0
  %v322 = vpack.c.bf16 %v272, %v272
  %v323 = vpack.c.bf16 %v317, %v317
  %v324 = vld [vmem:[%s3] sm:$0xf]
  %v325 = vld [vmem:[%s3 + $0x4] sm:$0xf]
  %v326 = vld [vmem:[%s3 + $0x8] sm:$0xf]
  %v327 = vld [vmem:[%s3 + $0xc] sm:$0xf]
  %v330 = vunpack.c.l.b16 %v322
  %v331 = vunpack.c.l.b16 %v323
  %v332 = vrot.slane %v331, 7
  %vm333 = vcmask 1041409
  %v334 = vsel %vm333, %v332, %v330
  %v335 = vpack.c.b16 %v334, %v334
  %v340 = vunpack.c.l.b16 %v324
  %v341 = vunpack.c.l.b16 %v325
  %v342 = vunpack.c.l.b16 %v326
  %v343 = vunpack.c.l.b16 %v327
  %v344 = vpack.c.b16 %v341, %v340
  %v345 = vpack.c.b16 %v343, %v342
  %v349 = vsel %vm40, %v335, 0
  %351 = vmatprep.subr.bf16.mxu0 0
  %352 = vmatpush1.bf16.msra.mxu0 %v344
  %353 = vmatprep.subr.bf16.mxu0 0
  %354 = vmatpush1.bf16.msra.mxu0 %v345
  %355 = vmatprep.subr.bf16.mxu0 0
  %356 = vmatpush1.bf16.msra.mxu0 0
  %357 = vmatprep.subr.bf16.mxu0 0
  %358 = vmatpush1.bf16.msra.mxu0 0
  %359 = vmatprep.subr.bf16.mxu0 0
  %360 = vmatpush1.bf16.msra.mxu0 0
  %361 = vmatprep.subr.bf16.mxu0 0
  %362 = vmatpush1.bf16.msra.mxu0 0
  %363 = vmatprep.subr.bf16.mxu0 0
  %364 = vmatpush1.bf16.msra.mxu0 0
  %365 = vmatprep.subr.bf16.mxu0 0
  %366 = vmatpush1.bf16.msra.mxu0 0
  %367 = vmatprep.subr.bf16.mxu0 0
  %368 = vmatpush1.bf16.msra.mxu0 0
  %369 = vmatprep.subr.bf16.mxu0 0
  %370 = vmatpush1.bf16.msra.mxu0 0
  %371 = vmatprep.subr.bf16.mxu0 0
  %372 = vmatpush1.bf16.msra.mxu0 0
  %373 = vmatprep.subr.bf16.mxu0 0
  %374 = vmatpush1.bf16.msra.mxu0 0
  %375 = vmatprep.subr.bf16.mxu0 0
  %376 = vmatpush1.bf16.msra.mxu0 0
  %377 = vmatprep.subr.bf16.mxu0 0
  %378 = vmatpush1.bf16.msra.mxu0 0
  %379 = vmatprep.subr.bf16.mxu0 0
  %380 = vmatpush1.bf16.msra.mxu0 0
  %381 = vmatprep.subr.bf16.mxu0 0
  %382 = vmatpush1.bf16.msra.mxu0 0
  %383 = vmatprep.mubr.bf16.mxu0 0
  %384 = vmatmul.mubr.bf16.gmra.mrb[0].mxu0 %v349
  %v385 = vpop.f32.mrb[0].mxu0
  %v386 = vadd.f32 %v18, %v385
  %v387 = vpop.f32.mrb[0].mxu0
  %v388 = vpop.f32.mrb[0].mxu0
  %v389 = vpop.f32.mrb[0].mxu0
  %390 = vdwg.mxu0
  %vm391 = vcmask 254976
  %392 = vst.msk [vmem:[%s4] sm:$0x3] %vm391, %v386
  // Predicated region
  $region18: #{_lambda_.10} parent=0 // pred_check
    _
  $region19: #{_lambda_.10} parent=0 // pred_check_branch
    %394 = sbr.rel (0) target = $region21
  $region20: #{_lambda_.10} parent=0 // pred_region
    _
  $region21: #{_lambda_.10} parent=0 // pred_fallthru
    _
  // Predicated region
  $region22: #{_lambda_.10} parent=0 // pred_check
    _
  $region23: #{_lambda_.10} parent=0 // pred_check_branch
    %396 = sbr.rel (0) target = $region25
  $region24: #{_lambda_.10} parent=0 // pred_region
    _
  $region25: #{_lambda_.10} parent=0 // pred_fallthru
    _

// kernel: _lambda_.12
$region0: #{_lambda_.12}
  #allocation0 [shape = 'u32[]', space=smem, size = 0x4, offset = 0x4, fixed_abs, tag = 'smem constant byte address 0x4 - core index']
  #allocation1 [shape = 'u32[144,128]{1,0:T(1,128)}', space=vmem, size = 0x12000, scoped, tag = 'internal scratch']
  #allocation2 [shape = 'f32[16,32]{1,0:T(8,128)}', space=vmem, size = 0x2000, scoped, tag = 'scratch operand']
  %s0 = inlined_call_operand.vmem [shape: f32[16,128], index: 0, kind: input, shape index: {}]
  %s1 = inlined_call_operand.vmem [shape: bf16[128,32], index: 1, kind: input, shape index: {}]
  %s2 = inlined_call_operand.vmem [shape: f32[16,32], index: 2, kind: output, shape index: {}]
  %s3 = sld [smem:[#allocation0]]
  $region26: #{_lambda_.12} parent=0
    _
  %s5 = ssub.s32 1, %s3
  %s6 = scalar_select 0, %s5, %s3
  // Predicated region
  $region2: #{_lambda_.12} parent=0 // pred_check
    _
  $region3: #{_lambda_.12} parent=0 // pred_check_branch
    %8 = sbr.rel (0) target = $region5
  $region4: #{_lambda_.12} parent=0 // pred_region
    _
  $region5: #{_lambda_.12} parent=0 // pred_fallthru
    _
  // Predicated region
  $region6: #{_lambda_.12} parent=0 // pred_check
    _
  $region7: #{_lambda_.12} parent=0 // pred_check_branch
    %10 = sbr.rel (0) target = $region9
  $region8: #{_lambda_.12} parent=0 // pred_region
    _
  $region9: #{_lambda_.12} parent=0 // pred_fallthru
    _
  %p12 = scmp.eq.s32.totalorder 0, 0
  // Predicated region
  $region10: #{_lambda_.12} parent=0 // pred_check
    %p13 = pneg %p12
  $region11: #{_lambda_.12} parent=0 // pred_check_branch
    %15 = sbr.rel (%p13) target = $region13
  $region12: #{_lambda_.12} parent=0 // pred_region
    %vm16 = vcmask 261120
    %17 = vst.msk [vmem:[#allocation2] sm:$0xff] %vm16, 0.0
    %18 = vst.msk [vmem:[#allocation2 + $0x8] sm:$0xff] %vm16, 0.0
  $region13: #{_lambda_.12} parent=0 // pred_fallthru
    _
  %v19 = vld [vmem:[#allocation2] sm:$0xff]
  %v20 = vld [vmem:[#allocation2 + $0x8] sm:$0xff]
  %v21 = vld [vmem:[%s0] sm:$0xff]
  %v22 = vld [vmem:[%s0 + $0x8] sm:$0xff]
  %v23 = vpack.c.bf16 %v22, %v21
  %v24 = vld [vmem:[%s1] sm:$0xf]
  %v25 = vld [vmem:[%s1 + $0x4] sm:$0xf]
  %v26 = vld [vmem:[%s1 + $0x8] sm:$0xf]
  %v27 = vld [vmem:[%s1 + $0xc] sm:$0xf]
  %v28 = vld [vmem:[%s1 + $0x10] sm:$0xf]
  %v29 = vld [vmem:[%s1 + $0x14] sm:$0xf]
  %v30 = vld [vmem:[%s1 + $0x18] sm:$0xf]
  %v31 = vld [vmem:[%s1 + $0x1c] sm:$0xf]
  %v32 = vld [vmem:[%s1 + $0x20] sm:$0xf]
  %v33 = vld [vmem:[%s1 + $0x24] sm:$0xf]
  %v34 = vld [vmem:[%s1 + $0x28] sm:$0xf]
  %v35 = vld [vmem:[%s1 + $0x2c] sm:$0xf]
  %v36 = vld [vmem:[%s1 + $0x30] sm:$0xf]
  %v37 = vld [vmem:[%s1 + $0x34] sm:$0xf]
  %v38 = vld [vmem:[%s1 + $0x38] sm:$0xf]
  %v39 = vld [vmem:[%s1 + $0x3c] sm:$0xf]
  %v56 = vunpack.c.l.b16 %v24
  %v57 = vunpack.c.l.b16 %v25
  %v58 = vunpack.c.l.b16 %v26
  %v59 = vunpack.c.l.b16 %v27
  %v60 = vunpack.c.l.b16 %v28
  %v61 = vunpack.c.l.b16 %v29
  %v62 = vunpack.c.l.b16 %v30
  %v63 = vunpack.c.l.b16 %v31
  %v64 = vunpack.c.l.b16 %v32
  %v65 = vunpack.c.l.b16 %v33
  %v66 = vunpack.c.l.b16 %v34
  %v67 = vunpack.c.l.b16 %v35
  %v68 = vunpack.c.l.b16 %v36
  %v69 = vunpack.c.l.b16 %v37
  %v70 = vunpack.c.l.b16 %v38
  %v71 = vunpack.c.l.b16 %v39
  %v72 = vpack.c.b16 %v57, %v56
  %v73 = vpack.c.b16 %v59, %v58
  %v74 = vpack.c.b16 %v61, %v60
  %v75 = vpack.c.b16 %v63, %v62
  %v76 = vpack.c.b16 %v65, %v64
  %v77 = vpack.c.b16 %v67, %v66
  %v78 = vpack.c.b16 %v69, %v68
  %v79 = vpack.c.b16 %v71, %v70
  %88 = vmatprep.subr.bf16.mxu0 0
  %89 = vmatpush1.bf16.msra.mxu0 %v72
  %90 = vmatprep.subr.bf16.mxu0 0
  %91 = vmatpush1.bf16.msra.mxu0 %v73
  %92 = vmatprep.subr.bf16.mxu0 0
  %93 = vmatpush1.bf16.msra.mxu0 %v74
  %94 = vmatprep.subr.bf16.mxu0 0
  %95 = vmatpush1.bf16.msra.mxu0 %v75
  %96 = vmatprep.subr.bf16.mxu0 0
  %97 = vmatpush1.bf16.msra.mxu0 %v76
  %98 = vmatprep.subr.bf16.mxu0 0
  %99 = vmatpush1.bf16.msra.mxu0 %v77
  %100 = vmatprep.subr.bf16.mxu0 0
  %101 = vmatpush1.bf16.msra.mxu0 %v78
  %102 = vmatprep.subr.bf16.mxu0 0
  %103 = vmatpush1.bf16.msra.mxu0 %v79
  %104 = vmatprep.subr.bf16.mxu0 0
  %105 = vmatpush1.bf16.msra.mxu0 0
  %106 = vmatprep.subr.bf16.mxu0 0
  %107 = vmatpush1.bf16.msra.mxu0 0
  %108 = vmatprep.subr.bf16.mxu0 0
  %109 = vmatpush1.bf16.msra.mxu0 0
  %110 = vmatprep.subr.bf16.mxu0 0
  %111 = vmatpush1.bf16.msra.mxu0 0
  %112 = vmatprep.subr.bf16.mxu0 0
  %113 = vmatpush1.bf16.msra.mxu0 0
  %114 = vmatprep.subr.bf16.mxu0 0
  %115 = vmatpush1.bf16.msra.mxu0 0
  %116 = vmatprep.subr.bf16.mxu0 0
  %117 = vmatpush1.bf16.msra.mxu0 0
  %118 = vmatprep.subr.bf16.mxu0 0
  %119 = vmatpush1.bf16.msra.mxu0 0
  %120 = vmatprep.mubr.bf16.mxu0 0
  %121 = vmatmul.mubr.bf16.gmra.mrb[0].mxu0 %v23
  %v122 = vpop.f32.mrb[0].mxu0
  %v123 = vadd.f32 0.0, %v122
  %v124 = vpop.f32.mrb[0].mxu0
  %v125 = vpop.f32.mrb[0].mxu0
  %v126 = vadd.f32 0.0, %v125
  %v127 = vpop.f32.mrb[0].mxu0
  %128 = vdwg.mxu0
  %v129 = vadd.f32 %v19, %v123
  %v130 = vadd.f32 %v20, %v126
  %vm131 = vcmask 261120
  %132 = vst.msk [vmem:[#allocation2] sm:$0xff] %vm131, %v129
  %133 = vst.msk [vmem:[#allocation2 + $0x8] sm:$0xff] %vm131, %v130
  // Predicated region
  $region14: #{_lambda_.12} parent=0 // pred_check
    %p134 = pneg %p12
  $region15: #{_lambda_.12} parent=0 // pred_check_branch
    %136 = sbr.rel (%p134) target = $region17
  $region16: #{_lambda_.12} parent=0 // pred_region
    %v137 = vld [vmem:[#allocation2] sm:$0xff]
    %v138 = vld [vmem:[#allocation2 + $0x8] sm:$0xff]
    %139 = vst.msk [vmem:[%s2] sm:$0xff] %vm131, %v137
    %140 = vst.msk [vmem:[%s2 + $0x8] sm:$0xff] %vm131, %v138
  $region17: #{_lambda_.12} parent=0 // pred_fallthru
    _
  // Predicated region
  $region18: #{_lambda_.12} parent=0 // pred_check
    _
  $region19: #{_lambda_.12} parent=0 // pred_check_branch
    %142 = sbr.rel (0) target = $region21
  $region20: #{_lambda_.12} parent=0 // pred_region
    _
  $region21: #{_lambda_.12} parent=0 // pred_fallthru
    _
  // Predicated region
  $region22: #{_lambda_.12} parent=0 // pred_check
    _
  $region23: #{_lambda_.12} parent=0 // pred_check_branch
    %144 = sbr.rel (0) target = $region25
  $region24: #{_lambda_.12} parent=0 // pred_region
    _
  $region25: #{_lambda_.12} parent=0 // pred_fallthru
    _

// kernel: _lambda_.13
$region0: #{_lambda_.13}
  #allocation0 [shape = 'u32[]', space=smem, size = 0x4, offset = 0x4, fixed_abs, tag = 'smem constant byte address 0x4 - core index']
  #allocation1 [shape = 'u32[144,128]{1,0:T(1,128)}', space=vmem, size = 0x12000, scoped, tag = 'internal scratch']
  %s0 = inlined_call_operand.vmem [shape: f32[2,32], index: 0, kind: input, shape index: {}]
  %s1 = inlined_call_operand.vmem [shape: f32[2,8,32], index: 1, kind: input, shape index: {}]
  %s2 = inlined_call_operand.vmem [shape: bf16[32,16], index: 2, kind: input, shape index: {}]
  %s3 = inlined_call_operand.vmem [shape: f32[1,16], index: 3, kind: input, shape index: {}]
  %s4 = inlined_call_operand.vmem [shape: f32[1,16], index: 4, kind: input, shape index: {}]
  %s5 = inlined_call_operand.vmem [shape: bf16[32,32], index: 5, kind: input, shape index: {}]
  %s6 = inlined_call_operand.vmem [shape: bf16[32,32], index: 6, kind: input, shape index: {}]
  %s7 = inlined_call_operand.vmem [shape: f32[1,32], index: 7, kind: input, shape index: {}]
  %s8 = inlined_call_operand.vmem [shape: f32[2,32], index: 8, kind: output, shape index: {0}]
  %s9 = inlined_call_operand.vmem [shape: f32[2,32], index: 9, kind: output, shape index: {1}]
  %10 = xla_tuple %s8, %s9
  %s11 = sld [smem:[#allocation0]]
  $region50: #{_lambda_.13} parent=0
    _
  %s13 = ssub.s32 1, %s11
  %s14 = scalar_select 0, %s13, %s11
  // Predicated region
  $region2: #{_lambda_.13} parent=0 // pred_check
    _
  $region3: #{_lambda_.13} parent=0 // pred_check_branch
    %16 = sbr.rel (0) target = $region5
  $region4: #{_lambda_.13} parent=0 // pred_region
    _
  $region5: #{_lambda_.13} parent=0 // pred_fallthru
    _
  // Predicated region
  $region6: #{_lambda_.13} parent=0 // pred_check
    _
  $region7: #{_lambda_.13} parent=0 // pred_check_branch
    %18 = sbr.rel (0) target = $region9
  $region8: #{_lambda_.13} parent=0 // pred_region
    _
  $region9: #{_lambda_.13} parent=0 // pred_fallthru
    _
  // Predicated region
  $region10: #{_lambda_.13} parent=0 // pred_check
    _
  $region11: #{_lambda_.13} parent=0 // pred_check_branch
    %20 = sbr.rel (0) target = $region13
  $region12: #{_lambda_.13} parent=0 // pred_region
    _
  $region13: #{_lambda_.13} parent=0 // pred_fallthru
    _
  // Predicated region
  $region14: #{_lambda_.13} parent=0 // pred_check
    _
  $region15: #{_lambda_.13} parent=0 // pred_check_branch
    %22 = sbr.rel (0) target = $region17
  $region16: #{_lambda_.13} parent=0 // pred_region
    _
  $region17: #{_lambda_.13} parent=0 // pred_fallthru
    _
  // Predicated region
  $region18: #{_lambda_.13} parent=0 // pred_check
    _
  $region19: #{_lambda_.13} parent=0 // pred_check_branch
    %24 = sbr.rel (0) target = $region21
  $region20: #{_lambda_.13} parent=0 // pred_region
    _
  $region21: #{_lambda_.13} parent=0 // pred_fallthru
    _
  // Predicated region
  $region22: #{_lambda_.13} parent=0 // pred_check
    _
  $region23: #{_lambda_.13} parent=0 // pred_check_branch
    %26 = sbr.rel (0) target = $region25
  $region24: #{_lambda_.13} parent=0 // pred_region
    _
  $region25: #{_lambda_.13} parent=0 // pred_fallthru
    _
  // Predicated region
  $region26: #{_lambda_.13} parent=0 // pred_check
    _
  $region27: #{_lambda_.13} parent=0 // pred_check_branch
    %28 = sbr.rel (0) target = $region29
  $region28: #{_lambda_.13} parent=0 // pred_region
    _
  $region29: #{_lambda_.13} parent=0 // pred_fallthru
    _
  // Predicated region
  $region30: #{_lambda_.13} parent=0 // pred_check
    _
  $region31: #{_lambda_.13} parent=0 // pred_check_branch
    %30 = sbr.rel (0) target = $region33
  $region32: #{_lambda_.13} parent=0 // pred_region
    _
  $region33: #{_lambda_.13} parent=0 // pred_fallthru
    _
  %v32 = vld [vmem:[%s0] sm:$0x3]
  %v33 = vmul.f32 %v32, %v32
  %vm34 = vcmask 254976
  %v35 = vsel %vm34, %v33, 0.0
  %36 = vadd.xlane.f32.xlu0 %v35
  %v37 = vpop.xlane.xlu0 %36
  %v38 = vadd.f32 %v37, 1e-12
  %v39 = vrsqrt.pop %v38
  %v40 = vmul.f32 %v32, %v39
  %v41 = vld [vmem:[%s1] sm:$0xff]
  %v42 = vld [vmem:[%s1 + $0x8] sm:$0xff]
  %v43 = vmul.f32 %v41, %v41
  %v44 = vmul.f32 %v42, %v42
  %vm45 = vcmask 261120
  %v46 = vsel %vm45, %v43, 0.0
  %47 = vadd.xlane.f32.xlu0 %v46
  %v48 = vpop.xlane.xlu0 %47
  %v49 = vsel %vm45, %v44, 0.0
  %50 = vadd.xlane.f32.xlu0 %v49
  %v51 = vpop.xlane.xlu0 %50
  %v52 = vadd.f32 %v48, 1e-12
  %v53 = vadd.f32 %v51, 1e-12
  %v54 = vrsqrt.pop %v52
  %v55 = vrsqrt.pop %v53
  %v56 = vmul.f32 %v41, %v54
  %v57 = vmul.f32 %v42, %v55
  %v60 = vunpack.c.l.s4 1966171168
  %v61 = vunpack.c.0.s8 %v60
  %v62 = vlaneseq
  %v63 = vshrl.u32 %v62, 7
  %v64 = vsub.s32 %v61, %v63
  %v65 = vrot.slane %v40, %v64
  %v66 = vcombine.high %v65, %v65
  %v68 = vunpack.c.l.s4 1966171168
  %v69 = vunpack.c.0.s8 %v68
  %v70 = vlaneseq
  %v71 = vshrl.u32 %v70, 7
  %v72 = vsub.s32 %v69, %v71
  %v73 = vrot.slane %v65, %v72
  %v75 = vunpack.c.l.s4 1966171168
  %v76 = vunpack.c.0.s8 %v75
  %v77 = vlaneseq
  %v78 = vshrl.u32 %v77, 7
  %v79 = vsub.s32 %v76, %v78
  %v80 = vrot.slane %v66, %v79
  %v81 = vlaneseq
  %v82 = vshrl.u32 %v81, 7
  %v83 = vsub.s32 0, %v82
  %v84 = vrot.slane %v73, %v83
  %v85 = vlaneseq
  %v86 = vshrl.u32 %v85, 7
  %v87 = vsub.s32 0, %v86
  %v88 = vrot.slane %v80, %v87
  %v91 = vadd.f32 %v56, %v84
  %v92 = vadd.f32 %v57, %v88
  %v93 = vpack.c.bf16 %v92, %v91
  %v94 = vld [vmem:[%s2] sm:$0xf]
  %v95 = vld [vmem:[%s2 + $0x4] sm:$0xf]
  %v96 = vld [vmem:[%s2 + $0x8] sm:$0xf]
  %v97 = vld [vmem:[%s2 + $0xc] sm:$0xf]
  %v98 = vld [vmem:[%s3] sm:$0x1]
  %v100 = vlaneseq
  %v101 = vshrl.u32 %v100, 7
  %v102 = vsub.s32 0, %v101
  %v103 = vrot.slane %v98, %v102
  %v109 = vunpack.c.l.b16 %v94
  %v110 = vunpack.c.l.b16 %v95
  %v111 = vunpack.c.l.b16 %v96
  %v112 = vunpack.c.l.b16 %v97
  %v113 = vpack.c.b16 %v110, %v109
  %v114 = vpack.c.b16 %v112, %v111
  %v118 = vsel %vm45, %v93, 0
  %120 = vmatprep.subr.bf16.mxu0 0
  %121 = vmatpush1.bf16.msra.mxu0 %v113
  %122 = vmatprep.subr.bf16.mxu0 0
  %123 = vmatpush1.bf16.msra.mxu0 %v114
  %124 = vmatprep.subr.bf16.mxu0 0
  %125 = vmatpush1.bf16.msra.mxu0 0
  %126 = vmatprep.subr.bf16.mxu0 0
  %127 = vmatpush1.bf16.msra.mxu0 0
  %128 = vmatprep.subr.bf16.mxu0 0
  %129 = vmatpush1.bf16.msra.mxu0 0
  %130 = vmatprep.subr.bf16.mxu0 0
  %131 = vmatpush1.bf16.msra.mxu0 0
  %132 = vmatprep.subr.bf16.mxu0 0
  %133 = vmatpush1.bf16.msra.mxu0 0
  %134 = vmatprep.subr.bf16.mxu0 0
  %135 = vmatpush1.bf16.msra.mxu0 0
  %136 = vmatprep.subr.bf16.mxu0 0
  %137 = vmatpush1.bf16.msra.mxu0 0
  %138 = vmatprep.subr.bf16.mxu0 0
  %139 = vmatpush1.bf16.msra.mxu0 0
  %140 = vmatprep.subr.bf16.mxu0 0
  %141 = vmatpush1.bf16.msra.mxu0 0
  %142 = vmatprep.subr.bf16.mxu0 0
  %143 = vmatpush1.bf16.msra.mxu0 0
  %144 = vmatprep.subr.bf16.mxu0 0
  %145 = vmatpush1.bf16.msra.mxu0 0
  %146 = vmatprep.subr.bf16.mxu0 0
  %147 = vmatpush1.bf16.msra.mxu0 0
  %148 = vmatprep.subr.bf16.mxu0 0
  %149 = vmatpush1.bf16.msra.mxu0 0
  %150 = vmatprep.subr.bf16.mxu0 0
  %151 = vmatpush1.bf16.msra.mxu0 0
  %152 = vmatprep.mubr.bf16.mxu0 0
  %153 = vmatmul.mubr.bf16.gmra.mrb[0].mxu0 %v118
  %v154 = vpop.f32.mrb[0].mxu0
  %v155 = vadd.f32 %v103, %v154
  %v156 = vpop.f32.mrb[0].mxu0
  %v157 = vpop.f32.mrb[0].mxu0
  %v158 = vadd.f32 %v103, %v157
  %v159 = vpop.f32.mrb[0].mxu0
  %160 = vdwg.mxu0
  %v161 = vtanh.pop %v155
  %v162 = vtanh.pop %v158
  %v163 = vld [vmem:[%s4] sm:$0x1]
  %v165 = vlaneseq
  %v166 = vshrl.u32 %v165, 7
  %v167 = vsub.s32 0, %v166
  %v168 = vrot.slane %v163, %v167
  %v170 = vmul.f32 %v161, %v168
  %v171 = vmul.f32 %v162, %v168
  %vm172 = vcmask 130048
  %v173 = vsel %vm172, %v170, 0.0
  %174 = vadd.xlane.f32.xlu0 %v173
  %v175 = vpop.xlane.xlu0 %174
  %v176 = vsel %vm172, %v171, 0.0
  %177 = vadd.xlane.f32.xlu0 %v176
  %v178 = vpop.xlane.xlu0 %177
  %v181 = vlaneseq
  %v182 = vand.u32 %v181, 127
  %v183 = vlaneseq
  %v184 = vshrl.u32 %v183, 7
  %v185 = vsub.s32 %v182, %v184
  %v186 = vrot.slane %v175, %v185
  %v187 = vlaneseq
  %v188 = vshrl.u32 %v187, 7
  %v189 = vsub.s32 %v182, %v188
  %v190 = vrot.slane %v178, %v189
  %vm191 = vcmask 1041409
  %v192 = vsel %vm191, %v190, %v186
  %vm194 = vcmask 58368
  %v195 = vsel %vm194, %v192, -inf
  %196 = vmax.xlane.f32.xlu0 %v195
  %v197 = vpop.xlane.xlu0 %196
  %v199 = vlaneseq
  %v200 = vshrl.u32 %v199, 7
  %v201 = vsub.s32 0, %v200
  %v202 = vrot.slane %v197, %v201
  %v203 = vlaneseq
  %v204 = vshrl.u32 %v203, 7
  %v205 = vsub.s32 1, %v204
  %v206 = vrot.slane %v197, %v205
  %v209 = vsub.f32 %v175, %v202
  %v210 = vsub.f32 %v178, %v206
  %v211 = vmul.f32 %v209, 1.442695
  %v212 = vpow.pop %v211
  %v213 = vmul.f32 %v210, 1.442695
  %v214 = vpow.pop %v213
  %217 = vset.pattern.permute.xlu0 0
  %218 = vperm.xlu0 %217, %v212
  %v219 = vpop.permute.xlu0 %218
  %220 = vset.pattern.permute.xlu0 0
  %221 = vperm.xlu0 %220, %v214
  %v222 = vpop.permute.xlu0 %221
  %v223 = vlaneseq
  %v224 = vshrl.u32 %v223, 7
  %v225 = vsub.s32 %v182, %v224
  %v226 = vrot.slane %v219, %v225
  %v227 = vlaneseq
  %v228 = vshrl.u32 %v227, 7
  %v229 = vsub.s32 %v182, %v228
  %v230 = vrot.slane %v222, %v229
  %v231 = vsel %vm191, %v230, %v226
  %v233 = vsel %vm194, %v231, 0.0
  %234 = vadd.xlane.f32.xlu0 %v233
  %v235 = vpop.xlane.xlu0 %234
  %v236 = vrcp.pop %v235
  %v238 = vlaneseq
  %v239 = vshrl.u32 %v238, 7
  %v240 = vsub.s32 0, %v239
  %v241 = vrot.slane %v236, %v240
  %v242 = vlaneseq
  %v243 = vshrl.u32 %v242, 7
  %v244 = vsub.s32 1, %v243
  %v245 = vrot.slane %v236, %v244
  %v248 = vmul.f32 %v212, %v241
  %v249 = vmul.f32 %v214, %v245
  %v250 = vpack.c.bf16 %v248, %v248
  %v251 = vpack.c.bf16 %v249, %v249
  %v252 = vpack.c.bf16 %v56, %v56
  %v253 = vpack.c.bf16 %v57, %v57
  %v255 = vunpack.c.l.b16 %v250
  %256 = vset.pattern.permute.xlu0 0
  %257 = vperm.xlu0 %256, %v255
  %v258 = vpop.permute.xlu0 %257
  %v259 = vlaneseq
  %v260 = vshrl.u32 %v259, 7
  %v261 = vsub.s32 %v182, %v260
  %v262 = vrot.slane %v258, %v261
  %v263 = vpack.c.b16 %v262, %v262
  %vm264 = vcmask 64512
  %v266 = vsel %vm264, %v263, 0
  %vm268 = vcmask 1043456
  %v270 = vsel %vm268, %v252, 0
  %272 = vmatprep.subr.bf16.mxu0 0
  %273 = vmatpush1.bf16.msra.mxu0 %v270
  %274 = vmatprep.subr.bf16.mxu0 0
  %275 = vmatpush1.bf16.msra.mxu0 0
  %276 = vmatprep.subr.bf16.mxu0 0
  %277 = vmatpush1.bf16.msra.mxu0 0
  %278 = vmatprep.subr.bf16.mxu0 0
  %279 = vmatpush1.bf16.msra.mxu0 0
  %280 = vmatprep.subr.bf16.mxu0 0
  %281 = vmatpush1.bf16.msra.mxu0 0
  %282 = vmatprep.subr.bf16.mxu0 0
  %283 = vmatpush1.bf16.msra.mxu0 0
  %284 = vmatprep.subr.bf16.mxu0 0
  %285 = vmatpush1.bf16.msra.mxu0 0
  %286 = vmatprep.subr.bf16.mxu0 0
  %287 = vmatpush1.bf16.msra.mxu0 0
  %288 = vmatprep.subr.bf16.mxu0 0
  %289 = vmatpush1.bf16.msra.mxu0 0
  %290 = vmatprep.subr.bf16.mxu0 0
  %291 = vmatpush1.bf16.msra.mxu0 0
  %292 = vmatprep.subr.bf16.mxu0 0
  %293 = vmatpush1.bf16.msra.mxu0 0
  %294 = vmatprep.subr.bf16.mxu0 0
  %295 = vmatpush1.bf16.msra.mxu0 0
  %296 = vmatprep.subr.bf16.mxu0 0
  %297 = vmatpush1.bf16.msra.mxu0 0
  %298 = vmatprep.subr.bf16.mxu0 0
  %299 = vmatpush1.bf16.msra.mxu0 0
  %300 = vmatprep.subr.bf16.mxu0 0
  %301 = vmatpush1.bf16.msra.mxu0 0
  %302 = vmatprep.subr.bf16.mxu0 0
  %303 = vmatpush1.bf16.msra.mxu0 0
  %304 = vmatprep.mubr.bf16.mxu0 0
  %305 = vmatmul.mubr.bf16.gmra.mrb[0].mxu0 %v266
  %v306 = vpop.f32.mrb[0].mxu0
  %v307 = vadd.f32 0.0, %v306
  %v308 = vpop.f32.mrb[0].mxu0
  %v309 = vpop.f32.mrb[0].mxu0
  %v310 = vpop.f32.mrb[0].mxu0
  %311 = vdwg.mxu0
  %v313 = vunpack.c.l.b16 %v251
  %314 = vset.pattern.permute.xlu0 0
  %315 = vperm.xlu0 %314, %v313
  %v316 = vpop.permute.xlu0 %315
  %v317 = vlaneseq
  %v318 = vshrl.u32 %v317, 7
  %v319 = vsub.s32 %v182, %v318
  %v320 = vrot.slane %v316, %v319
  %v321 = vpack.c.b16 %v320, %v320
  %v323 = vsel %vm264, %v321, 0
  %v326 = vsel %vm268, %v253, 0
  %328 = vmatprep.subr.bf16.mxu0 0
  %329 = vmatpush1.bf16.msra.mxu0 %v326
  %330 = vmatprep.subr.bf16.mxu0 0
  %331 = vmatpush1.bf16.msra.mxu0 0
  %332 = vmatprep.subr.bf16.mxu0 0
  %333 = vmatpush1.bf16.msra.mxu0 0
  %334 = vmatprep.subr.bf16.mxu0 0
  %335 = vmatpush1.bf16.msra.mxu0 0
  %336 = vmatprep.subr.bf16.mxu0 0
  %337 = vmatpush1.bf16.msra.mxu0 0
  %338 = vmatprep.subr.bf16.mxu0 0
  %339 = vmatpush1.bf16.msra.mxu0 0
  %340 = vmatprep.subr.bf16.mxu0 0
  %341 = vmatpush1.bf16.msra.mxu0 0
  %342 = vmatprep.subr.bf16.mxu0 0
  %343 = vmatpush1.bf16.msra.mxu0 0
  %344 = vmatprep.subr.bf16.mxu0 0
  %345 = vmatpush1.bf16.msra.mxu0 0
  %346 = vmatprep.subr.bf16.mxu0 0
  %347 = vmatpush1.bf16.msra.mxu0 0
  %348 = vmatprep.subr.bf16.mxu0 0
  %349 = vmatpush1.bf16.msra.mxu0 0
  %350 = vmatprep.subr.bf16.mxu0 0
  %351 = vmatpush1.bf16.msra.mxu0 0
  %352 = vmatprep.subr.bf16.mxu0 0
  %353 = vmatpush1.bf16.msra.mxu0 0
  %354 = vmatprep.subr.bf16.mxu0 0
  %355 = vmatpush1.bf16.msra.mxu0 0
  %356 = vmatprep.subr.bf16.mxu0 0
  %357 = vmatpush1.bf16.msra.mxu0 0
  %358 = vmatprep.subr.bf16.mxu0 0
  %359 = vmatpush1.bf16.msra.mxu0 0
  %360 = vmatprep.mubr.bf16.mxu0 0
  %361 = vmatmul.mubr.bf16.gmra.mrb[0].mxu0 %v323
  %v362 = vpop.f32.mrb[0].mxu0
  %v363 = vadd.f32 0.0, %v362
  %v364 = vpop.f32.mrb[0].mxu0
  %v365 = vpop.f32.mrb[0].mxu0
  %v366 = vpop.f32.mrb[0].mxu0
  %367 = vdwg.mxu0
  %v368 = vpack.c.bf16 %v307, %v307
  %v369 = vpack.c.bf16 %v363, %v363
  %v370 = vld [vmem:[%s5] sm:$0xf]
  %v371 = vld [vmem:[%s5 + $0x4] sm:$0xf]
  %v372 = vld [vmem:[%s5 + $0x8] sm:$0xf]
  %v373 = vld [vmem:[%s5 + $0xc] sm:$0xf]
  %v376 = vunpack.c.l.b16 %v368
  %v377 = vunpack.c.l.b16 %v369
  %v378 = vrot.slane %v377, 7
  %v379 = vsel %vm191, %v378, %v376
  %v380 = vpack.c.b16 %v379, %v379
  %v385 = vunpack.c.l.b16 %v370
  %v386 = vunpack.c.l.b16 %v371
  %v387 = vunpack.c.l.b16 %v372
  %v388 = vunpack.c.l.b16 %v373
  %v389 = vpack.c.b16 %v386, %v385
  %v390 = vpack.c.b16 %v388, %v387
  %v394 = vsel %vm45, %v380, 0
  %396 = vmatprep.subr.bf16.mxu0 0
  %397 = vmatpush1.bf16.msra.mxu0 %v389
  %398 = vmatprep.subr.bf16.mxu0 0
  %399 = vmatpush1.bf16.msra.mxu0 %v390
  %400 = vmatprep.subr.bf16.mxu0 0
  %401 = vmatpush1.bf16.msra.mxu0 0
  %402 = vmatprep.subr.bf16.mxu0 0
  %403 = vmatpush1.bf16.msra.mxu0 0
  %404 = vmatprep.subr.bf16.mxu0 0
  %405 = vmatpush1.bf16.msra.mxu0 0
  %406 = vmatprep.subr.bf16.mxu0 0
  %407 = vmatpush1.bf16.msra.mxu0 0
  %408 = vmatprep.subr.bf16.mxu0 0
  %409 = vmatpush1.bf16.msra.mxu0 0
  %410 = vmatprep.subr.bf16.mxu0 0
  %411 = vmatpush1.bf16.msra.mxu0 0
  %412 = vmatprep.subr.bf16.mxu0 0
  %413 = vmatpush1.bf16.msra.mxu0 0
  %414 = vmatprep.subr.bf16.mxu0 0
  %415 = vmatpush1.bf16.msra.mxu0 0
  %416 = vmatprep.subr.bf16.mxu0 0
  %417 = vmatpush1.bf16.msra.mxu0 0
  %418 = vmatprep.subr.bf16.mxu0 0
  %419 = vmatpush1.bf16.msra.mxu0 0
  %420 = vmatprep.subr.bf16.mxu0 0
  %421 = vmatpush1.bf16.msra.mxu0 0
  %422 = vmatprep.subr.bf16.mxu0 0
  %423 = vmatpush1.bf16.msra.mxu0 0
  %424 = vmatprep.subr.bf16.mxu0 0
  %425 = vmatpush1.bf16.msra.mxu0 0
  %426 = vmatprep.subr.bf16.mxu0 0
  %427 = vmatpush1.bf16.msra.mxu0 0
  %428 = vmatprep.mubr.bf16.mxu0 0
  %429 = vmatmul.mubr.bf16.gmra.mrb[0].mxu0 %v394
  %v430 = vpop.f32.mrb[0].mxu0
  %v431 = vadd.f32 0.0, %v430
  %v432 = vpop.f32.mrb[0].mxu0
  %v433 = vpop.f32.mrb[0].mxu0
  %v434 = vpop.f32.mrb[0].mxu0
  %435 = vdwg.mxu0
  %v436 = vadd.f32 %v40, %v431
  %v437 = vmul.f32 %v436, %v436
  %v438 = vsel %vm34, %v437, 0.0
  %439 = vadd.xlane.f32.xlu0 %v438
  %v440 = vpop.xlane.xlu0 %439
  %v441 = vadd.f32 %v440, 1e-12
  %v442 = vrsqrt.pop %v441
  %v443 = vmul.f32 %v436, %v442
  %444 = vst.msk [vmem:[%s8] sm:$0x3] %vm34, %v443
  %v445 = vld [vmem:[%s6] sm:$0xf]
  %v446 = vld [vmem:[%s6 + $0x4] sm:$0xf]
  %v447 = vld [vmem:[%s6 + $0x8] sm:$0xf]
  %v448 = vld [vmem:[%s6 + $0xc] sm:$0xf]
  %v449 = vld [vmem:[%s7] sm:$0x1]
  %v451 = vlaneseq
  %v452 = vshrl.u32 %v451, 7
  %v453 = vsub.s32 0, %v452
  %v454 = vrot.slane %v449, %v453
  %v460 = vunpack.c.l.b16 %v445
  %v461 = vunpack.c.l.b16 %v446
  %v462 = vunpack.c.l.b16 %v447
  %v463 = vunpack.c.l.b16 %v448
  %v464 = vpack.c.b16 %v461, %v460
  %v465 = vpack.c.b16 %v463, %v462
  %468 = vmatprep.subr.bf16.mxu0 0
  %469 = vmatpush1.bf16.msra.mxu0 %v464
  %470 = vmatprep.subr.bf16.mxu0 0
  %471 = vmatpush1.bf16.msra.mxu0 %v465
  %472 = vmatprep.subr.bf16.mxu0 0
  %473 = vmatpush1.bf16.msra.mxu0 0
  %474 = vmatprep.subr.bf16.mxu0 0
  %475 = vmatpush1.bf16.msra.mxu0 0
  %476 = vmatprep.subr.bf16.mxu0 0
  %477 = vmatpush1.bf16.msra.mxu0 0
  %478 = vmatprep.subr.bf16.mxu0 0
  %479 = vmatpush1.bf16.msra.mxu0 0
  %480 = vmatprep.subr.bf16.mxu0 0
  %481 = vmatpush1.bf16.msra.mxu0 0
  %482 = vmatprep.subr.bf16.mxu0 0
  %483 = vmatpush1.bf16.msra.mxu0 0
  %484 = vmatprep.subr.bf16.mxu0 0
  %485 = vmatpush1.bf16.msra.mxu0 0
  %486 = vmatprep.subr.bf16.mxu0 0
  %487 = vmatpush1.bf16.msra.mxu0 0
  %488 = vmatprep.subr.bf16.mxu0 0
  %489 = vmatpush1.bf16.msra.mxu0 0
  %490 = vmatprep.subr.bf16.mxu0 0
  %491 = vmatpush1.bf16.msra.mxu0 0
  %492 = vmatprep.subr.bf16.mxu0 0
  %493 = vmatpush1.bf16.msra.mxu0 0
  %494 = vmatprep.subr.bf16.mxu0 0
  %495 = vmatpush1.bf16.msra.mxu0 0
  %496 = vmatprep.subr.bf16.mxu0 0
  %497 = vmatpush1.bf16.msra.mxu0 0
  %498 = vmatprep.subr.bf16.mxu0 0
  %499 = vmatpush1.bf16.msra.mxu0 0
  %500 = vmatprep.mubr.bf16.mxu0 0
  %501 = vmatmul.mubr.bf16.gmra.mrb[0].mxu0 %v394
  %v502 = vpop.f32.mrb[0].mxu0
  %v503 = vadd.f32 %v454, %v502
  %v504 = vpop.f32.mrb[0].mxu0
  %v505 = vpop.f32.mrb[0].mxu0
  %v506 = vpop.f32.mrb[0].mxu0
  %507 = vdwg.mxu0
  %v508 = vmul.f32 %v503, 0.5
  %v509 = vmax.f32 %v508, -5.0
  %v510 = vmin.f32 %v509, 5.0
  %v511 = vmul.f32 %v510, 1.442695
  %v512 = vpow.pop %v511
  %513 = vst.msk [vmem:[%s9] sm:$0x3] %vm34, %v512
  // Predicated region
  $region34: #{_lambda_.13} parent=0 // pred_check
    _
  $region35: #{_lambda_.13} parent=0 // pred_check_branch
    %515 = sbr.rel (0) target = $region37
  $region36: #{_lambda_.13} parent=0 // pred_region
    _
  $region37: #{_lambda_.13} parent=0 // pred_fallthru
    _
  // Predicated region
  $region38: #{_lambda_.13} parent=0 // pred_check
    _
  $region39: #{_lambda_.13} parent=0 // pred_check_branch
    %517 = sbr.rel (0) target = $region41
  $region40: #{_lambda_.13} parent=0 // pred_region
    _
  $region41: #{_lambda_.13} parent=0 // pred_fallthru
    _
  // Predicated region
  $region42: #{_lambda_.13} parent=0 // pred_check
    _
  $region43: #{_lambda_.13} parent=0 // pred_check_branch
    %519 = sbr.rel (0) target = $region45
  $region44: #{_lambda_.13} parent=0 // pred_region
    _
  $region45: #{_lambda_.13} parent=0 // pred_fallthru
    _
  // Predicated region
  $region46: #{_lambda_.13} parent=0 // pred_check
    _
  $region47: #{_lambda_.13} parent=0 // pred_check_branch
    %521 = sbr.rel (0) target = $region49
  $region48: #{_lambda_.13} parent=0 // pred_region
    _
  $region49: #{_lambda_.13} parent=0 // pred_fallthru
    _

// kernel: _lambda_.14
$region0: #{_lambda_.14}
  #allocation0 [shape = 'u32[]', space=smem, size = 0x4, offset = 0x4, fixed_abs, tag = 'smem constant byte address 0x4 - core index']
  #allocation1 [shape = 'u32[144,128]{1,0:T(1,128)}', space=vmem, size = 0x12000, scoped, tag = 'internal scratch']
  %s0 = inlined_call_operand.vmem [shape: f32[2,32], index: 0, kind: input, shape index: {}]
  %s1 = inlined_call_operand.vmem [shape: f32[2,4,32], index: 1, kind: input, shape index: {}]
  %s2 = inlined_call_operand.vmem [shape: bf16[32,16], index: 2, kind: input, shape index: {}]
  %s3 = inlined_call_operand.vmem [shape: f32[1,16], index: 3, kind: input, shape index: {}]
  %s4 = inlined_call_operand.vmem [shape: f32[1,16], index: 4, kind: input, shape index: {}]
  %s5 = inlined_call_operand.vmem [shape: bf16[32,32], index: 5, kind: input, shape index: {}]
  %s6 = inlined_call_operand.vmem [shape: bf16[32,32], index: 6, kind: input, shape index: {}]
  %s7 = inlined_call_operand.vmem [shape: f32[1,32], index: 7, kind: input, shape index: {}]
  %s8 = inlined_call_operand.vmem [shape: f32[2,32], index: 8, kind: output, shape index: {0}]
  %s9 = inlined_call_operand.vmem [shape: f32[2,32], index: 9, kind: output, shape index: {1}]
  %10 = xla_tuple %s8, %s9
  %s11 = sld [smem:[#allocation0]]
  $region50: #{_lambda_.14} parent=0
    _
  %s13 = ssub.s32 1, %s11
  %s14 = scalar_select 0, %s13, %s11
  // Predicated region
  $region2: #{_lambda_.14} parent=0 // pred_check
    _
  $region3: #{_lambda_.14} parent=0 // pred_check_branch
    %16 = sbr.rel (0) target = $region5
  $region4: #{_lambda_.14} parent=0 // pred_region
    _
  $region5: #{_lambda_.14} parent=0 // pred_fallthru
    _
  // Predicated region
  $region6: #{_lambda_.14} parent=0 // pred_check
    _
  $region7: #{_lambda_.14} parent=0 // pred_check_branch
    %18 = sbr.rel (0) target = $region9
  $region8: #{_lambda_.14} parent=0 // pred_region
    _
  $region9: #{_lambda_.14} parent=0 // pred_fallthru
    _
  // Predicated region
  $region10: #{_lambda_.14} parent=0 // pred_check
    _
  $region11: #{_lambda_.14} parent=0 // pred_check_branch
    %20 = sbr.rel (0) target = $region13
  $region12: #{_lambda_.14} parent=0 // pred_region
    _
  $region13: #{_lambda_.14} parent=0 // pred_fallthru
    _
  // Predicated region
  $region14: #{_lambda_.14} parent=0 // pred_check
    _
  $region15: #{_lambda_.14} parent=0 // pred_check_branch
    %22 = sbr.rel (0) target = $region17
  $region16: #{_lambda_.14} parent=0 // pred_region
    _
  $region17: #{_lambda_.14} parent=0 // pred_fallthru
    _
  // Predicated region
  $region18: #{_lambda_.14} parent=0 // pred_check
    _
  $region19: #{_lambda_.14} parent=0 // pred_check_branch
    %24 = sbr.rel (0) target = $region21
  $region20: #{_lambda_.14} parent=0 // pred_region
    _
  $region21: #{_lambda_.14} parent=0 // pred_fallthru
    _
  // Predicated region
  $region22: #{_lambda_.14} parent=0 // pred_check
    _
  $region23: #{_lambda_.14} parent=0 // pred_check_branch
    %26 = sbr.rel (0) target = $region25
  $region24: #{_lambda_.14} parent=0 // pred_region
    _
  $region25: #{_lambda_.14} parent=0 // pred_fallthru
    _
  // Predicated region
  $region26: #{_lambda_.14} parent=0 // pred_check
    _
  $region27: #{_lambda_.14} parent=0 // pred_check_branch
    %28 = sbr.rel (0) target = $region29
  $region28: #{_lambda_.14} parent=0 // pred_region
    _
  $region29: #{_lambda_.14} parent=0 // pred_fallthru
    _
  // Predicated region
  $region30: #{_lambda_.14} parent=0 // pred_check
    _
  $region31: #{_lambda_.14} parent=0 // pred_check_branch
    %30 = sbr.rel (0) target = $region33
  $region32: #{_lambda_.14} parent=0 // pred_region
    _
  $region33: #{_lambda_.14} parent=0 // pred_fallthru
    _
  %v32 = vld [vmem:[%s0] sm:$0x3]
  %v33 = vmul.f32 %v32, %v32
  %vm34 = vcmask 254976
  %v35 = vsel %vm34, %v33, 0.0
  %36 = vadd.xlane.f32.xlu0 %v35
  %v37 = vpop.xlane.xlu0 %36
  %v38 = vadd.f32 %v37, 1e-12
  %v39 = vrsqrt.pop %v38
  %v40 = vmul.f32 %v32, %v39
  %v41 = vld [vmem:[%s1] sm:$0xf]
  %v42 = vld [vmem:[%s1 + $0x4] sm:$0xf]
  %v43 = vmul.f32 %v41, %v41
  %v44 = vmul.f32 %v42, %v42
  %vm45 = vcmask 257024
  %v46 = vsel %vm45, %v43, 0.0
  %47 = vadd.xlane.f32.xlu0 %v46
  %v48 = vpop.xlane.xlu0 %47
  %v49 = vsel %vm45, %v44, 0.0
  %50 = vadd.xlane.f32.xlu0 %v49
  %v51 = vpop.xlane.xlu0 %50
  %v52 = vadd.f32 %v48, 1e-12
  %v53 = vadd.f32 %v51, 1e-12
  %v54 = vrsqrt.pop %v52
  %v55 = vrsqrt.pop %v53
  %v56 = vmul.f32 %v41, %v54
  %v57 = vmul.f32 %v42, %v55
  %v60 = vunpack.c.l.s4 1966171168
  %v61 = vunpack.c.0.s8 %v60
  %v62 = vlaneseq
  %v63 = vshrl.u32 %v62, 7
  %v64 = vsub.s32 %v61, %v63
  %v65 = vrot.slane %v40, %v64
  %v66 = vcombine.high %v65, %v65
  %v68 = vunpack.c.l.s4 1966171168
  %v69 = vunpack.c.0.s8 %v68
  %v70 = vlaneseq
  %v71 = vshrl.u32 %v70, 7
  %v72 = vsub.s32 %v69, %v71
  %v73 = vrot.slane %v65, %v72
  %v75 = vunpack.c.l.s4 1966171168
  %v76 = vunpack.c.0.s8 %v75
  %v77 = vlaneseq
  %v78 = vshrl.u32 %v77, 7
  %v79 = vsub.s32 %v76, %v78
  %v80 = vrot.slane %v66, %v79
  %v81 = vlaneseq
  %v82 = vshrl.u32 %v81, 7
  %v83 = vsub.s32 0, %v82
  %v84 = vrot.slane %v73, %v83
  %v85 = vlaneseq
  %v86 = vshrl.u32 %v85, 7
  %v87 = vsub.s32 0, %v86
  %v88 = vrot.slane %v80, %v87
  %v91 = vadd.f32 %v56, %v84
  %v92 = vadd.f32 %v57, %v88
  %v95 = vcombine.low %v91, %v92
  %v97 = vpack.c.bf16 %v95, %v95
  %v98 = vld [vmem:[%s2] sm:$0xf]
  %v99 = vld [vmem:[%s2 + $0x4] sm:$0xf]
  %v100 = vld [vmem:[%s2 + $0x8] sm:$0xf]
  %v101 = vld [vmem:[%s2 + $0xc] sm:$0xf]
  %v102 = vld [vmem:[%s3] sm:$0x1]
  %v104 = vlaneseq
  %v105 = vshrl.u32 %v104, 7
  %v106 = vsub.s32 0, %v105
  %v107 = vrot.slane %v102, %v106
  %v113 = vunpack.c.l.b16 %v98
  %v114 = vunpack.c.l.b16 %v99
  %v115 = vunpack.c.l.b16 %v100
  %v116 = vunpack.c.l.b16 %v101
  %v117 = vpack.c.b16 %v114, %v113
  %v118 = vpack.c.b16 %v116, %v115
  %vm121 = vcmask 261120
  %v123 = vsel %vm121, %v97, 0
  %125 = vmatprep.subr.bf16.mxu0 0
  %126 = vmatpush1.bf16.msra.mxu0 %v117
  %127 = vmatprep.subr.bf16.mxu0 0
  %128 = vmatpush1.bf16.msra.mxu0 %v118
  %129 = vmatprep.subr.bf16.mxu0 0
  %130 = vmatpush1.bf16.msra.mxu0 0
  %131 = vmatprep.subr.bf16.mxu0 0
  %132 = vmatpush1.bf16.msra.mxu0 0
  %133 = vmatprep.subr.bf16.mxu0 0
  %134 = vmatpush1.bf16.msra.mxu0 0
  %135 = vmatprep.subr.bf16.mxu0 0
  %136 = vmatpush1.bf16.msra.mxu0 0
  %137 = vmatprep.subr.bf16.mxu0 0
  %138 = vmatpush1.bf16.msra.mxu0 0
  %139 = vmatprep.subr.bf16.mxu0 0
  %140 = vmatpush1.bf16.msra.mxu0 0
  %141 = vmatprep.subr.bf16.mxu0 0
  %142 = vmatpush1.bf16.msra.mxu0 0
  %143 = vmatprep.subr.bf16.mxu0 0
  %144 = vmatpush1.bf16.msra.mxu0 0
  %145 = vmatprep.subr.bf16.mxu0 0
  %146 = vmatpush1.bf16.msra.mxu0 0
  %147 = vmatprep.subr.bf16.mxu0 0
  %148 = vmatpush1.bf16.msra.mxu0 0
  %149 = vmatprep.subr.bf16.mxu0 0
  %150 = vmatpush1.bf16.msra.mxu0 0
  %151 = vmatprep.subr.bf16.mxu0 0
  %152 = vmatpush1.bf16.msra.mxu0 0
  %153 = vmatprep.subr.bf16.mxu0 0
  %154 = vmatpush1.bf16.msra.mxu0 0
  %155 = vmatprep.subr.bf16.mxu0 0
  %156 = vmatpush1.bf16.msra.mxu0 0
  %157 = vmatprep.mubr.bf16.mxu0 0
  %158 = vmatmul.mubr.bf16.gmra.mrb[0].mxu0 %v123
  %v159 = vpop.f32.mrb[0].mxu0
  %v160 = vadd.f32 %v107, %v159
  %v161 = vpop.f32.mrb[0].mxu0
  %v162 = vpop.f32.mrb[0].mxu0
  %v163 = vpop.f32.mrb[0].mxu0
  %164 = vdwg.mxu0
  %v165 = vtanh.pop %v160
  %v167 = vcombine.high %v165, %v165
  %v169 = vld [vmem:[%s4] sm:$0x1]
  %v171 = vlaneseq
  %v172 = vshrl.u32 %v171, 7
  %v173 = vsub.s32 0, %v172
  %v174 = vrot.slane %v169, %v173
  %v176 = vmul.f32 %v165, %v174
  %v177 = vmul.f32 %v167, %v174
  %vm178 = vcmask 125952
  %v179 = vsel %vm178, %v176, 0.0
  %180 = vadd.xlane.f32.xlu0 %v179
  %v181 = vpop.xlane.xlu0 %180
  %v182 = vsel %vm178, %v177, 0.0
  %183 = vadd.xlane.f32.xlu0 %v182
  %v184 = vpop.xlane.xlu0 %183
  %v187 = vlaneseq
  %v188 = vand.u32 %v187, 127
  %v189 = vlaneseq
  %v190 = vshrl.u32 %v189, 7
  %v191 = vsub.s32 %v188, %v190
  %v192 = vrot.slane %v181, %v191
  %v193 = vlaneseq
  %v194 = vshrl.u32 %v193, 7
  %v195 = vsub.s32 %v188, %v194
  %v196 = vrot.slane %v184, %v195
  %vm197 = vcmask 1041409
  %v198 = vsel %vm197, %v196, %v192
  %vm200 = vcmask 25600
  %v201 = vsel %vm200, %v198, -inf
  %202 = vmax.xlane.f32.xlu0 %v201
  %v203 = vpop.xlane.xlu0 %202
  %v205 = vlaneseq
  %v206 = vshrl.u32 %v205, 7
  %v207 = vsub.s32 0, %v206
  %v208 = vrot.slane %v203, %v207
  %v209 = vlaneseq
  %v210 = vshrl.u32 %v209, 7
  %v211 = vsub.s32 1, %v210
  %v212 = vrot.slane %v203, %v211
  %v215 = vsub.f32 %v181, %v208
  %v216 = vsub.f32 %v184, %v212
  %v217 = vmul.f32 %v215, 1.442695
  %v218 = vpow.pop %v217
  %v219 = vmul.f32 %v216, 1.442695
  %v220 = vpow.pop %v219
  %223 = vset.pattern.permute.xlu0 0
  %224 = vperm.xlu0 %223, %v218
  %v225 = vpop.permute.xlu0 %224
  %226 = vset.pattern.permute.xlu0 0
  %227 = vperm.xlu0 %226, %v220
  %v228 = vpop.permute.xlu0 %227
  %v229 = vlaneseq
  %v230 = vshrl.u32 %v229, 7
  %v231 = vsub.s32 %v188, %v230
  %v232 = vrot.slane %v225, %v231
  %v233 = vlaneseq
  %v234 = vshrl.u32 %v233, 7
  %v235 = vsub.s32 %v188, %v234
  %v236 = vrot.slane %v228, %v235
  %v237 = vsel %vm197, %v236, %v232
  %v239 = vsel %vm200, %v237, 0.0
  %240 = vadd.xlane.f32.xlu0 %v239
  %v241 = vpop.xlane.xlu0 %240
  %v242 = vrcp.pop %v241
  %v244 = vlaneseq
  %v245 = vshrl.u32 %v244, 7
  %v246 = vsub.s32 0, %v245
  %v247 = vrot.slane %v242, %v246
  %v248 = vlaneseq
  %v249 = vshrl.u32 %v248, 7
  %v250 = vsub.s32 1, %v249
  %v251 = vrot.slane %v242, %v250
  %v254 = vmul.f32 %v218, %v247
  %v255 = vmul.f32 %v220, %v251
  %v256 = vpack.c.bf16 %v254, %v254
  %v257 = vpack.c.bf16 %v255, %v255
  %v258 = vpack.c.bf16 %v56, %v56
  %v259 = vpack.c.bf16 %v57, %v57
  %v261 = vunpack.c.l.b16 %v256
  %262 = vset.pattern.permute.xlu0 0
  %263 = vperm.xlu0 %262, %v261
  %v264 = vpop.permute.xlu0 %263
  %v265 = vlaneseq
  %v266 = vshrl.u32 %v265, 7
  %v267 = vsub.s32 %v188, %v266
  %v268 = vrot.slane %v264, %v267
  %v269 = vpack.c.b16 %v268, %v268
  %vm270 = vcmask 31744
  %v272 = vsel %vm270, %v269, 0
  %vm274 = vcmask 1041408
  %v276 = vsel %vm274, %v258, 0
  %278 = vmatprep.subr.bf16.mxu0 0
  %279 = vmatpush1.bf16.msra.mxu0 %v276
  %280 = vmatprep.subr.bf16.mxu0 0
  %281 = vmatpush1.bf16.msra.mxu0 0
  %282 = vmatprep.subr.bf16.mxu0 0
  %283 = vmatpush1.bf16.msra.mxu0 0
  %284 = vmatprep.subr.bf16.mxu0 0
  %285 = vmatpush1.bf16.msra.mxu0 0
  %286 = vmatprep.subr.bf16.mxu0 0
  %287 = vmatpush1.bf16.msra.mxu0 0
  %288 = vmatprep.subr.bf16.mxu0 0
  %289 = vmatpush1.bf16.msra.mxu0 0
  %290 = vmatprep.subr.bf16.mxu0 0
  %291 = vmatpush1.bf16.msra.mxu0 0
  %292 = vmatprep.subr.bf16.mxu0 0
  %293 = vmatpush1.bf16.msra.mxu0 0
  %294 = vmatprep.subr.bf16.mxu0 0
  %295 = vmatpush1.bf16.msra.mxu0 0
  %296 = vmatprep.subr.bf16.mxu0 0
  %297 = vmatpush1.bf16.msra.mxu0 0
  %298 = vmatprep.subr.bf16.mxu0 0
  %299 = vmatpush1.bf16.msra.mxu0 0
  %300 = vmatprep.subr.bf16.mxu0 0
  %301 = vmatpush1.bf16.msra.mxu0 0
  %302 = vmatprep.subr.bf16.mxu0 0
  %303 = vmatpush1.bf16.msra.mxu0 0
  %304 = vmatprep.subr.bf16.mxu0 0
  %305 = vmatpush1.bf16.msra.mxu0 0
  %306 = vmatprep.subr.bf16.mxu0 0
  %307 = vmatpush1.bf16.msra.mxu0 0
  %308 = vmatprep.subr.bf16.mxu0 0
  %309 = vmatpush1.bf16.msra.mxu0 0
  %310 = vmatprep.mubr.bf16.mxu0 0
  %311 = vmatmul.mubr.bf16.gmra.mrb[0].mxu0 %v272
  %v312 = vpop.f32.mrb[0].mxu0
  %v313 = vadd.f32 0.0, %v312
  %v314 = vpop.f32.mrb[0].mxu0
  %v315 = vpop.f32.mrb[0].mxu0
  %v316 = vpop.f32.mrb[0].mxu0
  %317 = vdwg.mxu0
  %v319 = vunpack.c.l.b16 %v257
  %320 = vset.pattern.permute.xlu0 0
  %321 = vperm.xlu0 %320, %v319
  %v322 = vpop.permute.xlu0 %321
  %v323 = vlaneseq
  %v324 = vshrl.u32 %v323, 7
  %v325 = vsub.s32 %v188, %v324
  %v326 = vrot.slane %v322, %v325
  %v327 = vpack.c.b16 %v326, %v326
  %v329 = vsel %vm270, %v327, 0
  %v332 = vsel %vm274, %v259, 0
  %334 = vmatprep.subr.bf16.mxu0 0
  %335 = vmatpush1.bf16.msra.mxu0 %v332
  %336 = vmatprep.subr.bf16.mxu0 0
  %337 = vmatpush1.bf16.msra.mxu0 0
  %338 = vmatprep.subr.bf16.mxu0 0
  %339 = vmatpush1.bf16.msra.mxu0 0
  %340 = vmatprep.subr.bf16.mxu0 0
  %341 = vmatpush1.bf16.msra.mxu0 0
  %342 = vmatprep.subr.bf16.mxu0 0
  %343 = vmatpush1.bf16.msra.mxu0 0
  %344 = vmatprep.subr.bf16.mxu0 0
  %345 = vmatpush1.bf16.msra.mxu0 0
  %346 = vmatprep.subr.bf16.mxu0 0
  %347 = vmatpush1.bf16.msra.mxu0 0
  %348 = vmatprep.subr.bf16.mxu0 0
  %349 = vmatpush1.bf16.msra.mxu0 0
  %350 = vmatprep.subr.bf16.mxu0 0
  %351 = vmatpush1.bf16.msra.mxu0 0
  %352 = vmatprep.subr.bf16.mxu0 0
  %353 = vmatpush1.bf16.msra.mxu0 0
  %354 = vmatprep.subr.bf16.mxu0 0
  %355 = vmatpush1.bf16.msra.mxu0 0
  %356 = vmatprep.subr.bf16.mxu0 0
  %357 = vmatpush1.bf16.msra.mxu0 0
  %358 = vmatprep.subr.bf16.mxu0 0
  %359 = vmatpush1.bf16.msra.mxu0 0
  %360 = vmatprep.subr.bf16.mxu0 0
  %361 = vmatpush1.bf16.msra.mxu0 0
  %362 = vmatprep.subr.bf16.mxu0 0
  %363 = vmatpush1.bf16.msra.mxu0 0
  %364 = vmatprep.subr.bf16.mxu0 0
  %365 = vmatpush1.bf16.msra.mxu0 0
  %366 = vmatprep.mubr.bf16.mxu0 0
  %367 = vmatmul.mubr.bf16.gmra.mrb[0].mxu0 %v329
  %v368 = vpop.f32.mrb[0].mxu0
  %v369 = vadd.f32 0.0, %v368
  %v370 = vpop.f32.mrb[0].mxu0
  %v371 = vpop.f32.mrb[0].mxu0
  %v372 = vpop.f32.mrb[0].mxu0
  %373 = vdwg.mxu0
  %v374 = vpack.c.bf16 %v313, %v313
  %v375 = vpack.c.bf16 %v369, %v369
  %v376 = vld [vmem:[%s5] sm:$0xf]
  %v377 = vld [vmem:[%s5 + $0x4] sm:$0xf]
  %v378 = vld [vmem:[%s5 + $0x8] sm:$0xf]
  %v379 = vld [vmem:[%s5 + $0xc] sm:$0xf]
  %v382 = vunpack.c.l.b16 %v374
  %v383 = vunpack.c.l.b16 %v375
  %v384 = vrot.slane %v383, 7
  %v385 = vsel %vm197, %v384, %v382
  %v386 = vpack.c.b16 %v385, %v385
  %v391 = vunpack.c.l.b16 %v376
  %v392 = vunpack.c.l.b16 %v377
  %v393 = vunpack.c.l.b16 %v378
  %v394 = vunpack.c.l.b16 %v379
  %v395 = vpack.c.b16 %v392, %v391
  %v396 = vpack.c.b16 %v394, %v393
  %v400 = vsel %vm121, %v386, 0
  %402 = vmatprep.subr.bf16.mxu0 0
  %403 = vmatpush1.bf16.msra.mxu0 %v395
  %404 = vmatprep.subr.bf16.mxu0 0
  %405 = vmatpush1.bf16.msra.mxu0 %v396
  %406 = vmatprep.subr.bf16.mxu0 0
  %407 = vmatpush1.bf16.msra.mxu0 0
  %408 = vmatprep.subr.bf16.mxu0 0
  %409 = vmatpush1.bf16.msra.mxu0 0
  %410 = vmatprep.subr.bf16.mxu0 0
  %411 = vmatpush1.bf16.msra.mxu0 0
  %412 = vmatprep.subr.bf16.mxu0 0
  %413 = vmatpush1.bf16.msra.mxu0 0
  %414 = vmatprep.subr.bf16.mxu0 0
  %415 = vmatpush1.bf16.msra.mxu0 0
  %416 = vmatprep.subr.bf16.mxu0 0
  %417 = vmatpush1.bf16.msra.mxu0 0
  %418 = vmatprep.subr.bf16.mxu0 0
  %419 = vmatpush1.bf16.msra.mxu0 0
  %420 = vmatprep.subr.bf16.mxu0 0
  %421 = vmatpush1.bf16.msra.mxu0 0
  %422 = vmatprep.subr.bf16.mxu0 0
  %423 = vmatpush1.bf16.msra.mxu0 0
  %424 = vmatprep.subr.bf16.mxu0 0
  %425 = vmatpush1.bf16.msra.mxu0 0
  %426 = vmatprep.subr.bf16.mxu0 0
  %427 = vmatpush1.bf16.msra.mxu0 0
  %428 = vmatprep.subr.bf16.mxu0 0
  %429 = vmatpush1.bf16.msra.mxu0 0
  %430 = vmatprep.subr.bf16.mxu0 0
  %431 = vmatpush1.bf16.msra.mxu0 0
  %432 = vmatprep.subr.bf16.mxu0 0
  %433 = vmatpush1.bf16.msra.mxu0 0
  %434 = vmatprep.mubr.bf16.mxu0 0
  %435 = vmatmul.mubr.bf16.gmra.mrb[0].mxu0 %v400
  %v436 = vpop.f32.mrb[0].mxu0
  %v437 = vadd.f32 0.0, %v436
  %v438 = vpop.f32.mrb[0].mxu0
  %v439 = vpop.f32.mrb[0].mxu0
  %v440 = vpop.f32.mrb[0].mxu0
  %441 = vdwg.mxu0
  %v442 = vadd.f32 %v40, %v437
  %v443 = vmul.f32 %v442, %v442
  %v444 = vsel %vm34, %v443, 0.0
  %445 = vadd.xlane.f32.xlu0 %v444
  %v446 = vpop.xlane.xlu0 %445
  %v447 = vadd.f32 %v446, 1e-12
  %v448 = vrsqrt.pop %v447
  %v449 = vmul.f32 %v442, %v448
  %450 = vst.msk [vmem:[%s8] sm:$0x3] %vm34, %v449
  %v451 = vld [vmem:[%s6] sm:$0xf]
  %v452 = vld [vmem:[%s6 + $0x4] sm:$0xf]
  %v453 = vld [vmem:[%s6 + $0x8] sm:$0xf]
  %v454 = vld [vmem:[%s6 + $0xc] sm:$0xf]
  %v455 = vld [vmem:[%s7] sm:$0x1]
  %v457 = vlaneseq
  %v458 = vshrl.u32 %v457, 7
  %v459 = vsub.s32 0, %v458
  %v460 = vrot.slane %v455, %v459
  %v466 = vunpack.c.l.b16 %v451
  %v467 = vunpack.c.l.b16 %v452
  %v468 = vunpack.c.l.b16 %v453
  %v469 = vunpack.c.l.b16 %v454
  %v470 = vpack.c.b16 %v467, %v466
  %v471 = vpack.c.b16 %v469, %v468
  %474 = vmatprep.subr.bf16.mxu0 0
  %475 = vmatpush1.bf16.msra.mxu0 %v470
  %476 = vmatprep.subr.bf16.mxu0 0
  %477 = vmatpush1.bf16.msra.mxu0 %v471
  %478 = vmatprep.subr.bf16.mxu0 0
  %479 = vmatpush1.bf16.msra.mxu0 0
  %480 = vmatprep.subr.bf16.mxu0 0
  %481 = vmatpush1.bf16.msra.mxu0 0
  %482 = vmatprep.subr.bf16.mxu0 0
  %483 = vmatpush1.bf16.msra.mxu0 0
  %484 = vmatprep.subr.bf16.mxu0 0
  %485 = vmatpush1.bf16.msra.mxu0 0
  %486 = vmatprep.subr.bf16.mxu0 0
  %487 = vmatpush1.bf16.msra.mxu0 0
  %488 = vmatprep.subr.bf16.mxu0 0
  %489 = vmatpush1.bf16.msra.mxu0 0
  %490 = vmatprep.subr.bf16.mxu0 0
  %491 = vmatpush1.bf16.msra.mxu0 0
  %492 = vmatprep.subr.bf16.mxu0 0
  %493 = vmatpush1.bf16.msra.mxu0 0
  %494 = vmatprep.subr.bf16.mxu0 0
  %495 = vmatpush1.bf16.msra.mxu0 0
  %496 = vmatprep.subr.bf16.mxu0 0
  %497 = vmatpush1.bf16.msra.mxu0 0
  %498 = vmatprep.subr.bf16.mxu0 0
  %499 = vmatpush1.bf16.msra.mxu0 0
  %500 = vmatprep.subr.bf16.mxu0 0
  %501 = vmatpush1.bf16.msra.mxu0 0
  %502 = vmatprep.subr.bf16.mxu0 0
  %503 = vmatpush1.bf16.msra.mxu0 0
  %504 = vmatprep.subr.bf16.mxu0 0
  %505 = vmatpush1.bf16.msra.mxu0 0
  %506 = vmatprep.mubr.bf16.mxu0 0
  %507 = vmatmul.mubr.bf16.gmra.mrb[0].mxu0 %v400
  %v508 = vpop.f32.mrb[0].mxu0
  %v509 = vadd.f32 %v460, %v508
  %v510 = vpop.f32.mrb[0].mxu0
  %v511 = vpop.f32.mrb[0].mxu0
  %v512 = vpop.f32.mrb[0].mxu0
  %513 = vdwg.mxu0
  %v514 = vmul.f32 %v509, 0.5
  %v515 = vmax.f32 %v514, -5.0
  %v516 = vmin.f32 %v515, 5.0
  %v517 = vmul.f32 %v516, 1.442695
  %v518 = vpow.pop %v517
  %519 = vst.msk [vmem:[%s9] sm:$0x3] %vm34, %v518
  // Predicated region
  $region34: #{_lambda_.14} parent=0 // pred_check
    _
  $region35: #{_lambda_.14} parent=0 // pred_check_branch
    %521 = sbr.rel (0) target = $region37
  $region36: #{_lambda_.14} parent=0 // pred_region
    _
  $region37: #{_lambda_.14} parent=0 // pred_fallthru
    _
  // Predicated region
  $region38: #{_lambda_.14} parent=0 // pred_check
    _
  $region39: #{_lambda_.14} parent=0 // pred_check_branch
    %523 = sbr.rel (0) target = $region41
  $region40: #{_lambda_.14} parent=0 // pred_region
    _
  $region41: #{_lambda_.14} parent=0 // pred_fallthru
    _
  // Predicated region
  $region42: #{_lambda_.14} parent=0 // pred_check
    _
  $region43: #{_lambda_.14} parent=0 // pred_check_branch
    %525 = sbr.rel (0) target = $region45
  $region44: #{_lambda_.14} parent=0 // pred_region
    _
  $region45: #{_lambda_.14} parent=0 // pred_fallthru
    _
  // Predicated region
  $region46: #{_lambda_.14} parent=0 // pred_check
    _
  $region47: #{_lambda_.14} parent=0 // pred_check_branch
    %527 = sbr.rel (0) target = $region49
  $region48: #{_lambda_.14} parent=0 // pred_region
    _
  $region49: #{_lambda_.14} parent=0 // pred_fallthru
    _

// kernel: _lambda_.15
$region0: #{_lambda_.15}
  #allocation0 [shape = 'u32[]', space=smem, size = 0x4, offset = 0x4, fixed_abs, tag = 'smem constant byte address 0x4 - core index']
  #allocation1 [shape = 'u32[144,128]{1,0:T(1,128)}', space=vmem, size = 0x12000, scoped, tag = 'internal scratch']
  %s0 = inlined_call_operand.vmem [shape: f32[2,32], index: 0, kind: input, shape index: {}]
  %s1 = inlined_call_operand.vmem [shape: f32[2,32], index: 1, kind: input, shape index: {}]
  %s2 = inlined_call_operand.vmem [shape: f32[2,3,32], index: 2, kind: input, shape index: {}]
  %s3 = inlined_call_operand.vmem [shape: f32[2,32], index: 3, kind: input, shape index: {}]
  %s4 = inlined_call_operand.vmem [shape: f32[2,32], index: 4, kind: input, shape index: {}]
  %s5 = inlined_call_operand.vmem [shape: f32[2,3,32], index: 5, kind: input, shape index: {}]
  %s6 = inlined_call_operand.hbm [shape: f32[2,2], index: 6, kind: output, shape index: {0}]
  %s7 = inlined_call_operand.hbm [shape: f32[1,1], index: 7, kind: output, shape index: {1}]
  %s8 = inlined_call_operand.hbm [shape: f32[1,1], index: 8, kind: output, shape index: {2}]
  %9 = xla_tuple %s6, %s7, %s8
  %s10 = sld [smem:[#allocation0]]
  $region50: #{_lambda_.15} parent=0
    _
  %s12 = ssub.s32 1, %s10
  %s13 = scalar_select 0, %s12, %s10
  $region1: #{_lambda_.15} parent=0
    #allocation2 [shape = 'u8[1024]{0}', space=vmem, size = 0x400, scoped, tag = 'output window, operand 0, single buffered']
    #allocation3 [shape = 's32[1]{0}', space=sflag, size = 0x4, scoped, tag = 'scoped memory for _lambda_.15']
    #allocation4 [shape = 'u8[512]{0}', space=vmem, size = 0x400, scoped, tag = 'output window, operand 1, single buffered']
    #allocation5 [shape = 's32[1]{0}', space=sflag, size = 0x4, scoped, tag = 'scoped memory for _lambda_.15']
    #allocation6 [shape = 'u8[512]{0}', space=vmem, size = 0x400, scoped, tag = 'output window, operand 2, single buffered']
    %14 = vsyncpa [#allocation3], 0
    %15 = vsyncpa [#allocation5], 0
    // Predicated region
    $region2: #{_lambda_.15} parent=1 // pred_check
      _
    $region3: #{_lambda_.15} parent=1 // pred_check_branch
      %17 = sbr.rel (0) target = $region5
    $region4: #{_lambda_.15} parent=1 // pred_region
      _
    $region5: #{_lambda_.15} parent=1 // pred_fallthru
      _
    // Predicated region
    $region6: #{_lambda_.15} parent=1 // pred_check
      _
    $region7: #{_lambda_.15} parent=1 // pred_check_branch
      %19 = sbr.rel (0) target = $region9
    $region8: #{_lambda_.15} parent=1 // pred_region
      _
    $region9: #{_lambda_.15} parent=1 // pred_fallthru
      _
    // Predicated region
    $region10: #{_lambda_.15} parent=1 // pred_check
      _
    $region11: #{_lambda_.15} parent=1 // pred_check_branch
      %21 = sbr.rel (0) target = $region13
    $region12: #{_lambda_.15} parent=1 // pred_region
      _
    $region13: #{_lambda_.15} parent=1 // pred_fallthru
      _
    // Predicated region
    $region14: #{_lambda_.15} parent=1 // pred_check
      _
    $region15: #{_lambda_.15} parent=1 // pred_check_branch
      %23 = sbr.rel (0) target = $region17
    $region16: #{_lambda_.15} parent=1 // pred_region
      _
    $region17: #{_lambda_.15} parent=1 // pred_fallthru
      _
    // Predicated region
    $region18: #{_lambda_.15} parent=1 // pred_check
      _
    $region19: #{_lambda_.15} parent=1 // pred_check_branch
      %25 = sbr.rel (0) target = $region21
    $region20: #{_lambda_.15} parent=1 // pred_region
      _
    $region21: #{_lambda_.15} parent=1 // pred_fallthru
      _
    // Predicated region
    $region22: #{_lambda_.15} parent=1 // pred_check
      _
    $region23: #{_lambda_.15} parent=1 // pred_check_branch
      %27 = sbr.rel (0) target = $region25
    $region24: #{_lambda_.15} parent=1 // pred_region
      _
    $region25: #{_lambda_.15} parent=1 // pred_fallthru
      _
    %v29 = vld [vmem:[%s0] sm:$0x3]
    %v30 = vld [vmem:[%s1] sm:$0x3]
    %v31 = vld [vmem:[%s3] sm:$0x3]
    %v32 = vld [vmem:[%s4] sm:$0x3]
    %v35 = vunpack.c.l.s4 1966171168
    %v36 = vunpack.c.0.s8 %v35
    %v37 = vlaneseq
    %v38 = vshrl.u32 %v37, 7
    %v39 = vsub.s32 %v36, %v38
    %v40 = vrot.slane %v29, %v39
    %v41 = vcombine.high %v40, %v40
    %v43 = vunpack.c.l.s4 1966171168
    %v44 = vunpack.c.0.s8 %v43
    %v45 = vlaneseq
    %v46 = vshrl.u32 %v45, 7
    %v47 = vsub.s32 %v44, %v46
    %v48 = vrot.slane %v40, %v47
    %v50 = vunpack.c.l.s4 1966171168
    %v51 = vunpack.c.0.s8 %v50
    %v52 = vlaneseq
    %v53 = vshrl.u32 %v52, 7
    %v54 = vsub.s32 %v51, %v53
    %v55 = vrot.slane %v41, %v54
    %v58 = vunpack.c.l.s4 1966171168
    %v59 = vunpack.c.0.s8 %v58
    %v60 = vlaneseq
    %v61 = vshrl.u32 %v60, 7
    %v62 = vsub.s32 %v59, %v61
    %v63 = vrot.slane %v30, %v62
    %v64 = vcombine.high %v63, %v63
    %v66 = vunpack.c.l.s4 1966171168
    %v67 = vunpack.c.0.s8 %v66
    %v68 = vlaneseq
    %v69 = vshrl.u32 %v68, 7
    %v70 = vsub.s32 %v67, %v69
    %v71 = vrot.slane %v63, %v70
    %v73 = vunpack.c.l.s4 1966171168
    %v74 = vunpack.c.0.s8 %v73
    %v75 = vlaneseq
    %v76 = vshrl.u32 %v75, 7
    %v77 = vsub.s32 %v74, %v76
    %v78 = vrot.slane %v64, %v77
    %v79 = vld [vmem:[%s2] sm:$0x7]
    %v80 = vld [vmem:[%s2 + $0x4] sm:$0x7]
    %v81 = vlaneseq
    %v82 = vshrl.u32 %v81, 7
    %v83 = vsub.s32 0, %v82
    %v84 = vrot.slane %v71, %v83
    %v85 = vlaneseq
    %v86 = vshrl.u32 %v85, 7
    %v87 = vsub.s32 0, %v86
    %v88 = vrot.slane %v78, %v87
    %v91 = vmul.f32 %v84, %v79
    %v92 = vmul.f32 %v88, %v80
    %v93 = vlaneseq
    %v94 = vshrl.u32 %v93, 7
    %v95 = vsub.s32 0, %v94
    %v96 = vrot.slane %v48, %v95
    %v97 = vlaneseq
    %v98 = vshrl.u32 %v97, 7
    %v99 = vsub.s32 0, %v98
    %v100 = vrot.slane %v55, %v99
    %v103 = vadd.f32 %v96, %v91
    %v104 = vadd.f32 %v100, %v92
    %v108 = vunpack.c.l.s4 1966171168
    %v109 = vunpack.c.0.s8 %v108
    %v110 = vlaneseq
    %v111 = vshrl.u32 %v110, 7
    %v112 = vsub.s32 %v109, %v111
    %v113 = vrot.slane %v103, %v112
    %v114 = vcombine.high %v113, %v113
    %v116 = vunpack.c.l.s4 1966171168
    %v117 = vunpack.c.0.s8 %v116
    %v118 = vlaneseq
    %v119 = vshrl.u32 %v118, 7
    %v120 = vsub.s32 %v117, %v119
    %v121 = vrot.slane %v113, %v120
    %v123 = vunpack.c.l.s4 1966171168
    %v124 = vunpack.c.0.s8 %v123
    %v125 = vlaneseq
    %v126 = vshrl.u32 %v125, 7
    %v127 = vsub.s32 %v124, %v126
    %v128 = vrot.slane %v114, %v127
    %v129 = vcombine.high %v121, %v121
    %v131 = vunpack.c.l.s4 1966171168
    %v132 = vunpack.c.0.s8 %v131
    %v133 = vlaneseq
    %v134 = vshrl.u32 %v133, 7
    %v135 = vsub.s32 %v132, %v134
    %v136 = vrot.slane %v104, %v135
    %v137 = vcombine.high %v136, %v136
    %v139 = vunpack.c.l.s4 1966171168
    %v140 = vunpack.c.0.s8 %v139
    %v141 = vlaneseq
    %v142 = vshrl.u32 %v141, 7
    %v143 = vsub.s32 %v140, %v142
    %v144 = vrot.slane %v136, %v143
    %v146 = vunpack.c.l.s4 1966171168
    %v147 = vunpack.c.0.s8 %v146
    %v148 = vlaneseq
    %v149 = vshrl.u32 %v148, 7
    %v150 = vsub.s32 %v147, %v149
    %v151 = vrot.slane %v137, %v150
    %v152 = vcombine.high %v144, %v144
    %v161 = vunpack.c.l.s4 1966171168
    %v162 = vunpack.c.0.s8 %v161
    %v163 = vlaneseq
    %v164 = vshrl.u32 %v163, 7
    %v165 = vsub.s32 %v162, %v164
    %v166 = vrot.slane %v31, %v165
    %v167 = vcombine.high %v166, %v166
    %v169 = vunpack.c.l.s4 1966171168
    %v170 = vunpack.c.0.s8 %v169
    %v171 = vlaneseq
    %v172 = vshrl.u32 %v171, 7
    %v173 = vsub.s32 %v170, %v172
    %v174 = vrot.slane %v166, %v173
    %v176 = vunpack.c.l.s4 1966171168
    %v177 = vunpack.c.0.s8 %v176
    %v178 = vlaneseq
    %v179 = vshrl.u32 %v178, 7
    %v180 = vsub.s32 %v177, %v179
    %v181 = vrot.slane %v167, %v180
    %v184 = vunpack.c.l.s4 1966171168
    %v185 = vunpack.c.0.s8 %v184
    %v186 = vlaneseq
    %v187 = vshrl.u32 %v186, 7
    %v188 = vsub.s32 %v185, %v187
    %v189 = vrot.slane %v32, %v188
    %v190 = vcombine.high %v189, %v189
    %v192 = vunpack.c.l.s4 1966171168
    %v193 = vunpack.c.0.s8 %v192
    %v194 = vlaneseq
    %v195 = vshrl.u32 %v194, 7
    %v196 = vsub.s32 %v193, %v195
    %v197 = vrot.slane %v189, %v196
    %v199 = vunpack.c.l.s4 1966171168
    %v200 = vunpack.c.0.s8 %v199
    %v201 = vlaneseq
    %v202 = vshrl.u32 %v201, 7
    %v203 = vsub.s32 %v200, %v202
    %v204 = vrot.slane %v190, %v203
    %v205 = vld [vmem:[%s5] sm:$0x7]
    %v206 = vld [vmem:[%s5 + $0x4] sm:$0x7]
    %v207 = vlaneseq
    %v208 = vshrl.u32 %v207, 7
    %v209 = vsub.s32 0, %v208
    %v210 = vrot.slane %v197, %v209
    %v211 = vlaneseq
    %v212 = vshrl.u32 %v211, 7
    %v213 = vsub.s32 0, %v212
    %v214 = vrot.slane %v204, %v213
    %v217 = vmul.f32 %v210, %v205
    %v218 = vmul.f32 %v214, %v206
    %v219 = vlaneseq
    %v220 = vshrl.u32 %v219, 7
    %v221 = vsub.s32 0, %v220
    %v222 = vrot.slane %v174, %v221
    %v223 = vlaneseq
    %v224 = vshrl.u32 %v223, 7
    %v225 = vsub.s32 0, %v224
    %v226 = vrot.slane %v181, %v225
    %v229 = vadd.f32 %v222, %v217
    %v230 = vadd.f32 %v226, %v218
    %v234 = vunpack.c.l.s4 1966171168
    %v235 = vunpack.c.0.s8 %v234
    %v236 = vlaneseq
    %v237 = vshrl.u32 %v236, 7
    %v238 = vsub.s32 %v235, %v237
    %v239 = vrot.slane %v229, %v238
    %v240 = vcombine.high %v239, %v239
    %v242 = vunpack.c.l.s4 1966171168
    %v243 = vunpack.c.0.s8 %v242
    %v244 = vlaneseq
    %v245 = vshrl.u32 %v244, 7
    %v246 = vsub.s32 %v243, %v245
    %v247 = vrot.slane %v239, %v246
    %v249 = vunpack.c.l.s4 1966171168
    %v250 = vunpack.c.0.s8 %v249
    %v251 = vlaneseq
    %v252 = vshrl.u32 %v251, 7
    %v253 = vsub.s32 %v250, %v252
    %v254 = vrot.slane %v240, %v253
    %v255 = vcombine.high %v247, %v247
    %v257 = vunpack.c.l.s4 1966171168
    %v258 = vunpack.c.0.s8 %v257
    %v259 = vlaneseq
    %v260 = vshrl.u32 %v259, 7
    %v261 = vsub.s32 %v258, %v260
    %v262 = vrot.slane %v230, %v261
    %v263 = vcombine.high %v262, %v262
    %v265 = vunpack.c.l.s4 1966171168
    %v266 = vunpack.c.0.s8 %v265
    %v267 = vlaneseq
    %v268 = vshrl.u32 %v267, 7
    %v269 = vsub.s32 %v266, %v268
    %v270 = vrot.slane %v262, %v269
    %v272 = vunpack.c.l.s4 1966171168
    %v273 = vunpack.c.0.s8 %v272
    %v274 = vlaneseq
    %v275 = vshrl.u32 %v274, 7
    %v276 = vsub.s32 %v273, %v275
    %v277 = vrot.slane %v263, %v276
    %v278 = vcombine.high %v270, %v270
    %v285 = vcombine.low %v121, %v128
    %v286 = vcombine.low %v129, %v144
    %v287 = vcombine.low %v151, %v152
    %v289 = vunpack.c.l.s4 1966171168
    %v290 = vunpack.c.0.s8 %v289
    %v291 = vlaneseq
    %v292 = vshrl.u32 %v291, 7
    %v293 = vsub.s32 %v290, %v292
    %v294 = vrot.slane %v285, %v293
    %v296 = vunpack.c.l.s4 1966171168
    %v297 = vunpack.c.0.s8 %v296
    %v298 = vlaneseq
    %v299 = vshrl.u32 %v298, 7
    %v300 = vsub.s32 %v297, %v299
    %v301 = vrot.slane %v286, %v300
    %v303 = vunpack.c.l.s4 1966171168
    %v304 = vunpack.c.0.s8 %v303
    %v305 = vlaneseq
    %v306 = vshrl.u32 %v305, 7
    %v307 = vsub.s32 %v304, %v306
    %v308 = vrot.slane %v287, %v307
    %v309 = vcombine.low %v294, %v301
    %v311 = vunpack.c.l.s4 1966171168
    %v312 = vunpack.c.0.s8 %v311
    %v313 = vlaneseq
    %v314 = vshrl.u32 %v313, 7
    %v315 = vsub.s32 %v312, %v314
    %v316 = vrot.slane %v309, %v315
    %v318 = vunpack.c.l.s4 1966171168
    %v319 = vunpack.c.0.s8 %v318
    %v320 = vlaneseq
    %v321 = vshrl.u32 %v320, 7
    %v322 = vsub.s32 %v319, %v321
    %v323 = vrot.slane %v308, %v322
    %v324 = vcombine.low %v316, %v323
    %v326 = vpack.c.bf16 %v324, %v324
    %v327 = vcombine.low %v247, %v254
    %v328 = vcombine.low %v255, %v270
    %v329 = vcombine.low %v277, %v278
    %v331 = vunpack.c.l.s4 1966171168
    %v332 = vunpack.c.0.s8 %v331
    %v333 = vlaneseq
    %v334 = vshrl.u32 %v333, 7
    %v335 = vsub.s32 %v332, %v334
    %v336 = vrot.slane %v327, %v335
    %v338 = vunpack.c.l.s4 1966171168
    %v339 = vunpack.c.0.s8 %v338
    %v340 = vlaneseq
    %v341 = vshrl.u32 %v340, 7
    %v342 = vsub.s32 %v339, %v341
    %v343 = vrot.slane %v328, %v342
    %v345 = vunpack.c.l.s4 1966171168
    %v346 = vunpack.c.0.s8 %v345
    %v347 = vlaneseq
    %v348 = vshrl.u32 %v347, 7
    %v349 = vsub.s32 %v346, %v348
    %v350 = vrot.slane %v329, %v349
    %v351 = vcombine.low %v336, %v343
    %v353 = vunpack.c.l.s4 1966171168
    %v354 = vunpack.c.0.s8 %v353
    %v355 = vlaneseq
    %v356 = vshrl.u32 %v355, 7
    %v357 = vsub.s32 %v354, %v356
    %v358 = vrot.slane %v351, %v357
    %v360 = vunpack.c.l.s4 1966171168
    %v361 = vunpack.c.0.s8 %v360
    %v362 = vlaneseq
    %v363 = vshrl.u32 %v362, 7
    %v364 = vsub.s32 %v361, %v363
    %v365 = vrot.slane %v350, %v364
    %v366 = vcombine.low %v358, %v365
    %v368 = vpack.c.bf16 %v366, %v366
    %vm369 = vcmask 261120
    %v371 = vsel %vm369, %v326, 0
    %v374 = vsel %vm369, %v368, 0
    %376 = vmatprep.subr.bf16.mxu0 0
    %377 = vmatpush1.bf16.xpose.msra.mxu0 %v374
    %378 = vmatprep.subr.bf16.mxu0 0
    %379 = vmatpush1.bf16.xpose.msra.mxu0 0
    %380 = vmatprep.subr.bf16.mxu0 0
    %381 = vmatpush1.bf16.xpose.msra.mxu0 0
    %382 = vmatprep.subr.bf16.mxu0 0
    %383 = vmatpush1.bf16.xpose.msra.mxu0 0
    %384 = vmatprep.subr.bf16.mxu0 0
    %385 = vmatpush1.bf16.xpose.msra.mxu0 0
    %386 = vmatprep.subr.bf16.mxu0 0
    %387 = vmatpush1.bf16.xpose.msra.mxu0 0
    %388 = vmatprep.subr.bf16.mxu0 0
    %389 = vmatpush1.bf16.xpose.msra.mxu0 0
    %390 = vmatprep.subr.bf16.mxu0 0
    %391 = vmatpush1.bf16.xpose.msra.mxu0 0
    %392 = vmatprep.subr.bf16.mxu0 0
    %393 = vmatpush1.bf16.xpose.msra.mxu0 0
    %394 = vmatprep.subr.bf16.mxu0 0
    %395 = vmatpush1.bf16.xpose.msra.mxu0 0
    %396 = vmatprep.subr.bf16.mxu0 0
    %397 = vmatpush1.bf16.xpose.msra.mxu0 0
    %398 = vmatprep.subr.bf16.mxu0 0
    %399 = vmatpush1.bf16.xpose.msra.mxu0 0
    %400 = vmatprep.subr.bf16.mxu0 0
    %401 = vmatpush1.bf16.xpose.msra.mxu0 0
    %402 = vmatprep.subr.bf16.mxu0 0
    %403 = vmatpush1.bf16.xpose.msra.mxu0 0
    %404 = vmatprep.subr.bf16.mxu0 0
    %405 = vmatpush1.bf16.xpose.msra.mxu0 0
    %406 = vmatprep.subr.bf16.mxu0 0
    %407 = vmatpush1.bf16.xpose.msra.mxu0 0
    %408 = vmatprep.mubr.bf16.mxu0 0
    %409 = vmatmul.mubr.bf16.gmra.mrb[0].mxu0 %v371
    %v410 = vpop.f32.mrb[0].mxu0
    %v411 = vadd.f32 0.0, %v410
    %v412 = vpop.f32.mrb[0].mxu0
    %v413 = vpop.f32.mrb[0].mxu0
    %v414 = vpop.f32.mrb[0].mxu0
    %415 = vdwg.mxu0
    %v416 = vmul.f32 %v121, %v121
    %v417 = vmul.f32 %v128, %v128
    %v418 = vmul.f32 %v129, %v129
    %v419 = vmul.f32 %v144, %v144
    %v420 = vmul.f32 %v151, %v151
    %v421 = vmul.f32 %v152, %v152
    %v428 = vcombine.low %v416, %v417
    %v429 = vcombine.low %v418, %v419
    %v430 = vcombine.low %v420, %v421
    %v432 = vunpack.c.l.s4 1966171168
    %v433 = vunpack.c.0.s8 %v432
    %v434 = vlaneseq
    %v435 = vshrl.u32 %v434, 7
    %v436 = vsub.s32 %v433, %v435
    %v437 = vrot.slane %v428, %v436
    %v439 = vunpack.c.l.s4 1966171168
    %v440 = vunpack.c.0.s8 %v439
    %v441 = vlaneseq
    %v442 = vshrl.u32 %v441, 7
    %v443 = vsub.s32 %v440, %v442
    %v444 = vrot.slane %v429, %v443
    %v446 = vunpack.c.l.s4 1966171168
    %v447 = vunpack.c.0.s8 %v446
    %v448 = vlaneseq
    %v449 = vshrl.u32 %v448, 7
    %v450 = vsub.s32 %v447, %v449
    %v451 = vrot.slane %v430, %v450
    %v452 = vcombine.low %v437, %v444
    %v454 = vunpack.c.l.s4 1966171168
    %v455 = vunpack.c.0.s8 %v454
    %v456 = vlaneseq
    %v457 = vshrl.u32 %v456, 7
    %v458 = vsub.s32 %v455, %v457
    %v459 = vrot.slane %v452, %v458
    %v461 = vunpack.c.l.s4 1966171168
    %v462 = vunpack.c.0.s8 %v461
    %v463 = vlaneseq
    %v464 = vshrl.u32 %v463, 7
    %v465 = vsub.s32 %v462, %v464
    %v466 = vrot.slane %v451, %v465
    %v467 = vcombine.low %v459, %v466
    %vm469 = vcmask 259072
    %v470 = vsel %vm469, %v467, 0.0
    %471 = vadd.xlane.f32.xlu0 %v470
    %v472 = vpop.xlane.xlu0 %471
    %v473 = vmul.f32 %v247, %v247
    %v474 = vmul.f32 %v254, %v254
    %v475 = vmul.f32 %v255, %v255
    %v476 = vmul.f32 %v270, %v270
    %v477 = vmul.f32 %v277, %v277
    %v478 = vmul.f32 %v278, %v278
    %v485 = vcombine.low %v473, %v474
    %v486 = vcombine.low %v475, %v476
    %v487 = vcombine.low %v477, %v478
    %v489 = vunpack.c.l.s4 1966171168
    %v490 = vunpack.c.0.s8 %v489
    %v491 = vlaneseq
    %v492 = vshrl.u32 %v491, 7
    %v493 = vsub.s32 %v490, %v492
    %v494 = vrot.slane %v485, %v493
    %v496 = vunpack.c.l.s4 1966171168
    %v497 = vunpack.c.0.s8 %v496
    %v498 = vlaneseq
    %v499 = vshrl.u32 %v498, 7
    %v500 = vsub.s32 %v497, %v499
    %v501 = vrot.slane %v486, %v500
    %v503 = vunpack.c.l.s4 1966171168
    %v504 = vunpack.c.0.s8 %v503
    %v505 = vlaneseq
    %v506 = vshrl.u32 %v505, 7
    %v507 = vsub.s32 %v504, %v506
    %v508 = vrot.slane %v487, %v507
    %v509 = vcombine.low %v494, %v501
    %v511 = vunpack.c.l.s4 1966171168
    %v512 = vunpack.c.0.s8 %v511
    %v513 = vlaneseq
    %v514 = vshrl.u32 %v513, 7
    %v515 = vsub.s32 %v512, %v514
    %v516 = vrot.slane %v509, %v515
    %v518 = vunpack.c.l.s4 1966171168
    %v519 = vunpack.c.0.s8 %v518
    %v520 = vlaneseq
    %v521 = vshrl.u32 %v520, 7
    %v522 = vsub.s32 %v519, %v521
    %v523 = vrot.slane %v508, %v522
    %v524 = vcombine.low %v516, %v523
    %v526 = vsel %vm469, %v524, 0.0
    %527 = vadd.xlane.f32.xlu0 %v526
    %v528 = vpop.xlane.xlu0 %527
    %529 = vxpose.xlu0.b32.start [1/16] %v528, 128
    %530 = vxpose.xlu0.b32.cont [2/16] 0.0, 128
    %531 = vxpose.xlu0.b32.cont [3/16] 0.0, 128
    %532 = vxpose.xlu0.b32.cont [4/16] 0.0, 128
    %533 = vxpose.xlu0.b32.cont [5/16] 0.0, 128
    %534 = vxpose.xlu0.b32.cont [6/16] 0.0, 128
    %535 = vxpose.xlu0.b32.cont [7/16] 0.0, 128
    %536 = vxpose.xlu0.b32.cont [8/16] 0.0, 128
    %537 = vxpose.xlu0.b32.cont [9/16] 0.0, 128
    %538 = vxpose.xlu0.b32.cont [10/16] 0.0, 128
    %539 = vxpose.xlu0.b32.cont [11/16] 0.0, 128
    %540 = vxpose.xlu0.b32.cont [12/16] 0.0, 128
    %541 = vxpose.xlu0.b32.cont [13/16] 0.0, 128
    %542 = vxpose.xlu0.b32.cont [14/16] 0.0, 128
    %543 = vxpose.xlu0.b32.cont [15/16] 0.0, 128
    %544 = vxpose.xlu0.b32.end [16/16] 0.0, 128
    %v545 = vpop.trf.xlu0
    %v546 = vpop.trf.xlu0
    %v547 = vpop.trf.xlu0
    %v548 = vpop.trf.xlu0
    %v549 = vpop.trf.xlu0
    %v550 = vpop.trf.xlu0
    %v551 = vpop.trf.xlu0
    %v552 = vpop.trf.xlu0
    %v553 = vpop.trf.xlu0
    %v554 = vpop.trf.xlu0
    %v555 = vpop.trf.xlu0
    %v556 = vpop.trf.xlu0
    %v557 = vpop.trf.xlu0
    %v558 = vpop.trf.xlu0
    %v559 = vpop.trf.xlu0
    %v560 = vpop.trf.xlu0
    %v561 = vlaneseq
    %v562 = vshrl.u32 %v561, 7
    %v563 = vsub.s32 0, %v562
    %v564 = vrot.slane %v545, %v563
    %v565 = vadd.f32 %v472, %v564
    %v566 = vmul.f32 %v411, 2.0
    %v567 = vsub.f32 %v565, %v566
    %v568 = vmax.f32 %v567, 1e-12
    %v569 = vrsqrt.pop %v568
    %v570 = vmul.f32 %v568, %v569
    %vm571 = vcmp.eq.f32.partialorder %v568, inf
    %v572 = vsel %vm571, %v568, %v570
    %vm573 = vcmp.eq.f32.partialorder %v568, 0.0
    %v574 = vand.u32 %v568, 2147483648
    %v575 = vsel %vm573, %v574, %v572
    %v576 = vlaneseq
    %v577 = vshrl.u32 %v576, 7
    %v578 = vlaneseq
    %v579 = vand.u32 %v578, 127
    %v580 = vmul.u32 %v579, 3
    %vm581 = vcmp.ge.s32.totalorder %v577, %v580
    %v582 = vadd.s32 %v580, 3
    %vm583 = vcmp.lt.s32.totalorder %v577, %v582
    %vm584 = vmand %vm581, %vm583
    %v585 = vsel %vm584, 1.0, 0.0
    %586 = vxpose.xlu0.b32.start [1/16] %v585, 128
    %587 = vxpose.xlu0.b32.cont [2/16] 0.0, 128
    %588 = vxpose.xlu0.b32.cont [3/16] 0.0, 128
    %589 = vxpose.xlu0.b32.cont [4/16] 0.0, 128
    %590 = vxpose.xlu0.b32.cont [5/16] 0.0, 128
    %591 = vxpose.xlu0.b32.cont [6/16] 0.0, 128
    %592 = vxpose.xlu0.b32.cont [7/16] 0.0, 128
    %593 = vxpose.xlu0.b32.cont [8/16] 0.0, 128
    %594 = vxpose.xlu0.b32.cont [9/16] 0.0, 128
    %595 = vxpose.xlu0.b32.cont [10/16] 0.0, 128
    %596 = vxpose.xlu0.b32.cont [11/16] 0.0, 128
    %597 = vxpose.xlu0.b32.cont [12/16] 0.0, 128
    %598 = vxpose.xlu0.b32.cont [13/16] 0.0, 128
    %599 = vxpose.xlu0.b32.cont [14/16] 0.0, 128
    %600 = vxpose.xlu0.b32.cont [15/16] 0.0, 128
    %601 = vxpose.xlu0.b32.end [16/16] 0.0, 128
    %v602 = vpop.trf.xlu0
    %v603 = vpop.trf.xlu0
    %v604 = vpop.trf.xlu0
    %v605 = vpop.trf.xlu0
    %v606 = vpop.trf.xlu0
    %v607 = vpop.trf.xlu0
    %v608 = vpop.trf.xlu0
    %v609 = vpop.trf.xlu0
    %v610 = vpop.trf.xlu0
    %v611 = vpop.trf.xlu0
    %v612 = vpop.trf.xlu0
    %v613 = vpop.trf.xlu0
    %v614 = vpop.trf.xlu0
    %v615 = vpop.trf.xlu0
    %v616 = vpop.trf.xlu0
    %v617 = vpop.trf.xlu0
    %vm618 = vcmask 48128
    %v620 = vsel %vm618, %v602, 0
    %vm622 = vcmask 1045504
    %v624 = vsel %vm622, %v575, 0
    %626 = vmatprep.subr.mxu0 0.0
    %627 = vmatpush1.msra.mxu0 %v624
    %628 = vmatprep.subr.mxu0 0.0
    %629 = vmatpush1.msra.mxu0 0.0
    %630 = vmatprep.subr.mxu0 0.0
    %631 = vmatpush1.msra.mxu0 0.0
    %632 = vmatprep.subr.mxu0 0.0
    %633 = vmatpush1.msra.mxu0 0.0
    %634 = vmatprep.subr.mxu0 0.0
    %635 = vmatpush1.msra.mxu0 0.0
    %636 = vmatprep.subr.mxu0 0.0
    %637 = vmatpush1.msra.mxu0 0.0
    %638 = vmatprep.subr.mxu0 0.0
    %639 = vmatpush1.msra.mxu0 0.0
    %640 = vmatprep.subr.mxu0 0.0
    %641 = vmatpush1.msra.mxu0 0.0
    %642 = vmatprep.subr.mxu0 0.0
    %643 = vmatpush1.msra.mxu0 0.0
    %644 = vmatprep.subr.mxu0 0.0
    %645 = vmatpush1.msra.mxu0 0.0
    %646 = vmatprep.subr.mxu0 0.0
    %647 = vmatpush1.msra.mxu0 0.0
    %648 = vmatprep.subr.mxu0 0.0
    %649 = vmatpush1.msra.mxu0 0.0
    %650 = vmatprep.subr.mxu0 0.0
    %651 = vmatpush1.msra.mxu0 0.0
    %652 = vmatprep.subr.mxu0 0.0
    %653 = vmatpush1.msra.mxu0 0.0
    %654 = vmatprep.subr.mxu0 0.0
    %655 = vmatpush1.msra.mxu0 0.0
    %656 = vmatprep.subr.mxu0 0.0
    %657 = vmatpush1.msra.mxu0 0.0
    %658 = vmatprep.subr.mxu0 0.0
    %659 = vmatpush1.msra.mxu0 0.0
    %660 = vmatprep.subr.mxu0 0.0
    %661 = vmatpush1.msra.mxu0 0.0
    %662 = vmatprep.subr.mxu0 0.0
    %663 = vmatpush1.msra.mxu0 0.0
    %664 = vmatprep.subr.mxu0 0.0
    %665 = vmatpush1.msra.mxu0 0.0
    %666 = vmatprep.subr.mxu0 0.0
    %667 = vmatpush1.msra.mxu0 0.0
    %668 = vmatprep.subr.mxu0 0.0
    %669 = vmatpush1.msra.mxu0 0.0
    %670 = vmatprep.subr.mxu0 0.0
    %671 = vmatpush1.msra.mxu0 0.0
    %672 = vmatprep.subr.mxu0 0.0
    %673 = vmatpush1.msra.mxu0 0.0
    %674 = vmatprep.subr.mxu0 0.0
    %675 = vmatpush1.msra.mxu0 0.0
    %676 = vmatprep.subr.mxu0 0.0
    %677 = vmatpush1.msra.mxu0 0.0
    %678 = vmatprep.subr.mxu0 0.0
    %679 = vmatpush1.msra.mxu0 0.0
    %680 = vmatprep.subr.mxu0 0.0
    %681 = vmatpush1.msra.mxu0 0.0
    %682 = vmatprep.subr.mxu0 0.0
    %683 = vmatpush1.msra.mxu0 0.0
    %684 = vmatprep.subr.mxu0 0.0
    %685 = vmatpush1.msra.mxu0 0.0
    %686 = vmatprep.subr.mxu0 0.0
    %687 = vmatpush1.msra.mxu0 0.0
    %688 = vmatprep.subr.mxu0 0.0
    %689 = vmatpush1.msra.mxu0 0.0
    %690 = vmatprep.mubr.f32.mxu0 0.0
    %691 = vmatmul.mubr.f32.gmra.mrb[0].mxu0 %v620
    %v692 = vpop.f32.mrb[0].mxu0
    %v693 = vadd.f32 0.0, %v692
    %v694 = vpop.f32.mrb[0].mxu0
    %695 = vdwg.mxu0
    %v697 = vsel %vm618, %v693, 0
    %v700 = vsel %vm622, %v585, 0
    %702 = vmatprep.subr.mxu0 0.0
    %703 = vmatpush1.msra.mxu0 %v700
    %704 = vmatprep.subr.mxu0 0.0
    %705 = vmatpush1.msra.mxu0 0.0
    %706 = vmatprep.subr.mxu0 0.0
    %707 = vmatpush1.msra.mxu0 0.0
    %708 = vmatprep.subr.mxu0 0.0
    %709 = vmatpush1.msra.mxu0 0.0
    %710 = vmatprep.subr.mxu0 0.0
    %711 = vmatpush1.msra.mxu0 0.0
    %712 = vmatprep.subr.mxu0 0.0
    %713 = vmatpush1.msra.mxu0 0.0
    %714 = vmatprep.subr.mxu0 0.0
    %715 = vmatpush1.msra.mxu0 0.0
    %716 = vmatprep.subr.mxu0 0.0
    %717 = vmatpush1.msra.mxu0 0.0
    %718 = vmatprep.subr.mxu0 0.0
    %719 = vmatpush1.msra.mxu0 0.0
    %720 = vmatprep.subr.mxu0 0.0
    %721 = vmatpush1.msra.mxu0 0.0
    %722 = vmatprep.subr.mxu0 0.0
    %723 = vmatpush1.msra.mxu0 0.0
    %724 = vmatprep.subr.mxu0 0.0
    %725 = vmatpush1.msra.mxu0 0.0
    %726 = vmatprep.subr.mxu0 0.0
    %727 = vmatpush1.msra.mxu0 0.0
    %728 = vmatprep.subr.mxu0 0.0
    %729 = vmatpush1.msra.mxu0 0.0
    %730 = vmatprep.subr.mxu0 0.0
    %731 = vmatpush1.msra.mxu0 0.0
    %732 = vmatprep.subr.mxu0 0.0
    %733 = vmatpush1.msra.mxu0 0.0
    %734 = vmatprep.subr.mxu0 0.0
    %735 = vmatpush1.msra.mxu0 0.0
    %736 = vmatprep.subr.mxu0 0.0
    %737 = vmatpush1.msra.mxu0 0.0
    %738 = vmatprep.subr.mxu0 0.0
    %739 = vmatpush1.msra.mxu0 0.0
    %740 = vmatprep.subr.mxu0 0.0
    %741 = vmatpush1.msra.mxu0 0.0
    %742 = vmatprep.subr.mxu0 0.0
    %743 = vmatpush1.msra.mxu0 0.0
    %744 = vmatprep.subr.mxu0 0.0
    %745 = vmatpush1.msra.mxu0 0.0
    %746 = vmatprep.subr.mxu0 0.0
    %747 = vmatpush1.msra.mxu0 0.0
    %748 = vmatprep.subr.mxu0 0.0
    %749 = vmatpush1.msra.mxu0 0.0
    %750 = vmatprep.subr.mxu0 0.0
    %751 = vmatpush1.msra.mxu0 0.0
    %752 = vmatprep.subr.mxu0 0.0
    %753 = vmatpush1.msra.mxu0 0.0
    %754 = vmatprep.subr.mxu0 0.0
    %755 = vmatpush1.msra.mxu0 0.0
    %756 = vmatprep.subr.mxu0 0.0
    %757 = vmatpush1.msra.mxu0 0.0
    %758 = vmatprep.subr.mxu0 0.0
    %759 = vmatpush1.msra.mxu0 0.0
    %760 = vmatprep.subr.mxu0 0.0
    %761 = vmatpush1.msra.mxu0 0.0
    %762 = vmatprep.subr.mxu0 0.0
    %763 = vmatpush1.msra.mxu0 0.0
    %764 = vmatprep.subr.mxu0 0.0
    %765 = vmatpush1.msra.mxu0 0.0
    %766 = vmatprep.mubr.f32.mxu0 0.0
    %767 = vmatmul.mubr.f32.gmra.mrb[0].mxu0 %v697
    %v768 = vpop.f32.mrb[0].mxu0
    %v769 = vadd.f32 0.0, %v768
    %v770 = vpop.f32.mrb[0].mxu0
    %771 = vdwg.mxu0
    %v772 = vmul.f32 %v769, 0.11111111
    %vm773 = vcmask 9216
    %774 = vst.msk [vmem:[#allocation2] sm:$0x3] %vm773, %v772
    %v775 = vsub.f32 0.0, %v772
    %vm776 = vcmp.eq.s32.totalorder %v577, %v579
    %v777 = vsel %vm773, %v775, -inf
    %778 = vmax.xlane.f32.xlu0 %v777
    %v779 = vpop.xlane.xlu0 %778
    %v780 = vsub.f32 %v775, %v779
    %v781 = vmul.f32 %v780, 1.442695
    %v782 = vpow.pop %v781
    %v783 = vsel %vm773, %v782, 0.0
    %784 = vadd.xlane.f32.xlu0 %v783
    %v785 = vpop.xlane.xlu0 %784
    %v786 = vlog2.pop %v785
    %v787 = vmul.f32 %v786, 0.6931472
    %v788 = vadd.f32 %v779, %v787
    %v789 = vsub.f32 %v775, %v788
    %v790 = vsel %vm776, %v789, 0.0
    %v791 = vsel %vm773, %v790, 0.0
    %792 = vadd.xlane.f32.xlu0 %v791
    %v793 = vpop.xlane.xlu0 %792
    %vm794 = vcmask 1041408
    %v795 = vsel %vm794, %v793, 0.0
    %v796 = vrot.slane %v795, 4
    %v797 = vadd.f32 %v795, %v796
    %v798 = vrot.slane %v797, 2
    %v799 = vadd.f32 %v797, %v798
    %v800 = vrot.slane %v799, 1
    %v801 = vadd.f32 %v799, %v800
    %v802 = vrcp.pop 2.0
    %v803 = vmul.f32 %v801, %v802
    %v804 = vsub.f32 0.0, %v803
    %v805 = vrot.slane %v777, 4
    %v806 = vmax.f32 %v777, %v805
    %v807 = vrot.slane %v806, 2
    %v808 = vmax.f32 %v806, %v807
    %v809 = vrot.slane %v808, 1
    %v810 = vmax.f32 %v808, %v809
    %v811 = vsub.f32 %v775, %v810
    %v812 = vmul.f32 %v811, 1.442695
    %v813 = vpow.pop %v812
    %v814 = vsel %vm773, %v813, 0.0
    %v815 = vrot.slane %v814, 4
    %v816 = vadd.f32 %v814, %v815
    %v817 = vrot.slane %v816, 2
    %v818 = vadd.f32 %v816, %v817
    %v819 = vrot.slane %v818, 1
    %v820 = vadd.f32 %v818, %v819
    %v821 = vlog2.pop %v820
    %v822 = vmul.f32 %v821, 0.6931472
    %v823 = vadd.f32 %v810, %v822
    %v824 = vsub.f32 %v775, %v823
    %v825 = vsel %vm776, %v824, 0.0
    %v826 = vsel %vm773, %v825, 0.0
    %v827 = vrot.slane %v826, 4
    %v828 = vadd.f32 %v826, %v827
    %v829 = vrot.slane %v828, 2
    %v830 = vadd.f32 %v828, %v829
    %v831 = vrot.slane %v830, 1
    %v832 = vadd.f32 %v830, %v831
    %vm833 = vcmask 15360
    %v834 = vsel %vm833, %v832, 0.0
    %835 = vadd.xlane.f32.xlu0 %v834
    %v836 = vpop.xlane.xlu0 %835
    %v837 = vmul.f32 %v836, %v802
    %v838 = vsub.f32 0.0, %v837
    %v839 = vadd.f32 %v804, %v838
    %v840 = vmul.f32 %v839, 0.5
    %vm841 = vcmask 0
    %842 = vst.msk [vmem:[#allocation4] sm:$0x1] %vm841, %v840
    %v843 = vmul.f32 %v32, %v32
    %v844 = vadd.f32 %v843, 1e-08
    %v845 = vmul.f32 %v30, %v30
    %v846 = vadd.f32 %v845, 1e-08
    %v847 = vsub.f32 %v31, %v29
    %v848 = vrcp.pop %v844
    %v849 = vmul.f32 %v846, %v848
    %v850 = vlog2.pop %v849
    %v851 = vmul.f32 %v850, 0.6931472
    %v852 = vmul.f32 %v847, %v847
    %v853 = vadd.f32 %v844, %v852
    %v854 = vrcp.pop %v846
    %v855 = vmul.f32 %v853, %v854
    %v856 = vadd.f32 %v851, %v855
    %v857 = vsub.f32 %v856, 1.0
    %v858 = vmul.f32 %v857, 0.5
    %vm859 = vcmask 254976
    %v860 = vsel %vm859, %v858, 0.0
    %861 = vadd.xlane.f32.xlu0 %v860
    %v862 = vpop.xlane.xlu0 %861
    %v863 = vsel %vm794, %v862, 0.0
    %v864 = vrot.slane %v863, 4
    %v865 = vadd.f32 %v863, %v864
    %v866 = vrot.slane %v865, 2
    %v867 = vadd.f32 %v865, %v866
    %v868 = vrot.slane %v867, 1
    %v869 = vadd.f32 %v867, %v868
    %v870 = vmul.f32 %v869, %v802
    %871 = vst.msk [vmem:[#allocation6] sm:$0x1] %vm841, %v870
    // Predicated region
    $region26: #{_lambda_.15} parent=1 // pred_check
      _
    $region27: #{_lambda_.15} parent=1 // pred_check_branch
      %873 = sbr.rel (0) target = $region29
    $region28: #{_lambda_.15} parent=1 // pred_region
      %s875 = ssub.s32 32, 32
      %876 = vsyncadd [#allocation3], %s875
      %s878 = sshll.u32 [#allocation2], 4
      %s879 = int_to_ptr.vmem [resolvable:$true] %s878
      %881 = dma.vmem_to_hbm [thread:$0]  %s879, 32, %s6, [#allocation3]
    $region29: #{_lambda_.15} parent=1 // pred_fallthru
      _
    // Predicated region
    $region30: #{_lambda_.15} parent=1 // pred_check
      _
    $region31: #{_lambda_.15} parent=1 // pred_check_branch
      %883 = sbr.rel (0) target = $region33
    $region32: #{_lambda_.15} parent=1 // pred_region
      %s885 = ssub.s32 16, 16
      %886 = vsyncadd [#allocation5], %s885
      %s888 = sshll.u32 [#allocation4], 4
      %s889 = int_to_ptr.vmem [resolvable:$true] %s888
      %891 = dma.vmem_to_hbm [thread:$0]  %s889, 16, %s7, [#allocation5]
    $region33: #{_lambda_.15} parent=1 // pred_fallthru
      _
    // Predicated region
    $region34: #{_lambda_.15} parent=1 // pred_check
      _
    $region35: #{_lambda_.15} parent=1 // pred_check_branch
      %893 = sbr.rel (0) target = $region37
    $region36: #{_lambda_.15} parent=1 // pred_region
      %s895 = ssub.s32 16, 16
      %896 = vsyncadd [#allocation5], %s895
      %s898 = sshll.u32 [#allocation6], 4
      %s899 = int_to_ptr.vmem [resolvable:$true] %s898
      %901 = dma.vmem_to_hbm [thread:$0]  %s899, 16, %s8, [#allocation5]
    $region37: #{_lambda_.15} parent=1 // pred_fallthru
      _
    // Predicated region
    $region38: #{_lambda_.15} parent=1 // pred_check
      _
    $region39: #{_lambda_.15} parent=1 // pred_check_branch
      %903 = sbr.rel (0) target = $region41
    $region40: #{_lambda_.15} parent=1 // pred_region
      %904 = dma.done [#allocation3], 32
    $region41: #{_lambda_.15} parent=1 // pred_fallthru
      _
    // Predicated region
    $region42: #{_lambda_.15} parent=1 // pred_check
      _
    $region43: #{_lambda_.15} parent=1 // pred_check_branch
      %906 = sbr.rel (0) target = $region45
    $region44: #{_lambda_.15} parent=1 // pred_region
      %907 = dma.done [#allocation5], 16
    $region45: #{_lambda_.15} parent=1 // pred_fallthru
      _
    // Predicated region
    $region46: #{_lambda_.15} parent=1 // pred_check
      _
    $region47: #{_lambda_.15} parent=1 // pred_check_branch
      %909 = sbr.rel (0) target = $region49
    $region48: #{_lambda_.15} parent=1 // pred_region
      %910 = dma.done [#allocation5], 16
    $region49: #{_lambda_.15} parent=1 // pred_fallthru
      _
    %911 = vsyncpa [#allocation3], 1
    %912 = vsyncpa [#allocation5], 1

</llo_original>
